<compile_context>
chip_gen: v5e
topology: v5e:2x2
jax: 0.10.0
libtpu: 0.0.40
codegen_flags: <defaults>
</compile_context>

<pallas_src>
import functools
import math

import jax
import jax.numpy as jnp
from jax.experimental import pallas as pl
from jax.experimental.pallas import tpu as pltpu

# ----------------------------- config (small, synthetic) -----------------------------
VOCAB = 128          # lane-aligned synthetic vocab (id 0 = padding)
MAX_POS = 64
TYPE_VOCAB = 2
HIDDEN = 128         # lane-dense hidden size
NUM_HEADS = 2
HEAD_DIM = HIDDEN // NUM_HEADS
INTERMEDIATE = 512   # 4 * HIDDEN
NUM_LAYERS = 2
LABEL_SIZE = 5
LABEL_PAD = 128      # lane-dense classifier output width
LN_EPS = 1e-12
BATCH = 2
SEQ = 32
NEG_BIG = -1e30
ATT_SCALE = 1.0 / math.sqrt(HEAD_DIM)


# ----------------------------- in-kernel helpers -----------------------------
def _gelu_tanh(x):
    c = math.sqrt(2.0 / math.pi)
    return 0.5 * x * (1.0 + jnp.tanh(c * (x + 0.044715 * x * x * x)))


def _layer_norm(x, gamma, beta):
    mu = jnp.mean(x, axis=-1, keepdims=True)
    d = x - mu
    var = jnp.mean(d * d, axis=-1, keepdims=True)
    return d * jax.lax.rsqrt(var + LN_EPS) * gamma + beta


# ----------------------------- fused whole-model kernel -----------------------------
def _bert_kernel(ids_ref, bias_ref, wemb_ref, pemb_ref, temb_ref,
                 eln_g_ref, eln_b_ref,
                 qkv_w_ref, qkv_b_ref, o_w_ref, o_b_ref,
                 ln1_g_ref, ln1_b_ref,
                 i_w_ref, i_b_ref, f_w_ref, f_b_ref,
                 ln2_g_ref, ln2_b_ref,
                 cls_w_ref, cls_b_ref,
                 out_ref, ctx_ref):
    R = ids_ref.shape[0]                                            # B*S rows

    # ---- embeddings: one-hot matmul gather + pos + type, then LayerNorm ----
    ids = ids_ref[...]                                              # (R, 1) int32
    vocab_iota = jax.lax.broadcasted_iota(jnp.int32, (R, VOCAB), 1)
    onehot = (vocab_iota == ids).astype(jnp.bfloat16)               # (R, VOCAB)
    h = jnp.dot(onehot, wemb_ref[...], preferred_element_type=jnp.float32)
    h = h + pemb_ref[...] + temb_ref[...]                           # (R, H) f32
    h = _layer_norm(h, eln_g_ref[...], eln_b_ref[...])

    bias = bias_ref[...]                                            # (R, R) block-diag + key-pad bias

    # ---- transformer layers (unrolled; weights stacked on leading axis) ----
    for li in range(NUM_LAYERS):
        qkv = (jnp.dot(h.astype(jnp.bfloat16), qkv_w_ref[li],
                       preferred_element_type=jnp.float32)
               + qkv_b_ref[li])                                     # (R, 3H) f32
        q = qkv[:, 0:HIDDEN]                                        # Q pre-scaled by 1/sqrt(Dh)
        k = qkv[:, HIDDEN:2 * HIDDEN]
        v = qkv[:, 2 * HIDDEN:3 * HIDDEN]

        for hd in range(NUM_HEADS):
            lo, hi = hd * HEAD_DIM, (hd + 1) * HEAD_DIM
            qh, kh, vh = q[:, lo:hi], k[:, lo:hi], v[:, lo:hi]      # (R, Dh)
            scores = jax.lax.dot_general(
                qh, kh, (((1,), (1,)), ((), ())),
                preferred_element_type=jnp.float32)                 # (R, R)
            scores = scores + bias
            m = jnp.max(scores, axis=-1, keepdims=True)
            p = jnp.exp(scores - m)
            inv = pl.reciprocal(jnp.sum(p, axis=-1, keepdims=True), approx=True)
            p = p * inv
            # assemble heads in lane slices of the VMEM scratch (layout-only)
            ctx_ref[:, lo:hi] = jnp.dot(p, vh, preferred_element_type=jnp.float32)

        # single full-width (R,H)@(H,H) output projection
        attn_out = (jnp.dot(ctx_ref[...].astype(jnp.bfloat16), o_w_ref[li],
                            preferred_element_type=jnp.float32)
                    + o_b_ref[li])

        h = _layer_norm(attn_out + h, ln1_g_ref[li], ln1_b_ref[li])

        inter = _gelu_tanh(
            jnp.dot(h.astype(jnp.bfloat16), i_w_ref[li],
                    preferred_element_type=jnp.float32) + i_b_ref[li])
        ffn = (jnp.dot(inter.astype(jnp.bfloat16), f_w_ref[li],
                       preferred_element_type=jnp.float32) + f_b_ref[li])
        h = _layer_norm(ffn + h, ln2_g_ref[li], ln2_b_ref[li])

    # ---- classifier (lane-dense, padded) + log_softmax ----
    logits = (jnp.dot(h.astype(jnp.bfloat16), cls_w_ref[...],
                      preferred_element_type=jnp.float32) + cls_b_ref[...])
    m = jnp.max(logits, axis=-1, keepdims=True)
    z = logits - m
    out_ref[...] = z - jnp.log(jnp.sum(jnp.exp(z), axis=-1, keepdims=True))


# ----------------------------- parameters -----------------------------
def init_params(key):
    def normal(k, shape):
        return 0.02 * jax.random.normal(k, shape, dtype=jnp.float32)

    keys = jax.random.split(key, 4 + NUM_LAYERS)
    params = {
        "word_emb": normal(keys[0], (VOCAB, HIDDEN)).astype(jnp.bfloat16),
        "pos_emb": normal(keys[1], (MAX_POS, HIDDEN)),
        "type_emb": normal(keys[2], (TYPE_VOCAB, HIDDEN)),
        "emb_ln_g": jnp.ones((1, HIDDEN), jnp.float32),
        "emb_ln_b": jnp.zeros((1, HIDDEN), jnp.float32),
        "cls_w": normal(keys[3], (HIDDEN, LABEL_SIZE)),
        "cls_b": jnp.zeros((LABEL_SIZE,), jnp.float32),
    }

    qkv_w, qkv_b, o_w, o_b = [], [], [], []
    ln1_g, ln1_b, i_w, i_b, f_w, f_b, ln2_g, ln2_b = [], [], [], [], [], [], [], []
    for li in range(NUM_LAYERS):
        lk = jax.random.split(keys[4 + li], 6)
        qw, kw, vw = (normal(lk[0], (HIDDEN, HIDDEN)),
                      normal(lk[1], (HIDDEN, HIDDEN)),
                      normal(lk[2], (HIDDEN, HIDDEN)))
        # fold the 1/sqrt(HEAD_DIM) attention scale into the Q columns
        # (the Q bias is zero here; a nonzero Q bias would need the same scale).
        qkv_w.append(jnp.concatenate([qw * ATT_SCALE, kw, vw], axis=1))  # (H, 3H)
        qkv_b.append(jnp.zeros((1, 3 * HIDDEN), jnp.float32))
        o_w.append(normal(lk[3], (HIDDEN, HIDDEN)))
        o_b.append(jnp.zeros((1, HIDDEN), jnp.float32))
        ln1_g.append(jnp.ones((1, HIDDEN), jnp.float32))
        ln1_b.append(jnp.zeros((1, HIDDEN), jnp.float32))
        i_w.append(normal(lk[4], (HIDDEN, INTERMEDIATE)))
        i_b.append(jnp.zeros((1, INTERMEDIATE), jnp.float32))
        f_w.append(normal(lk[5], (INTERMEDIATE, HIDDEN)))
        f_b.append(jnp.zeros((1, HIDDEN), jnp.float32))
        ln2_g.append(jnp.ones((1, HIDDEN), jnp.float32))
        ln2_b.append(jnp.zeros((1, HIDDEN), jnp.float32))

    params.update({
        "qkv_w": jnp.stack(qkv_w).astype(jnp.bfloat16),
        "qkv_b": jnp.stack(qkv_b),
        "o_w": jnp.stack(o_w).astype(jnp.bfloat16),
        "o_b": jnp.stack(o_b),
        "ln1_g": jnp.stack(ln1_g), "ln1_b": jnp.stack(ln1_b),
        "i_w": jnp.stack(i_w).astype(jnp.bfloat16),
        "i_b": jnp.stack(i_b),
        "f_w": jnp.stack(f_w).astype(jnp.bfloat16),
        "f_b": jnp.stack(f_b),
        "ln2_g": jnp.stack(ln2_g), "ln2_b": jnp.stack(ln2_b),
    })
    return params


# ----------------------------- forward -----------------------------
def bert_punctuator_forward(params, sentences):
    """sentences: (B, S) int32 token ids -> (B, S, LABEL_SIZE) f32 log-probs."""
    B, S = sentences.shape
    R = B * S

    ids_col = sentences.reshape(R, 1).astype(jnp.int32)

    # attention_mask = sign(sentences); HF extended mask = (1 - mask) * -10000.
    # With batch folded into rows, add a block-diagonal bias so rows never
    # attend across batch elements.
    mask = jnp.sign(sentences).astype(jnp.float32)                       # (B, S)
    key_bias = ((1.0 - mask) * -10000.0).reshape(1, R)                   # (1, R)
    batch_ids = jnp.repeat(jnp.arange(B, dtype=jnp.int32), S)            # (R,)
    same_batch = batch_ids[:, None] == batch_ids[None, :]                # (R, R)
    attn_bias = jnp.where(same_batch, key_bias,
                          jnp.float32(-1e9)).astype(jnp.float32)         # (R, R)

    pos_emb = jnp.tile(params["pos_emb"][:S], (B, 1))                    # (R, H)
    type_row = params["type_emb"][0:1]                                   # (1, H)

    # Lane-dense classifier: pad columns to 128; pad-lane bias -> -1e30 so they
    # vanish from the softmax.
    cls_w_pad = jnp.zeros((HIDDEN, LABEL_PAD), jnp.float32)
    cls_w_pad = cls_w_pad.at[:, :LABEL_SIZE].set(params["cls_w"]).astype(jnp.bfloat16)
    cls_b_pad = jnp.full((1, LABEL_PAD), NEG_BIG, jnp.float32)
    cls_b_pad = cls_b_pad.at[0, :LABEL_SIZE].set(params["cls_b"])

    full2 = lambda arr: pl.BlockSpec(arr.shape, lambda i: (0, 0))
    full3 = lambda arr: pl.BlockSpec(arr.shape, lambda i: (0, 0, 0))

    out = pl.pallas_call(
        _bert_kernel,
        out_shape=jax.ShapeDtypeStruct((R, LABEL_PAD), jnp.float32),
        grid=(1,),
        in_specs=[
            full2(ids_col),
            full2(attn_bias),
            full2(params["word_emb"]),
            full2(pos_emb),
            full2(type_row),
            full2(params["emb_ln_g"]),
            full2(params["emb_ln_b"]),
            full3(params["qkv_w"]), full3(params["qkv_b"]),
            full3(params["o_w"]), full3(params["o_b"]),
            full3(params["ln1_g"]), full3(params["ln1_b"]),
            full3(params["i_w"]), full3(params["i_b"]),
            full3(params["f_w"]), full3(params["f_b"]),
            full3(params["ln2_g"]), full3(params["ln2_b"]),
            full2(cls_w_pad),
            full2(cls_b_pad),
        ],
        out_specs=pl.BlockSpec((R, LABEL_PAD), lambda i: (0, 0)),
        scratch_shapes=[pltpu.VMEM((R, HIDDEN), jnp.float32)],
        compiler_params=pltpu.CompilerParams(
            dimension_semantics=("arbitrary",)),
    )(ids_col, attn_bias, params["word_emb"], pos_emb, type_row,
      params["emb_ln_g"], params["emb_ln_b"],
      params["qkv_w"], params["qkv_b"], params["o_w"], params["o_b"],
      params["ln1_g"], params["ln1_b"],
      params["i_w"], params["i_b"], params["f_w"], params["f_b"],
      params["ln2_g"], params["ln2_b"],
      cls_w_pad, cls_b_pad)

    return out[:, :LABEL_SIZE].reshape(B, S, LABEL_SIZE)


# ----------------------------- main -----------------------------
if __name__ == "__main__":
    key = jax.random.PRNGKey(0)
    pkey, dkey = jax.random.split(key)
    params = init_params(pkey)

    sentences = jax.random.randint(dkey, (BATCH, SEQ), minval=1, maxval=VOCAB,
                                   dtype=jnp.int32)
    # pad the tail of each sequence with 0s so attention_mask = sign(ids) is exercised
    sentences = sentences.at[:, SEQ - 6:].set(0)

    fwd = jax.jit(functools.partial(bert_punctuator_forward, params))
    out = fwd(sentences)
    out = jax.block_until_ready(out)

    assert out.shape == (BATCH, SEQ, LABEL_SIZE)
    assert out.dtype == jnp.float32
    # log_softmax rows should (approximately) exponentiate-sum to 1
    assert jnp.allclose(jnp.exp(out).sum(-1), 1.0, atol=1e-4)
    print("KERNEL_OK")
</pallas_src>

<mosaic_0001>
module attributes {stable_mosaic.version = 11 : i64} {
  func.func @_bert_kernel(%arg0: i32, %arg1: memref<64x1xi32, #tpu.memory_space<vmem>>, %arg2: memref<64x64xf32, #tpu.memory_space<vmem>>, %arg3: memref<128x128xbf16, #tpu.memory_space<vmem>>, %arg4: memref<64x128xf32, #tpu.memory_space<vmem>>, %arg5: memref<1x128xf32, #tpu.memory_space<vmem>>, %arg6: memref<1x128xf32, #tpu.memory_space<vmem>>, %arg7: memref<1x128xf32, #tpu.memory_space<vmem>>, %arg8: memref<2x128x384xbf16, #tpu.memory_space<vmem>>, %arg9: memref<2x1x384xf32, #tpu.memory_space<vmem>>, %arg10: memref<2x128x128xbf16, #tpu.memory_space<vmem>>, %arg11: memref<2x1x128xf32, #tpu.memory_space<vmem>>, %arg12: memref<2x1x128xf32, #tpu.memory_space<vmem>>, %arg13: memref<2x1x128xf32, #tpu.memory_space<vmem>>, %arg14: memref<2x128x512xbf16, #tpu.memory_space<vmem>>, %arg15: memref<2x1x512xf32, #tpu.memory_space<vmem>>, %arg16: memref<2x512x128xbf16, #tpu.memory_space<vmem>>, %arg17: memref<2x1x128xf32, #tpu.memory_space<vmem>>, %arg18: memref<2x1x128xf32, #tpu.memory_space<vmem>>, %arg19: memref<2x1x128xf32, #tpu.memory_space<vmem>>, %arg20: memref<128x128xbf16, #tpu.memory_space<vmem>>, %arg21: memref<1x128xf32, #tpu.memory_space<vmem>>, %arg22: memref<64x128xf32, #tpu.memory_space<vmem>>, %arg23: memref<64x128xf32, #tpu.memory_space<vmem>>) attributes {dimension_semantics = [#tpu.dimension_semantics<arbitrary>], iteration_bounds = array<i64: 1>, scalar_prefetch = 0 : i64, scratch_operands = 1 : i64, tpu.core_type = #tpu.core_type<tc>, window_params = [{pipeline_mode = #tpu.pipeline_mode<synchronous>, transform_indices = @transform_0, window_bounds = array<i64: 64, 1>}, {pipeline_mode = #tpu.pipeline_mode<synchronous>, transform_indices = @transform_1, window_bounds = array<i64: 64, 64>}, {pipeline_mode = #tpu.pipeline_mode<synchronous>, transform_indices = @transform_2, window_bounds = array<i64: 128, 128>}, {pipeline_mode = #tpu.pipeline_mode<synchronous>, transform_indices = @transform_3, window_bounds = array<i64: 64, 128>}, {pipeline_mode = #tpu.pipeline_mode<synchronous>, transform_indices = @transform_4, window_bounds = array<i64: 1, 128>}, {pipeline_mode = #tpu.pipeline_mode<synchronous>, transform_indices = @transform_5, window_bounds = array<i64: 1, 128>}, {pipeline_mode = #tpu.pipeline_mode<synchronous>, transform_indices = @transform_6, window_bounds = array<i64: 1, 128>}, {pipeline_mode = #tpu.pipeline_mode<synchronous>, transform_indices = @transform_7, window_bounds = array<i64: 2, 128, 384>}, {pipeline_mode = #tpu.pipeline_mode<synchronous>, transform_indices = @transform_8, window_bounds = array<i64: 2, 1, 384>}, {pipeline_mode = #tpu.pipeline_mode<synchronous>, transform_indices = @transform_9, window_bounds = array<i64: 2, 128, 128>}, {pipeline_mode = #tpu.pipeline_mode<synchronous>, transform_indices = @transform_10, window_bounds = array<i64: 2, 1, 128>}, {pipeline_mode = #tpu.pipeline_mode<synchronous>, transform_indices = @transform_11, window_bounds = array<i64: 2, 1, 128>}, {pipeline_mode = #tpu.pipeline_mode<synchronous>, transform_indices = @transform_12, window_bounds = array<i64: 2, 1, 128>}, {pipeline_mode = #tpu.pipeline_mode<synchronous>, transform_indices = @transform_13, window_bounds = array<i64: 2, 128, 512>}, {pipeline_mode = #tpu.pipeline_mode<synchronous>, transform_indices = @transform_14, window_bounds = array<i64: 2, 1, 512>}, {pipeline_mode = #tpu.pipeline_mode<synchronous>, transform_indices = @transform_15, window_bounds = array<i64: 2, 512, 128>}, {pipeline_mode = #tpu.pipeline_mode<synchronous>, transform_indices = @transform_16, window_bounds = array<i64: 2, 1, 128>}, {pipeline_mode = #tpu.pipeline_mode<synchronous>, transform_indices = @transform_17, window_bounds = array<i64: 2, 1, 128>}, {pipeline_mode = #tpu.pipeline_mode<synchronous>, transform_indices = @transform_18, window_bounds = array<i64: 2, 1, 128>}, {pipeline_mode = #tpu.pipeline_mode<synchronous>, transform_indices = @transform_19, window_bounds = array<i64: 128, 128>}, {pipeline_mode = #tpu.pipeline_mode<synchronous>, transform_indices = @transform_20, window_bounds = array<i64: 1, 128>}, {pipeline_mode = #tpu.pipeline_mode<synchronous>, transform_indices = @transform_21, window_bounds = array<i64: 64, 128>}]} {
    %c0 = arith.constant 0 : index
    %c0_0 = arith.constant 0 : index
    %0 = vector.load %arg1[%c0, %c0_0] : memref<64x1xi32, #tpu.memory_space<vmem>>, vector<64x1xi32>
    %1 = tpu.iota {dimensions = array<i32: 1>} : vector<64x128xi32>
    %2 = vector.broadcast %0 : vector<64x1xi32> to vector<64x128xi32>
    %3 = arith.cmpi eq, %1, %2 : vector<64x128xi32>
    %4 = arith.extui %3 : vector<64x128xi1> to vector<64x128xi32>
    %5 = arith.sitofp %4 : vector<64x128xi32> to vector<64x128xf32>
    %6 = arith.truncf %5 : vector<64x128xf32> to vector<64x128xbf16>
    %c0_1 = arith.constant 0 : index
    %c0_2 = arith.constant 0 : index
    %7 = vector.load %arg3[%c0_1, %c0_2] : memref<128x128xbf16, #tpu.memory_space<vmem>>, vector<128x128xbf16>
    %cst = arith.constant dense<0.000000e+00> : vector<64x128xf32>
    %8 = tpu.matmul %6, %7, %cst {dimension_numbers = #tpu.dot_dimension_numbers<[1], [0], [0], [1], [0, 0, 1, 1], [], []>} : vector<64x128xbf16>, vector<128x128xbf16>, vector<64x128xf32> -> vector<64x128xf32>
    %c0_3 = arith.constant 0 : index
    %c0_4 = arith.constant 0 : index
    %9 = vector.load %arg4[%c0_3, %c0_4] : memref<64x128xf32, #tpu.memory_space<vmem>>, vector<64x128xf32>
    %10 = arith.addf %8, %9 : vector<64x128xf32>
    %c0_5 = arith.constant 0 : index
    %c0_6 = arith.constant 0 : index
    %11 = vector.load %arg5[%c0_5, %c0_6] : memref<1x128xf32, #tpu.memory_space<vmem>>, vector<1x128xf32>
    %12 = vector.broadcast %11 : vector<1x128xf32> to vector<64x128xf32>
    %13 = arith.addf %10, %12 : vector<64x128xf32>
    %c0_7 = arith.constant 0 : index
    %c0_8 = arith.constant 0 : index
    %14 = vector.load %arg6[%c0_7, %c0_8] : memref<1x128xf32, #tpu.memory_space<vmem>>, vector<1x128xf32>
    %c0_9 = arith.constant 0 : index
    %c0_10 = arith.constant 0 : index
    %15 = vector.load %arg7[%c0_9, %c0_10] : memref<1x128xf32, #tpu.memory_space<vmem>>, vector<1x128xf32>
    %cst_11 = arith.constant dense<0.000000e+00> : vector<64xf32>
    %16 = vector.multi_reduction <add>, %13, %cst_11 [1] : vector<64x128xf32> to vector<64xf32>
    %17 = vector.shape_cast %16 : vector<64xf32> to vector<64x1xf32>
    %cst_12 = arith.constant 1.280000e+02 : f32
    %18 = vector.broadcast %cst_12 : f32 to vector<64x1xf32>
    %19 = arith.divf %17, %18 : vector<64x1xf32>
    %20 = vector.broadcast %19 : vector<64x1xf32> to vector<64x128xf32>
    %21 = arith.subf %13, %20 : vector<64x128xf32>
    %22 = arith.mulf %21, %21 : vector<64x128xf32>
    %cst_13 = arith.constant dense<0.000000e+00> : vector<64xf32>
    %23 = vector.multi_reduction <add>, %22, %cst_13 [1] : vector<64x128xf32> to vector<64xf32>
    %24 = vector.shape_cast %23 : vector<64xf32> to vector<64x1xf32>
    %cst_14 = arith.constant 1.280000e+02 : f32
    %25 = vector.broadcast %cst_14 : f32 to vector<64x1xf32>
    %26 = arith.divf %24, %25 : vector<64x1xf32>
    %cst_15 = arith.constant 9.99999996E-13 : f32
    %27 = vector.broadcast %cst_15 : f32 to vector<64x1xf32>
    %28 = arith.addf %26, %27 : vector<64x1xf32>
    %29 = math.rsqrt %28 : vector<64x1xf32>
    %30 = vector.broadcast %29 : vector<64x1xf32> to vector<64x128xf32>
    %31 = arith.mulf %21, %30 : vector<64x128xf32>
    %32 = vector.broadcast %14 : vector<1x128xf32> to vector<64x128xf32>
    %33 = arith.mulf %31, %32 : vector<64x128xf32>
    %34 = vector.broadcast %15 : vector<1x128xf32> to vector<64x128xf32>
    %35 = arith.addf %33, %34 : vector<64x128xf32>
    %c0_16 = arith.constant 0 : index
    %c0_17 = arith.constant 0 : index
    %36 = vector.load %arg2[%c0_16, %c0_17] : memref<64x64xf32, #tpu.memory_space<vmem>>, vector<64x64xf32>
    %37 = arith.truncf %35 : vector<64x128xf32> to vector<64x128xbf16>
    %c0_18 = arith.constant 0 : index
    %c0_19 = arith.constant 0 : index
    %c0_20 = arith.constant 0 : index
    %38 = vector.load %arg8[%c0_18, %c0_19, %c0_20] : memref<2x128x384xbf16, #tpu.memory_space<vmem>>, vector<1x128x384xbf16>
    %39 = vector.shape_cast %38 : vector<1x128x384xbf16> to vector<128x384xbf16>
    %cst_21 = arith.constant dense<0.000000e+00> : vector<64x384xf32>
    %40 = tpu.matmul %37, %39, %cst_21 {dimension_numbers = #tpu.dot_dimension_numbers<[1], [0], [0], [1], [0, 0, 1, 1], [], []>} : vector<64x128xbf16>, vector<128x384xbf16>, vector<64x384xf32> -> vector<64x384xf32>
    %c0_22 = arith.constant 0 : index
    %c0_23 = arith.constant 0 : index
    %c0_24 = arith.constant 0 : index
    %41 = vector.load %arg9[%c0_22, %c0_23, %c0_24] : memref<2x1x384xf32, #tpu.memory_space<vmem>>, vector<1x1x384xf32>
    %42 = vector.shape_cast %41 : vector<1x1x384xf32> to vector<1x384xf32>
    %43 = vector.broadcast %42 : vector<1x384xf32> to vector<64x384xf32>
    %44 = arith.addf %40, %43 : vector<64x384xf32>
    %45 = vector.extract_strided_slice %44 {offsets = [0, 0], sizes = [64, 128], strides = [1, 1]} : vector<64x384xf32> to vector<64x128xf32>
    %46 = vector.extract_strided_slice %44 {offsets = [0, 128], sizes = [64, 128], strides = [1, 1]} : vector<64x384xf32> to vector<64x128xf32>
    %47 = vector.extract_strided_slice %44 {offsets = [0, 256], sizes = [64, 128], strides = [1, 1]} : vector<64x384xf32> to vector<64x128xf32>
    %48 = vector.extract_strided_slice %45 {offsets = [0, 0], sizes = [64, 64], strides = [1, 1]} : vector<64x128xf32> to vector<64x64xf32>
    %49 = vector.extract_strided_slice %46 {offsets = [0, 0], sizes = [64, 64], strides = [1, 1]} : vector<64x128xf32> to vector<64x64xf32>
    %50 = vector.extract_strided_slice %47 {offsets = [0, 0], sizes = [64, 64], strides = [1, 1]} : vector<64x128xf32> to vector<64x64xf32>
    %cst_25 = arith.constant dense<0.000000e+00> : vector<64x64xf32>
    %51 = tpu.matmul %48, %49, %cst_25 {dimension_numbers = #tpu.dot_dimension_numbers<[1], [1], [0], [0], [0, 0, 1, 0], [], []>} : vector<64x64xf32>, vector<64x64xf32>, vector<64x64xf32> -> vector<64x64xf32>
    %52 = arith.addf %51, %36 : vector<64x64xf32>
    %cst_26 = arith.constant dense<0xFF800000> : vector<64xf32>
    %53 = vector.multi_reduction <maximumf>, %52, %cst_26 [1] : vector<64x64xf32> to vector<64xf32>
    %54 = vector.shape_cast %53 : vector<64xf32> to vector<64x1xf32>
    %55 = vector.broadcast %54 : vector<64x1xf32> to vector<64x64xf32>
    %56 = arith.subf %52, %55 : vector<64x64xf32>
    %57 = math.exp %56 : vector<64x64xf32>
    %cst_27 = arith.constant dense<0.000000e+00> : vector<64xf32>
    %58 = vector.multi_reduction <add>, %57, %cst_27 [1] : vector<64x64xf32> to vector<64xf32>
    %59 = vector.shape_cast %58 : vector<64xf32> to vector<64x1xf32>
    %60 = tpu.reciprocal %59 {approx = true} : vector<64x1xf32> -> vector<64x1xf32>
    %61 = vector.broadcast %60 : vector<64x1xf32> to vector<64x64xf32>
    %62 = arith.mulf %57, %61 : vector<64x64xf32>
    %cst_28 = arith.constant dense<0.000000e+00> : vector<64x64xf32>
    %63 = tpu.matmul %62, %50, %cst_28 {dimension_numbers = #tpu.dot_dimension_numbers<[1], [0], [0], [1], [0, 0, 1, 1], [], []>} : vector<64x64xf32>, vector<64x64xf32>, vector<64x64xf32> -> vector<64x64xf32>
    %c0_29 = arith.constant 0 : index
    %c0_30 = arith.constant 0 : index
    %64 = vector.load %arg23[%c0_29, %c0_30] : memref<64x128xf32, #tpu.memory_space<vmem>>, vector<64x64xf32>
    tpu.vector_store %arg23[%c0_29, %c0_30], %63 {strides = array<i32>} : memref<64x128xf32, #tpu.memory_space<vmem>>, vector<64x64xf32>,
    %65 = vector.extract_strided_slice %45 {offsets = [0, 64], sizes = [64, 64], strides = [1, 1]} : vector<64x128xf32> to vector<64x64xf32>
    %66 = vector.extract_strided_slice %46 {offsets = [0, 64], sizes = [64, 64], strides = [1, 1]} : vector<64x128xf32> to vector<64x64xf32>
    %67 = vector.extract_strided_slice %47 {offsets = [0, 64], sizes = [64, 64], strides = [1, 1]} : vector<64x128xf32> to vector<64x64xf32>
    %cst_31 = arith.constant dense<0.000000e+00> : vector<64x64xf32>
    %68 = tpu.matmul %65, %66, %cst_31 {dimension_numbers = #tpu.dot_dimension_numbers<[1], [1], [0], [0], [0, 0, 1, 0], [], []>} : vector<64x64xf32>, vector<64x64xf32>, vector<64x64xf32> -> vector<64x64xf32>
    %69 = arith.addf %68, %36 : vector<64x64xf32>
    %cst_32 = arith.constant dense<0xFF800000> : vector<64xf32>
    %70 = vector.multi_reduction <maximumf>, %69, %cst_32 [1] : vector<64x64xf32> to vector<64xf32>
    %71 = vector.shape_cast %70 : vector<64xf32> to vector<64x1xf32>
    %72 = vector.broadcast %71 : vector<64x1xf32> to vector<64x64xf32>
    %73 = arith.subf %69, %72 : vector<64x64xf32>
    %74 = math.exp %73 : vector<64x64xf32>
    %cst_33 = arith.constant dense<0.000000e+00> : vector<64xf32>
    %75 = vector.multi_reduction <add>, %74, %cst_33 [1] : vector<64x64xf32> to vector<64xf32>
    %76 = vector.shape_cast %75 : vector<64xf32> to vector<64x1xf32>
    %77 = tpu.reciprocal %76 {approx = true} : vector<64x1xf32> -> vector<64x1xf32>
    %78 = vector.broadcast %77 : vector<64x1xf32> to vector<64x64xf32>
    %79 = arith.mulf %74, %78 : vector<64x64xf32>
    %cst_34 = arith.constant dense<0.000000e+00> : vector<64x64xf32>
    %80 = tpu.matmul %79, %67, %cst_34 {dimension_numbers = #tpu.dot_dimension_numbers<[1], [0], [0], [1], [0, 0, 1, 1], [], []>} : vector<64x64xf32>, vector<64x64xf32>, vector<64x64xf32> -> vector<64x64xf32>
    %c0_35 = arith.constant 0 : index
    %c64 = arith.constant 64 : index
    %81 = vector.load %arg23[%c0_35, %c64] : memref<64x128xf32, #tpu.memory_space<vmem>>, vector<64x64xf32>
    tpu.vector_store %arg23[%c0_35, %c64], %80 {strides = array<i32>} : memref<64x128xf32, #tpu.memory_space<vmem>>, vector<64x64xf32>,
    %c0_36 = arith.constant 0 : index
    %c0_37 = arith.constant 0 : index
    %82 = vector.load %arg23[%c0_36, %c0_37] : memref<64x128xf32, #tpu.memory_space<vmem>>, vector<64x128xf32>
    %83 = arith.truncf %82 : vector<64x128xf32> to vector<64x128xbf16>
    %c0_38 = arith.constant 0 : index
    %c0_39 = arith.constant 0 : index
    %c0_40 = arith.constant 0 : index
    %84 = vector.load %arg10[%c0_38, %c0_39, %c0_40] : memref<2x128x128xbf16, #tpu.memory_space<vmem>>, vector<1x128x128xbf16>
    %85 = vector.shape_cast %84 : vector<1x128x128xbf16> to vector<128x128xbf16>
    %cst_41 = arith.constant dense<0.000000e+00> : vector<64x128xf32>
    %86 = tpu.matmul %83, %85, %cst_41 {dimension_numbers = #tpu.dot_dimension_numbers<[1], [0], [0], [1], [0, 0, 1, 1], [], []>} : vector<64x128xbf16>, vector<128x128xbf16>, vector<64x128xf32> -> vector<64x128xf32>
    %c0_42 = arith.constant 0 : index
    %c0_43 = arith.constant 0 : index
    %c0_44 = arith.constant 0 : index
    %87 = vector.load %arg11[%c0_42, %c0_43, %c0_44] : memref<2x1x128xf32, #tpu.memory_space<vmem>>, vector<1x1x128xf32>
    %88 = vector.shape_cast %87 : vector<1x1x128xf32> to vector<1x128xf32>
    %89 = vector.broadcast %88 : vector<1x128xf32> to vector<64x128xf32>
    %90 = arith.addf %86, %89 : vector<64x128xf32>
    %91 = arith.addf %90, %35 : vector<64x128xf32>
    %c0_45 = arith.constant 0 : index
    %c0_46 = arith.constant 0 : index
    %c0_47 = arith.constant 0 : index
    %92 = vector.load %arg12[%c0_45, %c0_46, %c0_47] : memref<2x1x128xf32, #tpu.memory_space<vmem>>, vector<1x1x128xf32>
    %93 = vector.shape_cast %92 : vector<1x1x128xf32> to vector<1x128xf32>
    %c0_48 = arith.constant 0 : index
    %c0_49 = arith.constant 0 : index
    %c0_50 = arith.constant 0 : index
    %94 = vector.load %arg13[%c0_48, %c0_49, %c0_50] : memref<2x1x128xf32, #tpu.memory_space<vmem>>, vector<1x1x128xf32>
    %95 = vector.shape_cast %94 : vector<1x1x128xf32> to vector<1x128xf32>
    %cst_51 = arith.constant dense<0.000000e+00> : vector<64xf32>
    %96 = vector.multi_reduction <add>, %91, %cst_51 [1] : vector<64x128xf32> to vector<64xf32>
    %97 = vector.shape_cast %96 : vector<64xf32> to vector<64x1xf32>
    %cst_52 = arith.constant 1.280000e+02 : f32
    %98 = vector.broadcast %cst_52 : f32 to vector<64x1xf32>
    %99 = arith.divf %97, %98 : vector<64x1xf32>
    %100 = vector.broadcast %99 : vector<64x1xf32> to vector<64x128xf32>
    %101 = arith.subf %91, %100 : vector<64x128xf32>
    %102 = arith.mulf %101, %101 : vector<64x128xf32>
    %cst_53 = arith.constant dense<0.000000e+00> : vector<64xf32>
    %103 = vector.multi_reduction <add>, %102, %cst_53 [1] : vector<64x128xf32> to vector<64xf32>
    %104 = vector.shape_cast %103 : vector<64xf32> to vector<64x1xf32>
    %cst_54 = arith.constant 1.280000e+02 : f32
    %105 = vector.broadcast %cst_54 : f32 to vector<64x1xf32>
    %106 = arith.divf %104, %105 : vector<64x1xf32>
    %cst_55 = arith.constant 9.99999996E-13 : f32
    %107 = vector.broadcast %cst_55 : f32 to vector<64x1xf32>
    %108 = arith.addf %106, %107 : vector<64x1xf32>
    %109 = math.rsqrt %108 : vector<64x1xf32>
    %110 = vector.broadcast %109 : vector<64x1xf32> to vector<64x128xf32>
    %111 = arith.mulf %101, %110 : vector<64x128xf32>
    %112 = vector.broadcast %93 : vector<1x128xf32> to vector<64x128xf32>
    %113 = arith.mulf %111, %112 : vector<64x128xf32>
    %114 = vector.broadcast %95 : vector<1x128xf32> to vector<64x128xf32>
    %115 = arith.addf %113, %114 : vector<64x128xf32>
    %116 = arith.truncf %115 : vector<64x128xf32> to vector<64x128xbf16>
    %c0_56 = arith.constant 0 : index
    %c0_57 = arith.constant 0 : index
    %c0_58 = arith.constant 0 : index
    %117 = vector.load %arg14[%c0_56, %c0_57, %c0_58] : memref<2x128x512xbf16, #tpu.memory_space<vmem>>, vector<1x128x512xbf16>
    %118 = vector.shape_cast %117 : vector<1x128x512xbf16> to vector<128x512xbf16>
    %cst_59 = arith.constant dense<0.000000e+00> : vector<64x512xf32>
    %119 = tpu.matmul %116, %118, %cst_59 {dimension_numbers = #tpu.dot_dimension_numbers<[1], [0], [0], [1], [0, 0, 1, 1], [], []>} : vector<64x128xbf16>, vector<128x512xbf16>, vector<64x512xf32> -> vector<64x512xf32>
    %c0_60 = arith.constant 0 : index
    %c0_61 = arith.constant 0 : index
    %c0_62 = arith.constant 0 : index
    %120 = vector.load %arg15[%c0_60, %c0_61, %c0_62] : memref<2x1x512xf32, #tpu.memory_space<vmem>>, vector<1x1x512xf32>
    %121 = vector.shape_cast %120 : vector<1x1x512xf32> to vector<1x512xf32>
    %122 = vector.broadcast %121 : vector<1x512xf32> to vector<64x512xf32>
    %123 = arith.addf %119, %122 : vector<64x512xf32>
    %cst_63 = arith.constant 5.000000e-01 : f32
    %124 = vector.broadcast %cst_63 : f32 to vector<64x512xf32>
    %125 = arith.mulf %124, %123 : vector<64x512xf32>
    %cst_64 = arith.constant 4.471500e-02 : f32
    %126 = vector.broadcast %cst_64 : f32 to vector<64x512xf32>
    %127 = arith.mulf %126, %123 : vector<64x512xf32>
    %128 = arith.mulf %127, %123 : vector<64x512xf32>
    %129 = arith.mulf %128, %123 : vector<64x512xf32>
    %130 = arith.addf %123, %129 : vector<64x512xf32>
    %cst_65 = arith.constant 0.797884583 : f32
    %131 = vector.broadcast %cst_65 : f32 to vector<64x512xf32>
    %132 = arith.mulf %131, %130 : vector<64x512xf32>
    %133 = math.tanh %132 : vector<64x512xf32>
    %cst_66 = arith.constant 1.000000e+00 : f32
    %134 = vector.broadcast %cst_66 : f32 to vector<64x512xf32>
    %135 = arith.addf %134, %133 : vector<64x512xf32>
    %136 = arith.mulf %125, %135 : vector<64x512xf32>
    %137 = arith.truncf %136 : vector<64x512xf32> to vector<64x512xbf16>
    %c0_67 = arith.constant 0 : index
    %c0_68 = arith.constant 0 : index
    %c0_69 = arith.constant 0 : index
    %138 = vector.load %arg16[%c0_67, %c0_68, %c0_69] : memref<2x512x128xbf16, #tpu.memory_space<vmem>>, vector<1x512x128xbf16>
    %139 = vector.shape_cast %138 : vector<1x512x128xbf16> to vector<512x128xbf16>
    %cst_70 = arith.constant dense<0.000000e+00> : vector<64x128xf32>
    %140 = tpu.matmul %137, %139, %cst_70 {dimension_numbers = #tpu.dot_dimension_numbers<[1], [0], [0], [1], [0, 0, 1, 1], [], []>} : vector<64x512xbf16>, vector<512x128xbf16>, vector<64x128xf32> -> vector<64x128xf32>
    %c0_71 = arith.constant 0 : index
    %c0_72 = arith.constant 0 : index
    %c0_73 = arith.constant 0 : index
    %141 = vector.load %arg17[%c0_71, %c0_72, %c0_73] : memref<2x1x128xf32, #tpu.memory_space<vmem>>, vector<1x1x128xf32>
    %142 = vector.shape_cast %141 : vector<1x1x128xf32> to vector<1x128xf32>
    %143 = vector.broadcast %142 : vector<1x128xf32> to vector<64x128xf32>
    %144 = arith.addf %140, %143 : vector<64x128xf32>
    %145 = arith.addf %144, %115 : vector<64x128xf32>
    %c0_74 = arith.constant 0 : index
    %c0_75 = arith.constant 0 : index
    %c0_76 = arith.constant 0 : index
    %146 = vector.load %arg18[%c0_74, %c0_75, %c0_76] : memref<2x1x128xf32, #tpu.memory_space<vmem>>, vector<1x1x128xf32>
    %147 = vector.shape_cast %146 : vector<1x1x128xf32> to vector<1x128xf32>
    %c0_77 = arith.constant 0 : index
    %c0_78 = arith.constant 0 : index
    %c0_79 = arith.constant 0 : index
    %148 = vector.load %arg19[%c0_77, %c0_78, %c0_79] : memref<2x1x128xf32, #tpu.memory_space<vmem>>, vector<1x1x128xf32>
    %149 = vector.shape_cast %148 : vector<1x1x128xf32> to vector<1x128xf32>
    %cst_80 = arith.constant dense<0.000000e+00> : vector<64xf32>
    %150 = vector.multi_reduction <add>, %145, %cst_80 [1] : vector<64x128xf32> to vector<64xf32>
    %151 = vector.shape_cast %150 : vector<64xf32> to vector<64x1xf32>
    %cst_81 = arith.constant 1.280000e+02 : f32
    %152 = vector.broadcast %cst_81 : f32 to vector<64x1xf32>
    %153 = arith.divf %151, %152 : vector<64x1xf32>
    %154 = vector.broadcast %153 : vector<64x1xf32> to vector<64x128xf32>
    %155 = arith.subf %145, %154 : vector<64x128xf32>
    %156 = arith.mulf %155, %155 : vector<64x128xf32>
    %cst_82 = arith.constant dense<0.000000e+00> : vector<64xf32>
    %157 = vector.multi_reduction <add>, %156, %cst_82 [1] : vector<64x128xf32> to vector<64xf32>
    %158 = vector.shape_cast %157 : vector<64xf32> to vector<64x1xf32>
    %cst_83 = arith.constant 1.280000e+02 : f32
    %159 = vector.broadcast %cst_83 : f32 to vector<64x1xf32>
    %160 = arith.divf %158, %159 : vector<64x1xf32>
    %cst_84 = arith.constant 9.99999996E-13 : f32
    %161 = vector.broadcast %cst_84 : f32 to vector<64x1xf32>
    %162 = arith.addf %160, %161 : vector<64x1xf32>
    %163 = math.rsqrt %162 : vector<64x1xf32>
    %164 = vector.broadcast %163 : vector<64x1xf32> to vector<64x128xf32>
    %165 = arith.mulf %155, %164 : vector<64x128xf32>
    %166 = vector.broadcast %147 : vector<1x128xf32> to vector<64x128xf32>
    %167 = arith.mulf %165, %166 : vector<64x128xf32>
    %168 = vector.broadcast %149 : vector<1x128xf32> to vector<64x128xf32>
    %169 = arith.addf %167, %168 : vector<64x128xf32>
    %170 = arith.truncf %169 : vector<64x128xf32> to vector<64x128xbf16>
    %c1 = arith.constant 1 : index
    %c0_85 = arith.constant 0 : index
    %c0_86 = arith.constant 0 : index
    %171 = vector.load %arg8[%c1, %c0_85, %c0_86] : memref<2x128x384xbf16, #tpu.memory_space<vmem>>, vector<1x128x384xbf16>
    %172 = vector.shape_cast %171 : vector<1x128x384xbf16> to vector<128x384xbf16>
    %cst_87 = arith.constant dense<0.000000e+00> : vector<64x384xf32>
    %173 = tpu.matmul %170, %172, %cst_87 {dimension_numbers = #tpu.dot_dimension_numbers<[1], [0], [0], [1], [0, 0, 1, 1], [], []>} : vector<64x128xbf16>, vector<128x384xbf16>, vector<64x384xf32> -> vector<64x384xf32>
    %c1_88 = arith.constant 1 : index
    %c0_89 = arith.constant 0 : index
    %c0_90 = arith.constant 0 : index
    %174 = vector.load %arg9[%c1_88, %c0_89, %c0_90] : memref<2x1x384xf32, #tpu.memory_space<vmem>>, vector<1x1x384xf32>
    %175 = vector.shape_cast %174 : vector<1x1x384xf32> to vector<1x384xf32>
    %176 = vector.broadcast %175 : vector<1x384xf32> to vector<64x384xf32>
    %177 = arith.addf %173, %176 : vector<64x384xf32>
    %178 = vector.extract_strided_slice %177 {offsets = [0, 0], sizes = [64, 128], strides = [1, 1]} : vector<64x384xf32> to vector<64x128xf32>
    %179 = vector.extract_strided_slice %177 {offsets = [0, 128], sizes = [64, 128], strides = [1, 1]} : vector<64x384xf32> to vector<64x128xf32>
    %180 = vector.extract_strided_slice %177 {offsets = [0, 256], sizes = [64, 128], strides = [1, 1]} : vector<64x384xf32> to vector<64x128xf32>
    %181 = vector.extract_strided_slice %178 {offsets = [0, 0], sizes = [64, 64], strides = [1, 1]} : vector<64x128xf32> to vector<64x64xf32>
    %182 = vector.extract_strided_slice %179 {offsets = [0, 0], sizes = [64, 64], strides = [1, 1]} : vector<64x128xf32> to vector<64x64xf32>
    %183 = vector.extract_strided_slice %180 {offsets = [0, 0], sizes = [64, 64], strides = [1, 1]} : vector<64x128xf32> to vector<64x64xf32>
    %cst_91 = arith.constant dense<0.000000e+00> : vector<64x64xf32>
    %184 = tpu.matmul %181, %182, %cst_91 {dimension_numbers = #tpu.dot_dimension_numbers<[1], [1], [0], [0], [0, 0, 1, 0], [], []>} : vector<64x64xf32>, vector<64x64xf32>, vector<64x64xf32> -> vector<64x64xf32>
    %185 = arith.addf %184, %36 : vector<64x64xf32>
    %cst_92 = arith.constant dense<0xFF800000> : vector<64xf32>
    %186 = vector.multi_reduction <maximumf>, %185, %cst_92 [1] : vector<64x64xf32> to vector<64xf32>
    %187 = vector.shape_cast %186 : vector<64xf32> to vector<64x1xf32>
    %188 = vector.broadcast %187 : vector<64x1xf32> to vector<64x64xf32>
    %189 = arith.subf %185, %188 : vector<64x64xf32>
    %190 = math.exp %189 : vector<64x64xf32>
    %cst_93 = arith.constant dense<0.000000e+00> : vector<64xf32>
    %191 = vector.multi_reduction <add>, %190, %cst_93 [1] : vector<64x64xf32> to vector<64xf32>
    %192 = vector.shape_cast %191 : vector<64xf32> to vector<64x1xf32>
    %193 = tpu.reciprocal %192 {approx = true} : vector<64x1xf32> -> vector<64x1xf32>
    %194 = vector.broadcast %193 : vector<64x1xf32> to vector<64x64xf32>
    %195 = arith.mulf %190, %194 : vector<64x64xf32>
    %cst_94 = arith.constant dense<0.000000e+00> : vector<64x64xf32>
    %196 = tpu.matmul %195, %183, %cst_94 {dimension_numbers = #tpu.dot_dimension_numbers<[1], [0], [0], [1], [0, 0, 1, 1], [], []>} : vector<64x64xf32>, vector<64x64xf32>, vector<64x64xf32> -> vector<64x64xf32>
    %c0_95 = arith.constant 0 : index
    %c0_96 = arith.constant 0 : index
    %197 = vector.load %arg23[%c0_95, %c0_96] : memref<64x128xf32, #tpu.memory_space<vmem>>, vector<64x64xf32>
    tpu.vector_store %arg23[%c0_95, %c0_96], %196 {strides = array<i32>} : memref<64x128xf32, #tpu.memory_space<vmem>>, vector<64x64xf32>,
    %198 = vector.extract_strided_slice %178 {offsets = [0, 64], sizes = [64, 64], strides = [1, 1]} : vector<64x128xf32> to vector<64x64xf32>
    %199 = vector.extract_strided_slice %179 {offsets = [0, 64], sizes = [64, 64], strides = [1, 1]} : vector<64x128xf32> to vector<64x64xf32>
    %200 = vector.extract_strided_slice %180 {offsets = [0, 64], sizes = [64, 64], strides = [1, 1]} : vector<64x128xf32> to vector<64x64xf32>
    %cst_97 = arith.constant dense<0.000000e+00> : vector<64x64xf32>
    %201 = tpu.matmul %198, %199, %cst_97 {dimension_numbers = #tpu.dot_dimension_numbers<[1], [1], [0], [0], [0, 0, 1, 0], [], []>} : vector<64x64xf32>, vector<64x64xf32>, vector<64x64xf32> -> vector<64x64xf32>
    %202 = arith.addf %201, %36 : vector<64x64xf32>
    %cst_98 = arith.constant dense<0xFF800000> : vector<64xf32>
    %203 = vector.multi_reduction <maximumf>, %202, %cst_98 [1] : vector<64x64xf32> to vector<64xf32>
    %204 = vector.shape_cast %203 : vector<64xf32> to vector<64x1xf32>
    %205 = vector.broadcast %204 : vector<64x1xf32> to vector<64x64xf32>
    %206 = arith.subf %202, %205 : vector<64x64xf32>
    %207 = math.exp %206 : vector<64x64xf32>
    %cst_99 = arith.constant dense<0.000000e+00> : vector<64xf32>
    %208 = vector.multi_reduction <add>, %207, %cst_99 [1] : vector<64x64xf32> to vector<64xf32>
    %209 = vector.shape_cast %208 : vector<64xf32> to vector<64x1xf32>
    %210 = tpu.reciprocal %209 {approx = true} : vector<64x1xf32> -> vector<64x1xf32>
    %211 = vector.broadcast %210 : vector<64x1xf32> to vector<64x64xf32>
    %212 = arith.mulf %207, %211 : vector<64x64xf32>
    %cst_100 = arith.constant dense<0.000000e+00> : vector<64x64xf32>
    %213 = tpu.matmul %212, %200, %cst_100 {dimension_numbers = #tpu.dot_dimension_numbers<[1], [0], [0], [1], [0, 0, 1, 1], [], []>} : vector<64x64xf32>, vector<64x64xf32>, vector<64x64xf32> -> vector<64x64xf32>
    %c0_101 = arith.constant 0 : index
    %c64_102 = arith.constant 64 : index
    %214 = vector.load %arg23[%c0_101, %c64_102] : memref<64x128xf32, #tpu.memory_space<vmem>>, vector<64x64xf32>
    tpu.vector_store %arg23[%c0_101, %c64_102], %213 {strides = array<i32>} : memref<64x128xf32, #tpu.memory_space<vmem>>, vector<64x64xf32>,
    %c0_103 = arith.constant 0 : index
    %c0_104 = arith.constant 0 : index
    %215 = vector.load %arg23[%c0_103, %c0_104] : memref<64x128xf32, #tpu.memory_space<vmem>>, vector<64x128xf32>
    %216 = arith.truncf %215 : vector<64x128xf32> to vector<64x128xbf16>
    %c1_105 = arith.constant 1 : index
    %c0_106 = arith.constant 0 : index
    %c0_107 = arith.constant 0 : index
    %217 = vector.load %arg10[%c1_105, %c0_106, %c0_107] : memref<2x128x128xbf16, #tpu.memory_space<vmem>>, vector<1x128x128xbf16>
    %218 = vector.shape_cast %217 : vector<1x128x128xbf16> to vector<128x128xbf16>
    %cst_108 = arith.constant dense<0.000000e+00> : vector<64x128xf32>
    %219 = tpu.matmul %216, %218, %cst_108 {dimension_numbers = #tpu.dot_dimension_numbers<[1], [0], [0], [1], [0, 0, 1, 1], [], []>} : vector<64x128xbf16>, vector<128x128xbf16>, vector<64x128xf32> -> vector<64x128xf32>
    %c1_109 = arith.constant 1 : index
    %c0_110 = arith.constant 0 : index
    %c0_111 = arith.constant 0 : index
    %220 = vector.load %arg11[%c1_109, %c0_110, %c0_111] : memref<2x1x128xf32, #tpu.memory_space<vmem>>, vector<1x1x128xf32>
    %221 = vector.shape_cast %220 : vector<1x1x128xf32> to vector<1x128xf32>
    %222 = vector.broadcast %221 : vector<1x128xf32> to vector<64x128xf32>
    %223 = arith.addf %219, %222 : vector<64x128xf32>
    %224 = arith.addf %223, %169 : vector<64x128xf32>
    %c1_112 = arith.constant 1 : index
    %c0_113 = arith.constant 0 : index
    %c0_114 = arith.constant 0 : index
    %225 = vector.load %arg12[%c1_112, %c0_113, %c0_114] : memref<2x1x128xf32, #tpu.memory_space<vmem>>, vector<1x1x128xf32>
    %226 = vector.shape_cast %225 : vector<1x1x128xf32> to vector<1x128xf32>
    %c1_115 = arith.constant 1 : index
    %c0_116 = arith.constant 0 : index
    %c0_117 = arith.constant 0 : index
    %227 = vector.load %arg13[%c1_115, %c0_116, %c0_117] : memref<2x1x128xf32, #tpu.memory_space<vmem>>, vector<1x1x128xf32>
    %228 = vector.shape_cast %227 : vector<1x1x128xf32> to vector<1x128xf32>
    %cst_118 = arith.constant dense<0.000000e+00> : vector<64xf32>
    %229 = vector.multi_reduction <add>, %224, %cst_118 [1] : vector<64x128xf32> to vector<64xf32>
    %230 = vector.shape_cast %229 : vector<64xf32> to vector<64x1xf32>
    %cst_119 = arith.constant 1.280000e+02 : f32
    %231 = vector.broadcast %cst_119 : f32 to vector<64x1xf32>
    %232 = arith.divf %230, %231 : vector<64x1xf32>
    %233 = vector.broadcast %232 : vector<64x1xf32> to vector<64x128xf32>
    %234 = arith.subf %224, %233 : vector<64x128xf32>
    %235 = arith.mulf %234, %234 : vector<64x128xf32>
    %cst_120 = arith.constant dense<0.000000e+00> : vector<64xf32>
    %236 = vector.multi_reduction <add>, %235, %cst_120 [1] : vector<64x128xf32> to vector<64xf32>
    %237 = vector.shape_cast %236 : vector<64xf32> to vector<64x1xf32>
    %cst_121 = arith.constant 1.280000e+02 : f32
    %238 = vector.broadcast %cst_121 : f32 to vector<64x1xf32>
    %239 = arith.divf %237, %238 : vector<64x1xf32>
    %cst_122 = arith.constant 9.99999996E-13 : f32
    %240 = vector.broadcast %cst_122 : f32 to vector<64x1xf32>
    %241 = arith.addf %239, %240 : vector<64x1xf32>
    %242 = math.rsqrt %241 : vector<64x1xf32>
    %243 = vector.broadcast %242 : vector<64x1xf32> to vector<64x128xf32>
    %244 = arith.mulf %234, %243 : vector<64x128xf32>
    %245 = vector.broadcast %226 : vector<1x128xf32> to vector<64x128xf32>
    %246 = arith.mulf %244, %245 : vector<64x128xf32>
    %247 = vector.broadcast %228 : vector<1x128xf32> to vector<64x128xf32>
    %248 = arith.addf %246, %247 : vector<64x128xf32>
    %249 = arith.truncf %248 : vector<64x128xf32> to vector<64x128xbf16>
    %c1_123 = arith.constant 1 : index
    %c0_124 = arith.constant 0 : index
    %c0_125 = arith.constant 0 : index
    %250 = vector.load %arg14[%c1_123, %c0_124, %c0_125] : memref<2x128x512xbf16, #tpu.memory_space<vmem>>, vector<1x128x512xbf16>
    %251 = vector.shape_cast %250 : vector<1x128x512xbf16> to vector<128x512xbf16>
    %cst_126 = arith.constant dense<0.000000e+00> : vector<64x512xf32>
    %252 = tpu.matmul %249, %251, %cst_126 {dimension_numbers = #tpu.dot_dimension_numbers<[1], [0], [0], [1], [0, 0, 1, 1], [], []>} : vector<64x128xbf16>, vector<128x512xbf16>, vector<64x512xf32> -> vector<64x512xf32>
    %c1_127 = arith.constant 1 : index
    %c0_128 = arith.constant 0 : index
    %c0_129 = arith.constant 0 : index
    %253 = vector.load %arg15[%c1_127, %c0_128, %c0_129] : memref<2x1x512xf32, #tpu.memory_space<vmem>>, vector<1x1x512xf32>
    %254 = vector.shape_cast %253 : vector<1x1x512xf32> to vector<1x512xf32>
    %255 = vector.broadcast %254 : vector<1x512xf32> to vector<64x512xf32>
    %256 = arith.addf %252, %255 : vector<64x512xf32>
    %cst_130 = arith.constant 5.000000e-01 : f32
    %257 = vector.broadcast %cst_130 : f32 to vector<64x512xf32>
    %258 = arith.mulf %257, %256 : vector<64x512xf32>
    %cst_131 = arith.constant 4.471500e-02 : f32
    %259 = vector.broadcast %cst_131 : f32 to vector<64x512xf32>
    %260 = arith.mulf %259, %256 : vector<64x512xf32>
    %261 = arith.mulf %260, %256 : vector<64x512xf32>
    %262 = arith.mulf %261, %256 : vector<64x512xf32>
    %263 = arith.addf %256, %262 : vector<64x512xf32>
    %cst_132 = arith.constant 0.797884583 : f32
    %264 = vector.broadcast %cst_132 : f32 to vector<64x512xf32>
    %265 = arith.mulf %264, %263 : vector<64x512xf32>
    %266 = math.tanh %265 : vector<64x512xf32>
    %cst_133 = arith.constant 1.000000e+00 : f32
    %267 = vector.broadcast %cst_133 : f32 to vector<64x512xf32>
    %268 = arith.addf %267, %266 : vector<64x512xf32>
    %269 = arith.mulf %258, %268 : vector<64x512xf32>
    %270 = arith.truncf %269 : vector<64x512xf32> to vector<64x512xbf16>
    %c1_134 = arith.constant 1 : index
    %c0_135 = arith.constant 0 : index
    %c0_136 = arith.constant 0 : index
    %271 = vector.load %arg16[%c1_134, %c0_135, %c0_136] : memref<2x512x128xbf16, #tpu.memory_space<vmem>>, vector<1x512x128xbf16>
    %272 = vector.shape_cast %271 : vector<1x512x128xbf16> to vector<512x128xbf16>
    %cst_137 = arith.constant dense<0.000000e+00> : vector<64x128xf32>
    %273 = tpu.matmul %270, %272, %cst_137 {dimension_numbers = #tpu.dot_dimension_numbers<[1], [0], [0], [1], [0, 0, 1, 1], [], []>} : vector<64x512xbf16>, vector<512x128xbf16>, vector<64x128xf32> -> vector<64x128xf32>
    %c1_138 = arith.constant 1 : index
    %c0_139 = arith.constant 0 : index
    %c0_140 = arith.constant 0 : index
    %274 = vector.load %arg17[%c1_138, %c0_139, %c0_140] : memref<2x1x128xf32, #tpu.memory_space<vmem>>, vector<1x1x128xf32>
    %275 = vector.shape_cast %274 : vector<1x1x128xf32> to vector<1x128xf32>
    %276 = vector.broadcast %275 : vector<1x128xf32> to vector<64x128xf32>
    %277 = arith.addf %273, %276 : vector<64x128xf32>
    %278 = arith.addf %277, %248 : vector<64x128xf32>
    %c1_141 = arith.constant 1 : index
    %c0_142 = arith.constant 0 : index
    %c0_143 = arith.constant 0 : index
    %279 = vector.load %arg18[%c1_141, %c0_142, %c0_143] : memref<2x1x128xf32, #tpu.memory_space<vmem>>, vector<1x1x128xf32>
    %280 = vector.shape_cast %279 : vector<1x1x128xf32> to vector<1x128xf32>
    %c1_144 = arith.constant 1 : index
    %c0_145 = arith.constant 0 : index
    %c0_146 = arith.constant 0 : index
    %281 = vector.load %arg19[%c1_144, %c0_145, %c0_146] : memref<2x1x128xf32, #tpu.memory_space<vmem>>, vector<1x1x128xf32>
    %282 = vector.shape_cast %281 : vector<1x1x128xf32> to vector<1x128xf32>
    %cst_147 = arith.constant dense<0.000000e+00> : vector<64xf32>
    %283 = vector.multi_reduction <add>, %278, %cst_147 [1] : vector<64x128xf32> to vector<64xf32>
    %284 = vector.shape_cast %283 : vector<64xf32> to vector<64x1xf32>
    %cst_148 = arith.constant 1.280000e+02 : f32
    %285 = vector.broadcast %cst_148 : f32 to vector<64x1xf32>
    %286 = arith.divf %284, %285 : vector<64x1xf32>
    %287 = vector.broadcast %286 : vector<64x1xf32> to vector<64x128xf32>
    %288 = arith.subf %278, %287 : vector<64x128xf32>
    %289 = arith.mulf %288, %288 : vector<64x128xf32>
    %cst_149 = arith.constant dense<0.000000e+00> : vector<64xf32>
    %290 = vector.multi_reduction <add>, %289, %cst_149 [1] : vector<64x128xf32> to vector<64xf32>
    %291 = vector.shape_cast %290 : vector<64xf32> to vector<64x1xf32>
    %cst_150 = arith.constant 1.280000e+02 : f32
    %292 = vector.broadcast %cst_150 : f32 to vector<64x1xf32>
    %293 = arith.divf %291, %292 : vector<64x1xf32>
    %cst_151 = arith.constant 9.99999996E-13 : f32
    %294 = vector.broadcast %cst_151 : f32 to vector<64x1xf32>
    %295 = arith.addf %293, %294 : vector<64x1xf32>
    %296 = math.rsqrt %295 : vector<64x1xf32>
    %297 = vector.broadcast %296 : vector<64x1xf32> to vector<64x128xf32>
    %298 = arith.mulf %288, %297 : vector<64x128xf32>
    %299 = vector.broadcast %280 : vector<1x128xf32> to vector<64x128xf32>
    %300 = arith.mulf %298, %299 : vector<64x128xf32>
    %301 = vector.broadcast %282 : vector<1x128xf32> to vector<64x128xf32>
    %302 = arith.addf %300, %301 : vector<64x128xf32>
    %303 = arith.truncf %302 : vector<64x128xf32> to vector<64x128xbf16>
    %c0_152 = arith.constant 0 : index
    %c0_153 = arith.constant 0 : index
    %304 = vector.load %arg20[%c0_152, %c0_153] : memref<128x128xbf16, #tpu.memory_space<vmem>>, vector<128x128xbf16>
    %cst_154 = arith.constant dense<0.000000e+00> : vector<64x128xf32>
    %305 = tpu.matmul %303, %304, %cst_154 {dimension_numbers = #tpu.dot_dimension_numbers<[1], [0], [0], [1], [0, 0, 1, 1], [], []>} : vector<64x128xbf16>, vector<128x128xbf16>, vector<64x128xf32> -> vector<64x128xf32>
    %c0_155 = arith.constant 0 : index
    %c0_156 = arith.constant 0 : index
    %306 = vector.load %arg21[%c0_155, %c0_156] : memref<1x128xf32, #tpu.memory_space<vmem>>, vector<1x128xf32>
    %307 = vector.broadcast %306 : vector<1x128xf32> to vector<64x128xf32>
    %308 = arith.addf %305, %307 : vector<64x128xf32>
    %cst_157 = arith.constant dense<0xFF800000> : vector<64xf32>
    %309 = vector.multi_reduction <maximumf>, %308, %cst_157 [1] : vector<64x128xf32> to vector<64xf32>
    %310 = vector.shape_cast %309 : vector<64xf32> to vector<64x1xf32>
    %311 = vector.broadcast %310 : vector<64x1xf32> to vector<64x128xf32>
    %312 = arith.subf %308, %311 : vector<64x128xf32>
    %313 = math.exp %312 : vector<64x128xf32>
    %cst_158 = arith.constant dense<0.000000e+00> : vector<64xf32>
    %314 = vector.multi_reduction <add>, %313, %cst_158 [1] : vector<64x128xf32> to vector<64xf32>
    %315 = vector.shape_cast %314 : vector<64xf32> to vector<64x1xf32>
    %316 = math.log %315 : vector<64x1xf32>
    %317 = vector.broadcast %316 : vector<64x1xf32> to vector<64x128xf32>
    %318 = arith.subf %312, %317 : vector<64x128xf32>
    %c0_159 = arith.constant 0 : index
    %c0_160 = arith.constant 0 : index
    %319 = vector.load %arg22[%c0_159, %c0_160] : memref<64x128xf32, #tpu.memory_space<vmem>>, vector<64x128xf32>
    tpu.vector_store %arg22[%c0_159, %c0_160], %318 {strides = array<i32>} : memref<64x128xf32, #tpu.memory_space<vmem>>, vector<64x128xf32>,
    return
  }
  func.func @transform_0(%arg0: i32) -> (i32, i32) {
    %c0_i32 = arith.constant 0 : i32
    %c0_i32_0 = arith.constant 0 : i32
    %c0_i32_1 = arith.constant 0 : i32
    return %c0_i32, %c0_i32_0 : i32, i32
  }
  func.func @transform_1(%arg0: i32) -> (i32, i32) {
    %c0_i32 = arith.constant 0 : i32
    %c0_i32_0 = arith.constant 0 : i32
    %c0_i32_1 = arith.constant 0 : i32
    return %c0_i32, %c0_i32_0 : i32, i32
  }
  func.func @transform_2(%arg0: i32) -> (i32, i32) {
    %c0_i32 = arith.constant 0 : i32
    %c0_i32_0 = arith.constant 0 : i32
    %c0_i32_1 = arith.constant 0 : i32
    return %c0_i32, %c0_i32_0 : i32, i32
  }
  func.func @transform_3(%arg0: i32) -> (i32, i32) {
    %c0_i32 = arith.constant 0 : i32
    %c0_i32_0 = arith.constant 0 : i32
    %c0_i32_1 = arith.constant 0 : i32
    return %c0_i32, %c0_i32_0 : i32, i32
  }
  func.func @transform_4(%arg0: i32) -> (i32, i32) {
    %c0_i32 = arith.constant 0 : i32
    %c0_i32_0 = arith.constant 0 : i32
    %c0_i32_1 = arith.constant 0 : i32
    return %c0_i32, %c0_i32_0 : i32, i32
  }
  func.func @transform_5(%arg0: i32) -> (i32, i32) {
    %c0_i32 = arith.constant 0 : i32
    %c0_i32_0 = arith.constant 0 : i32
    %c0_i32_1 = arith.constant 0 : i32
    return %c0_i32, %c0_i32_0 : i32, i32
  }
  func.func @transform_6(%arg0: i32) -> (i32, i32) {
    %c0_i32 = arith.constant 0 : i32
    %c0_i32_0 = arith.constant 0 : i32
    %c0_i32_1 = arith.constant 0 : i32
    return %c0_i32, %c0_i32_0 : i32, i32
  }
  func.func @transform_7(%arg0: i32) -> (i32, i32, i32) {
    %c0_i32 = arith.constant 0 : i32
    %c0_i32_0 = arith.constant 0 : i32
    %c0_i32_1 = arith.constant 0 : i32
    %c0_i32_2 = arith.constant 0 : i32
    return %c0_i32, %c0_i32_0, %c0_i32_1 : i32, i32, i32
  }
  func.func @transform_8(%arg0: i32) -> (i32, i32, i32) {
    %c0_i32 = arith.constant 0 : i32
    %c0_i32_0 = arith.constant 0 : i32
    %c0_i32_1 = arith.constant 0 : i32
    %c0_i32_2 = arith.constant 0 : i32
    return %c0_i32, %c0_i32_0, %c0_i32_1 : i32, i32, i32
  }
  func.func @transform_9(%arg0: i32) -> (i32, i32, i32) {
    %c0_i32 = arith.constant 0 : i32
    %c0_i32_0 = arith.constant 0 : i32
    %c0_i32_1 = arith.constant 0 : i32
    %c0_i32_2 = arith.constant 0 : i32
    return %c0_i32, %c0_i32_0, %c0_i32_1 : i32, i32, i32
  }
  func.func @transform_10(%arg0: i32) -> (i32, i32, i32) {
    %c0_i32 = arith.constant 0 : i32
    %c0_i32_0 = arith.constant 0 : i32
    %c0_i32_1 = arith.constant 0 : i32
    %c0_i32_2 = arith.constant 0 : i32
    return %c0_i32, %c0_i32_0, %c0_i32_1 : i32, i32, i32
  }
  func.func @transform_11(%arg0: i32) -> (i32, i32, i32) {
    %c0_i32 = arith.constant 0 : i32
    %c0_i32_0 = arith.constant 0 : i32
    %c0_i32_1 = arith.constant 0 : i32
    %c0_i32_2 = arith.constant 0 : i32
    return %c0_i32, %c0_i32_0, %c0_i32_1 : i32, i32, i32
  }
  func.func @transform_12(%arg0: i32) -> (i32, i32, i32) {
    %c0_i32 = arith.constant 0 : i32
    %c0_i32_0 = arith.constant 0 : i32
    %c0_i32_1 = arith.constant 0 : i32
    %c0_i32_2 = arith.constant 0 : i32
    return %c0_i32, %c0_i32_0, %c0_i32_1 : i32, i32, i32
  }
  func.func @transform_13(%arg0: i32) -> (i32, i32, i32) {
    %c0_i32 = arith.constant 0 : i32
    %c0_i32_0 = arith.constant 0 : i32
    %c0_i32_1 = arith.constant 0 : i32
    %c0_i32_2 = arith.constant 0 : i32
    return %c0_i32, %c0_i32_0, %c0_i32_1 : i32, i32, i32
  }
  func.func @transform_14(%arg0: i32) -> (i32, i32, i32) {
    %c0_i32 = arith.constant 0 : i32
    %c0_i32_0 = arith.constant 0 : i32
    %c0_i32_1 = arith.constant 0 : i32
    %c0_i32_2 = arith.constant 0 : i32
    return %c0_i32, %c0_i32_0, %c0_i32_1 : i32, i32, i32
  }
  func.func @transform_15(%arg0: i32) -> (i32, i32, i32) {
    %c0_i32 = arith.constant 0 : i32
    %c0_i32_0 = arith.constant 0 : i32
    %c0_i32_1 = arith.constant 0 : i32
    %c0_i32_2 = arith.constant 0 : i32
    return %c0_i32, %c0_i32_0, %c0_i32_1 : i32, i32, i32
  }
  func.func @transform_16(%arg0: i32) -> (i32, i32, i32) {
    %c0_i32 = arith.constant 0 : i32
    %c0_i32_0 = arith.constant 0 : i32
    %c0_i32_1 = arith.constant 0 : i32
    %c0_i32_2 = arith.constant 0 : i32
    return %c0_i32, %c0_i32_0, %c0_i32_1 : i32, i32, i32
  }
  func.func @transform_17(%arg0: i32) -> (i32, i32, i32) {
    %c0_i32 = arith.constant 0 : i32
    %c0_i32_0 = arith.constant 0 : i32
    %c0_i32_1 = arith.constant 0 : i32
    %c0_i32_2 = arith.constant 0 : i32
    return %c0_i32, %c0_i32_0, %c0_i32_1 : i32, i32, i32
  }
  func.func @transform_18(%arg0: i32) -> (i32, i32, i32) {
    %c0_i32 = arith.constant 0 : i32
    %c0_i32_0 = arith.constant 0 : i32
    %c0_i32_1 = arith.constant 0 : i32
    %c0_i32_2 = arith.constant 0 : i32
    return %c0_i32, %c0_i32_0, %c0_i32_1 : i32, i32, i32
  }
  func.func @transform_19(%arg0: i32) -> (i32, i32) {
    %c0_i32 = arith.constant 0 : i32
    %c0_i32_0 = arith.constant 0 : i32
    %c0_i32_1 = arith.constant 0 : i32
    return %c0_i32, %c0_i32_0 : i32, i32
  }
  func.func @transform_20(%arg0: i32) -> (i32, i32) {
    %c0_i32 = arith.constant 0 : i32
    %c0_i32_0 = arith.constant 0 : i32
    %c0_i32_1 = arith.constant 0 : i32
    return %c0_i32, %c0_i32_0 : i32, i32
  }
  func.func @transform_21(%arg0: i32) -> (i32, i32) {
    %c0_i32 = arith.constant 0 : i32
    %c0_i32_0 = arith.constant 0 : i32
    %c0_i32_1 = arith.constant 0 : i32
    return %c0_i32, %c0_i32_0 : i32, i32
  }
}

</mosaic_0001>

<llo_original>
// kernel: eq.8
$region0: #{eq.8}
  %s0 = inlined_call_operand.vmem [shape: s32[2,32], index: 0, kind: input, shape index: {}]
  %s1 = inlined_call_operand.vmem [shape: s32[64], index: 1, kind: output, shape index: {}]
  $region1: #{eq.8} parent=0
    #allocation0 [shape = 'u8[4096]{0}', space=vmem, size = 0x1000, scoped, tag = 'scoped mem for output reshape']
    #allocation1 [shape = 'u8[4096]{0}', space=vmem, size = 0x1000, scoped, tag = 'scoped mem for input reshape']
    %s3 = ssub.s32 4, 1
    %v4 = vld [vmem:[%s0] sm:%s3]
    %5 = vst [vmem:[#allocation1] sm:%s3] %v4
    %v6 = vld [vmem:[#allocation1] sm:$0x1]
    %vm7 = vcmask 261120
    %8 = vst.msk [vmem:[#allocation0] sm:$0x1] %vm7, %v6
    %s9 = scalar_lea.vmem [#allocation1], 1
    %v10 = vld [vmem:[%s9] sm:$0x1]
    %11 = vrot.lane.b32.xlu0 %v10, 32
    %v12 = vpop.permute.xlu0 %11
    %vm13 = vcmask 523520
    %14 = vst.msk [vmem:[#allocation0] sm:$0x1] %vm13, %v12
    %s16 = ssub.s32 2, 1
    %v17 = vld [vmem:[#allocation0] sm:%s16]
    %s19 = ssub.s32 2, 1
    %20 = vst [vmem:[%s1] sm:%s19] %v17

// kernel: bert_punctuator_forward.1
$region0: #{bert_punctuator_forward.1}
  #allocation0 [shape = 'u32[]', space=smem, size = 0x4, offset = 0x4, fixed_abs, tag = 'smem constant byte address 0x4 - core index']
  #allocation1 [shape = 'u32[72,128]{1,0:T(1,128)}', space=vmem, size = 0x9000, scoped, tag = 'internal scratch']
  #allocation2 [shape = 'f32[64,128]{1,0:T(8,128)}', space=vmem, size = 0x8000, scoped, tag = 'scratch operand']
  %s0 = inlined_call_operand.vmem [shape: s32[64,1], index: 0, kind: input, shape index: {}]
  %s1 = inlined_call_operand.vmem [shape: f32[64,64], index: 1, kind: input, shape index: {}]
  %s2 = inlined_call_operand.vmem [shape: bf16[128,128], index: 2, kind: input, shape index: {}]
  %s3 = inlined_call_operand.vmem [shape: f32[64,128], index: 3, kind: input, shape index: {}]
  %s4 = inlined_call_operand.vmem [shape: f32[1,128], index: 4, kind: input, shape index: {}]
  %s5 = inlined_call_operand.vmem [shape: f32[1,128], index: 5, kind: input, shape index: {}]
  %s6 = inlined_call_operand.vmem [shape: f32[1,128], index: 6, kind: input, shape index: {}]
  %s7 = inlined_call_operand.hbm [shape: bf16[2,128,384], index: 7, kind: input, shape index: {}]
  %s8 = inlined_call_operand.vmem [shape: f32[2,1,384], index: 8, kind: input, shape index: {}]
  %s9 = inlined_call_operand.vmem [shape: bf16[2,128,128], index: 9, kind: input, shape index: {}]
  %s10 = inlined_call_operand.vmem [shape: f32[2,1,128], index: 10, kind: input, shape index: {}, may-alias: {10,12,16,18}]
  %s11 = inlined_call_operand.vmem [shape: f32[2,1,128], index: 11, kind: input, shape index: {}, may-alias: {11,17}]
  %s12 = inlined_call_operand.vmem [shape: f32[2,1,128], index: 12, kind: input, shape index: {}, may-alias: {10,12,16,18}]
  %s13 = inlined_call_operand.hbm [shape: bf16[2,128,512], index: 13, kind: input, shape index: {}]
  %s14 = inlined_call_operand.vmem [shape: f32[2,1,512], index: 14, kind: input, shape index: {}]
  %s15 = inlined_call_operand.hbm [shape: bf16[2,512,128], index: 15, kind: input, shape index: {}]
  %s16 = inlined_call_operand.vmem [shape: f32[2,1,128], index: 16, kind: input, shape index: {}, may-alias: {10,12,16,18}]
  %s17 = inlined_call_operand.vmem [shape: f32[2,1,128], index: 17, kind: input, shape index: {}, may-alias: {11,17}]
  %s18 = inlined_call_operand.vmem [shape: f32[2,1,128], index: 18, kind: input, shape index: {}, may-alias: {10,12,16,18}]
  %s19 = inlined_call_operand.vmem [shape: bf16[128,128], index: 19, kind: input, shape index: {}]
  %s20 = inlined_call_operand.vmem [shape: f32[1,128], index: 20, kind: input, shape index: {}]
  %s21 = inlined_call_operand.vmem [shape: f32[64,128], index: 21, kind: output, shape index: {}]
  %s22 = sld [smem:[#allocation0]]
  $region106: #{bert_punctuator_forward.1} parent=0
    _
  %s24 = ssub.s32 1, %s22
  %s25 = scalar_select 0, %s24, %s22
  $region1: #{bert_punctuator_forward.1} parent=0
    #allocation3 [shape = 'u8[196608]{0}', space=vmem, size = 0x30000, scoped, tag = 'input window, operand 7, single buffered']
    #allocation4 [shape = 's32[1]{0}', space=sflag, size = 0x4, scoped, tag = 'scoped memory for bert_punctuator_forward.1']
    #allocation5 [shape = 'u8[262144]{0}', space=vmem, size = 0x40000, scoped, tag = 'input window, operand 13, single buffered']
    #allocation6 [shape = 's32[1]{0}', space=sflag, size = 0x4, scoped, tag = 'scoped memory for bert_punctuator_forward.1']
    #allocation7 [shape = 'u8[262144]{0}', space=vmem, size = 0x40000, scoped, tag = 'input window, operand 15, single buffered']
    %26 = vsyncpa [#allocation4], 0
    %27 = vsyncpa [#allocation6], 0
    // Predicated region
    $region2: #{bert_punctuator_forward.1} parent=1 // pred_check
      _
    $region3: #{bert_punctuator_forward.1} parent=1 // pred_check_branch
      %29 = sbr.rel (0) target = $region5
    $region4: #{bert_punctuator_forward.1} parent=1 // pred_region
      _
    $region5: #{bert_punctuator_forward.1} parent=1 // pred_fallthru
      _
    // Predicated region
    $region6: #{bert_punctuator_forward.1} parent=1 // pred_check
      _
    $region7: #{bert_punctuator_forward.1} parent=1 // pred_check_branch
      %31 = sbr.rel (0) target = $region9
    $region8: #{bert_punctuator_forward.1} parent=1 // pred_region
      _
    $region9: #{bert_punctuator_forward.1} parent=1 // pred_fallthru
      _
    // Predicated region
    $region10: #{bert_punctuator_forward.1} parent=1 // pred_check
      _
    $region11: #{bert_punctuator_forward.1} parent=1 // pred_check_branch
      %33 = sbr.rel (0) target = $region13
    $region12: #{bert_punctuator_forward.1} parent=1 // pred_region
      _
    $region13: #{bert_punctuator_forward.1} parent=1 // pred_fallthru
      _
    // Predicated region
    $region14: #{bert_punctuator_forward.1} parent=1 // pred_check
      _
    $region15: #{bert_punctuator_forward.1} parent=1 // pred_check_branch
      %35 = sbr.rel (0) target = $region17
    $region16: #{bert_punctuator_forward.1} parent=1 // pred_region
      _
    $region17: #{bert_punctuator_forward.1} parent=1 // pred_fallthru
      _
    // Predicated region
    $region18: #{bert_punctuator_forward.1} parent=1 // pred_check
      _
    $region19: #{bert_punctuator_forward.1} parent=1 // pred_check_branch
      %37 = sbr.rel (0) target = $region21
    $region20: #{bert_punctuator_forward.1} parent=1 // pred_region
      _
    $region21: #{bert_punctuator_forward.1} parent=1 // pred_fallthru
      _
    // Predicated region
    $region22: #{bert_punctuator_forward.1} parent=1 // pred_check
      _
    $region23: #{bert_punctuator_forward.1} parent=1 // pred_check_branch
      %39 = sbr.rel (0) target = $region25
    $region24: #{bert_punctuator_forward.1} parent=1 // pred_region
      _
    $region25: #{bert_punctuator_forward.1} parent=1 // pred_fallthru
      _
    // Predicated region
    $region26: #{bert_punctuator_forward.1} parent=1 // pred_check
      _
    $region27: #{bert_punctuator_forward.1} parent=1 // pred_check_branch
      %41 = sbr.rel (0) target = $region29
    $region28: #{bert_punctuator_forward.1} parent=1 // pred_region
      _
    $region29: #{bert_punctuator_forward.1} parent=1 // pred_fallthru
      _
    // Predicated region
    $region30: #{bert_punctuator_forward.1} parent=1 // pred_check
      _
    $region31: #{bert_punctuator_forward.1} parent=1 // pred_check_branch
      %43 = sbr.rel (0) target = $region33
    $region32: #{bert_punctuator_forward.1} parent=1 // pred_region
      %45 = vsyncadd [#allocation4], 0
      %s46 = sshll.u32 %s7, 4
      %s47 = int_to_ptr.hbm [resolvable:$true] %s46
      %s48 = sshll.u32 [#allocation3], 4
      %s49 = int_to_ptr.vmem [resolvable:$true] %s48
      %54 = dma.hbm_to_vmem [thread:$0]  %s47, 6144, %s49, [#allocation4], 192, 192, 12
    $region33: #{bert_punctuator_forward.1} parent=1 // pred_fallthru
      _
    // Predicated region
    $region34: #{bert_punctuator_forward.1} parent=1 // pred_check
      _
    $region35: #{bert_punctuator_forward.1} parent=1 // pred_check_branch
      %56 = sbr.rel (0) target = $region37
    $region36: #{bert_punctuator_forward.1} parent=1 // pred_region
      _
    $region37: #{bert_punctuator_forward.1} parent=1 // pred_fallthru
      _
    // Predicated region
    $region38: #{bert_punctuator_forward.1} parent=1 // pred_check
      _
    $region39: #{bert_punctuator_forward.1} parent=1 // pred_check_branch
      %58 = sbr.rel (0) target = $region41
    $region40: #{bert_punctuator_forward.1} parent=1 // pred_region
      _
    $region41: #{bert_punctuator_forward.1} parent=1 // pred_fallthru
      _
    // Predicated region
    $region42: #{bert_punctuator_forward.1} parent=1 // pred_check
      _
    $region43: #{bert_punctuator_forward.1} parent=1 // pred_check_branch
      %60 = sbr.rel (0) target = $region45
    $region44: #{bert_punctuator_forward.1} parent=1 // pred_region
      _
    $region45: #{bert_punctuator_forward.1} parent=1 // pred_fallthru
      _
    // Predicated region
    $region46: #{bert_punctuator_forward.1} parent=1 // pred_check
      _
    $region47: #{bert_punctuator_forward.1} parent=1 // pred_check_branch
      %62 = sbr.rel (0) target = $region49
    $region48: #{bert_punctuator_forward.1} parent=1 // pred_region
      _
    $region49: #{bert_punctuator_forward.1} parent=1 // pred_fallthru
      _
    // Predicated region
    $region50: #{bert_punctuator_forward.1} parent=1 // pred_check
      _
    $region51: #{bert_punctuator_forward.1} parent=1 // pred_check_branch
      %64 = sbr.rel (0) target = $region53
    $region52: #{bert_punctuator_forward.1} parent=1 // pred_region
      _
    $region53: #{bert_punctuator_forward.1} parent=1 // pred_fallthru
      _
    // Predicated region
    $region54: #{bert_punctuator_forward.1} parent=1 // pred_check
      _
    $region55: #{bert_punctuator_forward.1} parent=1 // pred_check_branch
      %66 = sbr.rel (0) target = $region57
    $region56: #{bert_punctuator_forward.1} parent=1 // pred_region
      %68 = vsyncadd [#allocation6], 0
      %s69 = sshll.u32 %s13, 4
      %s70 = int_to_ptr.hbm [resolvable:$true] %s69
      %s71 = sshll.u32 [#allocation5], 4
      %s72 = int_to_ptr.vmem [resolvable:$true] %s71
      %77 = dma.hbm_to_vmem [thread:$0]  %s70, 8192, %s72, [#allocation6], 256, 256, 16
    $region57: #{bert_punctuator_forward.1} parent=1 // pred_fallthru
      _
    // Predicated region
    $region58: #{bert_punctuator_forward.1} parent=1 // pred_check
      _
    $region59: #{bert_punctuator_forward.1} parent=1 // pred_check_branch
      %79 = sbr.rel (0) target = $region61
    $region60: #{bert_punctuator_forward.1} parent=1 // pred_region
      _
    $region61: #{bert_punctuator_forward.1} parent=1 // pred_fallthru
      _
    // Predicated region
    $region62: #{bert_punctuator_forward.1} parent=1 // pred_check
      _
    $region63: #{bert_punctuator_forward.1} parent=1 // pred_check_branch
      %81 = sbr.rel (0) target = $region65
    $region64: #{bert_punctuator_forward.1} parent=1 // pred_region
      %83 = vsyncadd [#allocation6], 0
      %s84 = sshll.u32 %s15, 4
      %s85 = int_to_ptr.hbm [resolvable:$true] %s84
      %s86 = sshll.u32 [#allocation7], 4
      %s87 = int_to_ptr.vmem [resolvable:$true] %s86
      %92 = dma.hbm_to_vmem [thread:$0]  %s85, 8192, %s87, [#allocation6], 64, 64, 4
    $region65: #{bert_punctuator_forward.1} parent=1 // pred_fallthru
      _
    // Predicated region
    $region66: #{bert_punctuator_forward.1} parent=1 // pred_check
      _
    $region67: #{bert_punctuator_forward.1} parent=1 // pred_check_branch
      %94 = sbr.rel (0) target = $region69
    $region68: #{bert_punctuator_forward.1} parent=1 // pred_region
      _
    $region69: #{bert_punctuator_forward.1} parent=1 // pred_fallthru
      _
    // Predicated region
    $region70: #{bert_punctuator_forward.1} parent=1 // pred_check
      _
    $region71: #{bert_punctuator_forward.1} parent=1 // pred_check_branch
      %96 = sbr.rel (0) target = $region73
    $region72: #{bert_punctuator_forward.1} parent=1 // pred_region
      _
    $region73: #{bert_punctuator_forward.1} parent=1 // pred_fallthru
      _
    // Predicated region
    $region74: #{bert_punctuator_forward.1} parent=1 // pred_check
      _
    $region75: #{bert_punctuator_forward.1} parent=1 // pred_check_branch
      %98 = sbr.rel (0) target = $region77
    $region76: #{bert_punctuator_forward.1} parent=1 // pred_region
      _
    $region77: #{bert_punctuator_forward.1} parent=1 // pred_fallthru
      _
    // Predicated region
    $region78: #{bert_punctuator_forward.1} parent=1 // pred_check
      _
    $region79: #{bert_punctuator_forward.1} parent=1 // pred_check_branch
      %100 = sbr.rel (0) target = $region81
    $region80: #{bert_punctuator_forward.1} parent=1 // pred_region
      _
    $region81: #{bert_punctuator_forward.1} parent=1 // pred_fallthru
      _
    // Predicated region
    $region82: #{bert_punctuator_forward.1} parent=1 // pred_check
      _
    $region83: #{bert_punctuator_forward.1} parent=1 // pred_check_branch
      %102 = sbr.rel (0) target = $region85
    $region84: #{bert_punctuator_forward.1} parent=1 // pred_region
      _
    $region85: #{bert_punctuator_forward.1} parent=1 // pred_fallthru
      _
    // Predicated region
    $region86: #{bert_punctuator_forward.1} parent=1 // pred_check
      _
    $region87: #{bert_punctuator_forward.1} parent=1 // pred_check_branch
      %104 = sbr.rel (0) target = $region89
    $region88: #{bert_punctuator_forward.1} parent=1 // pred_region
      %106 = dma.done [#allocation4], 6144
    $region89: #{bert_punctuator_forward.1} parent=1 // pred_fallthru
      _
    // Predicated region
    $region90: #{bert_punctuator_forward.1} parent=1 // pred_check
      _
    $region91: #{bert_punctuator_forward.1} parent=1 // pred_check_branch
      %108 = sbr.rel (0) target = $region93
    $region92: #{bert_punctuator_forward.1} parent=1 // pred_region
      %110 = dma.done [#allocation6], 8192
    $region93: #{bert_punctuator_forward.1} parent=1 // pred_fallthru
      _
    // Predicated region
    $region94: #{bert_punctuator_forward.1} parent=1 // pred_check
      _
    $region95: #{bert_punctuator_forward.1} parent=1 // pred_check_branch
      %112 = sbr.rel (0) target = $region97
    $region96: #{bert_punctuator_forward.1} parent=1 // pred_region
      %114 = dma.done [#allocation6], 8192
    $region97: #{bert_punctuator_forward.1} parent=1 // pred_fallthru
      _
    %v115 = vld [vmem:[%s0] sm:$0xff]
    %v116 = vld [vmem:[%s0 + $0x8] sm:$0xff]
    %v117 = vld [vmem:[%s0 + $0x10] sm:$0xff]
    %v118 = vld [vmem:[%s0 + $0x18] sm:$0xff]
    %v119 = vld [vmem:[%s0 + $0x20] sm:$0xff]
    %v120 = vld [vmem:[%s0 + $0x28] sm:$0xff]
    %v121 = vld [vmem:[%s0 + $0x30] sm:$0xff]
    %v122 = vld [vmem:[%s0 + $0x38] sm:$0xff]
    %v123 = vlaneseq
    %v124 = vand.u32 %v123, 127
    %125 = vset.pattern.permute.xlu0 0
    %126 = vperm.xlu0 %125, %v115
    %v127 = vpop.permute.xlu0 %126
    %128 = vset.pattern.permute.xlu0 0
    %129 = vperm.xlu0 %128, %v116
    %v130 = vpop.permute.xlu0 %129
    %131 = vset.pattern.permute.xlu0 0
    %132 = vperm.xlu0 %131, %v117
    %v133 = vpop.permute.xlu0 %132
    %134 = vset.pattern.permute.xlu0 0
    %135 = vperm.xlu0 %134, %v118
    %v136 = vpop.permute.xlu0 %135
    %137 = vset.pattern.permute.xlu0 0
    %138 = vperm.xlu0 %137, %v119
    %v139 = vpop.permute.xlu0 %138
    %140 = vset.pattern.permute.xlu0 0
    %141 = vperm.xlu0 %140, %v120
    %v142 = vpop.permute.xlu0 %141
    %143 = vset.pattern.permute.xlu0 0
    %144 = vperm.xlu0 %143, %v121
    %v145 = vpop.permute.xlu0 %144
    %146 = vset.pattern.permute.xlu0 0
    %147 = vperm.xlu0 %146, %v122
    %v148 = vpop.permute.xlu0 %147
    %vm149 = vcmp.eq.s32.totalorder %v124, %v127
    %vm150 = vcmp.eq.s32.totalorder %v124, %v130
    %vm151 = vcmp.eq.s32.totalorder %v124, %v133
    %vm152 = vcmp.eq.s32.totalorder %v124, %v136
    %vm153 = vcmp.eq.s32.totalorder %v124, %v139
    %vm154 = vcmp.eq.s32.totalorder %v124, %v142
    %vm155 = vcmp.eq.s32.totalorder %v124, %v145
    %vm156 = vcmp.eq.s32.totalorder %v124, %v148
    %v157 = vsel %vm149, 1, 0
    %v158 = vsel %vm150, 1, 0
    %v159 = vsel %vm151, 1, 0
    %v160 = vsel %vm152, 1, 0
    %v161 = vsel %vm153, 1, 0
    %v162 = vsel %vm154, 1, 0
    %v163 = vsel %vm155, 1, 0
    %v164 = vsel %vm156, 1, 0
    %v165 = vcvt.s32.f32 %v157
    %v166 = vcvt.s32.f32 %v158
    %v167 = vcvt.s32.f32 %v159
    %v168 = vcvt.s32.f32 %v160
    %v169 = vcvt.s32.f32 %v161
    %v170 = vcvt.s32.f32 %v162
    %v171 = vcvt.s32.f32 %v163
    %v172 = vcvt.s32.f32 %v164
    %v173 = vpack.c.bf16 %v166, %v165
    %v174 = vpack.c.bf16 %v168, %v167
    %v175 = vpack.c.bf16 %v170, %v169
    %v176 = vpack.c.bf16 %v172, %v171
    %v177 = vld [vmem:[%s2] sm:$0xf]
    %v178 = vld [vmem:[%s2 + $0x4] sm:$0xf]
    %v179 = vld [vmem:[%s2 + $0x8] sm:$0xf]
    %v180 = vld [vmem:[%s2 + $0xc] sm:$0xf]
    %v181 = vld [vmem:[%s2 + $0x10] sm:$0xf]
    %v182 = vld [vmem:[%s2 + $0x14] sm:$0xf]
    %v183 = vld [vmem:[%s2 + $0x18] sm:$0xf]
    %v184 = vld [vmem:[%s2 + $0x1c] sm:$0xf]
    %v185 = vld [vmem:[%s2 + $0x20] sm:$0xf]
    %v186 = vld [vmem:[%s2 + $0x24] sm:$0xf]
    %v187 = vld [vmem:[%s2 + $0x28] sm:$0xf]
    %v188 = vld [vmem:[%s2 + $0x2c] sm:$0xf]
    %v189 = vld [vmem:[%s2 + $0x30] sm:$0xf]
    %v190 = vld [vmem:[%s2 + $0x34] sm:$0xf]
    %v191 = vld [vmem:[%s2 + $0x38] sm:$0xf]
    %v192 = vld [vmem:[%s2 + $0x3c] sm:$0xf]
    %v193 = vld [vmem:[%s3] sm:$0xff]
    %v194 = vld [vmem:[%s3 + $0x8] sm:$0xff]
    %v195 = vld [vmem:[%s3 + $0x10] sm:$0xff]
    %v196 = vld [vmem:[%s3 + $0x18] sm:$0xff]
    %v197 = vld [vmem:[%s3 + $0x20] sm:$0xff]
    %v198 = vld [vmem:[%s3 + $0x28] sm:$0xff]
    %v199 = vld [vmem:[%s3 + $0x30] sm:$0xff]
    %v200 = vld [vmem:[%s3 + $0x38] sm:$0xff]
    %v217 = vunpack.c.l.b16 %v177
    %v218 = vunpack.c.l.b16 %v178
    %v219 = vunpack.c.l.b16 %v179
    %v220 = vunpack.c.l.b16 %v180
    %v221 = vunpack.c.l.b16 %v181
    %v222 = vunpack.c.l.b16 %v182
    %v223 = vunpack.c.l.b16 %v183
    %v224 = vunpack.c.l.b16 %v184
    %v225 = vunpack.c.l.b16 %v185
    %v226 = vunpack.c.l.b16 %v186
    %v227 = vunpack.c.l.b16 %v187
    %v228 = vunpack.c.l.b16 %v188
    %v229 = vunpack.c.l.b16 %v189
    %v230 = vunpack.c.l.b16 %v190
    %v231 = vunpack.c.l.b16 %v191
    %v232 = vunpack.c.l.b16 %v192
    %v233 = vpack.c.b16 %v218, %v217
    %v234 = vpack.c.b16 %v220, %v219
    %v235 = vpack.c.b16 %v222, %v221
    %v236 = vpack.c.b16 %v224, %v223
    %v237 = vpack.c.b16 %v226, %v225
    %v238 = vpack.c.b16 %v228, %v227
    %v239 = vpack.c.b16 %v230, %v229
    %v240 = vpack.c.b16 %v232, %v231
    %249 = vmatpush.bf16.msra.mxu0 %v240
    %250 = vmatpush.bf16.msra.mxu0 %v239
    %251 = vmatpush.bf16.msra.mxu0 %v238
    %252 = vmatpush.bf16.msra.mxu0 %v237
    %253 = vmatpush.bf16.msra.mxu0 %v236
    %254 = vmatpush.bf16.msra.mxu0 %v235
    %255 = vmatpush.bf16.msra.mxu0 %v234
    %256 = vmatpush.bf16.msra.mxu0 %v233
    %257 = vmatmul.bf16.gmra.mxu0 %v173
    %v258 = vpop.f32.mrf.mxu0
    %v259 = vadd.f32 %v193, %v258
    %v260 = vpop.f32.mrf.mxu0
    %v261 = vadd.f32 %v194, %v260
    %262 = vmatmul.bf16.gmra.mxu0 %v174
    %v263 = vpop.f32.mrf.mxu0
    %v264 = vadd.f32 %v195, %v263
    %v265 = vpop.f32.mrf.mxu0
    %v266 = vadd.f32 %v196, %v265
    %267 = vmatmul.bf16.gmra.mxu0 %v175
    %v268 = vpop.f32.mrf.mxu0
    %v269 = vadd.f32 %v197, %v268
    %v270 = vpop.f32.mrf.mxu0
    %v271 = vadd.f32 %v198, %v270
    %272 = vmatmul.bf16.gmra.mxu0 %v176
    %v273 = vpop.f32.mrf.mxu0
    %v274 = vadd.f32 %v199, %v273
    %v275 = vpop.f32.mrf.mxu0
    %v276 = vadd.f32 %v200, %v275
    %277 = vdwg.mxu0
    %v278 = vld [vmem:[%s4] sm:$0x1]
    %v280 = vperm.slane %v278, 0
    %v282 = vadd.f32 %v259, %v280
    %v283 = vadd.f32 %v261, %v280
    %v284 = vadd.f32 %v264, %v280
    %v285 = vadd.f32 %v266, %v280
    %v286 = vadd.f32 %v269, %v280
    %v287 = vadd.f32 %v271, %v280
    %v288 = vadd.f32 %v274, %v280
    %v289 = vadd.f32 %v276, %v280
    %v290 = vld [vmem:[%s5] sm:$0x1]
    %v291 = vld [vmem:[%s6] sm:$0x1]
    %292 = vadd.xlane.f32.xlu0 %v282
    %v293 = vpop.xlane.xlu0 %292
    %294 = vadd.xlane.f32.xlu0 %v283
    %v295 = vpop.xlane.xlu0 %294
    %296 = vadd.xlane.f32.xlu0 %v284
    %v297 = vpop.xlane.xlu0 %296
    %298 = vadd.xlane.f32.xlu0 %v285
    %v299 = vpop.xlane.xlu0 %298
    %300 = vadd.xlane.f32.xlu0 %v286
    %v301 = vpop.xlane.xlu0 %300
    %302 = vadd.xlane.f32.xlu0 %v287
    %v303 = vpop.xlane.xlu0 %302
    %304 = vadd.xlane.f32.xlu0 %v288
    %v305 = vpop.xlane.xlu0 %304
    %306 = vadd.xlane.f32.xlu0 %v289
    %v307 = vpop.xlane.xlu0 %306
    %v308 = vrcp.pop 128.0
    %v309 = vmul.f32 128.0, %v308
    %v310 = vsub.f32 1.0, %v309
    %v311 = vmul.f32 %v308, %v310
    %v312 = vadd.f32 %v308, %v311
    %vm313 = vweird.f32 %v308
    %v314 = vsel %vm313, %v308, %v312
    %v315 = vmul.f32 %v293, %v314
    %v316 = vmul.f32 %v295, %v314
    %v317 = vmul.f32 %v297, %v314
    %v318 = vmul.f32 %v299, %v314
    %v319 = vmul.f32 %v301, %v314
    %v320 = vmul.f32 %v303, %v314
    %v321 = vmul.f32 %v305, %v314
    %v322 = vmul.f32 %v307, %v314
    %v323 = vsub.f32 %v282, %v315
    %v324 = vsub.f32 %v283, %v316
    %v325 = vsub.f32 %v284, %v317
    %v326 = vsub.f32 %v285, %v318
    %v327 = vsub.f32 %v286, %v319
    %v328 = vsub.f32 %v287, %v320
    %v329 = vsub.f32 %v288, %v321
    %v330 = vsub.f32 %v289, %v322
    %v331 = vmul.f32 %v323, %v323
    %v332 = vmul.f32 %v324, %v324
    %v333 = vmul.f32 %v325, %v325
    %v334 = vmul.f32 %v326, %v326
    %v335 = vmul.f32 %v327, %v327
    %v336 = vmul.f32 %v328, %v328
    %v337 = vmul.f32 %v329, %v329
    %v338 = vmul.f32 %v330, %v330
    %339 = vadd.xlane.f32.xlu0 %v331
    %v340 = vpop.xlane.xlu0 %339
    %341 = vadd.xlane.f32.xlu0 %v332
    %v342 = vpop.xlane.xlu0 %341
    %343 = vadd.xlane.f32.xlu0 %v333
    %v344 = vpop.xlane.xlu0 %343
    %345 = vadd.xlane.f32.xlu0 %v334
    %v346 = vpop.xlane.xlu0 %345
    %347 = vadd.xlane.f32.xlu0 %v335
    %v348 = vpop.xlane.xlu0 %347
    %349 = vadd.xlane.f32.xlu0 %v336
    %v350 = vpop.xlane.xlu0 %349
    %351 = vadd.xlane.f32.xlu0 %v337
    %v352 = vpop.xlane.xlu0 %351
    %353 = vadd.xlane.f32.xlu0 %v338
    %v354 = vpop.xlane.xlu0 %353
    %v355 = vmul.f32 %v340, %v314
    %v356 = vmul.f32 %v342, %v314
    %v357 = vmul.f32 %v344, %v314
    %v358 = vmul.f32 %v346, %v314
    %v359 = vmul.f32 %v348, %v314
    %v360 = vmul.f32 %v350, %v314
    %v361 = vmul.f32 %v352, %v314
    %v362 = vmul.f32 %v354, %v314
    %v363 = vadd.f32 %v355, 1e-12
    %v364 = vadd.f32 %v356, 1e-12
    %v365 = vadd.f32 %v357, 1e-12
    %v366 = vadd.f32 %v358, 1e-12
    %v367 = vadd.f32 %v359, 1e-12
    %v368 = vadd.f32 %v360, 1e-12
    %v369 = vadd.f32 %v361, 1e-12
    %v370 = vadd.f32 %v362, 1e-12
    %v371 = vrsqrt.pop %v363
    %v372 = vmul.f32 %v371, %v363
    %v373 = vmul.f32 %v372, %v371
    %v374 = vmul.f32 0.5, %v373
    %v375 = vsub.f32 1.5, %v374
    %v376 = vmul.f32 %v371, %v375
    %vm377 = vweird.f32 %v363
    %vm378 = vweird.f32 %v371
    %vm379 = vmor %vm377, %vm378
    %v380 = vsel %vm379, %v371, %v376
    %v381 = vrsqrt.pop %v364
    %v382 = vmul.f32 %v381, %v364
    %v383 = vmul.f32 %v382, %v381
    %v384 = vmul.f32 0.5, %v383
    %v385 = vsub.f32 1.5, %v384
    %v386 = vmul.f32 %v381, %v385
    %vm387 = vweird.f32 %v364
    %vm388 = vweird.f32 %v381
    %vm389 = vmor %vm387, %vm388
    %v390 = vsel %vm389, %v381, %v386
    %v391 = vrsqrt.pop %v365
    %v392 = vmul.f32 %v391, %v365
    %v393 = vmul.f32 %v392, %v391
    %v394 = vmul.f32 0.5, %v393
    %v395 = vsub.f32 1.5, %v394
    %v396 = vmul.f32 %v391, %v395
    %vm397 = vweird.f32 %v365
    %vm398 = vweird.f32 %v391
    %vm399 = vmor %vm397, %vm398
    %v400 = vsel %vm399, %v391, %v396
    %v401 = vrsqrt.pop %v366
    %v402 = vmul.f32 %v401, %v366
    %v403 = vmul.f32 %v402, %v401
    %v404 = vmul.f32 0.5, %v403
    %v405 = vsub.f32 1.5, %v404
    %v406 = vmul.f32 %v401, %v405
    %vm407 = vweird.f32 %v366
    %vm408 = vweird.f32 %v401
    %vm409 = vmor %vm407, %vm408
    %v410 = vsel %vm409, %v401, %v406
    %v411 = vrsqrt.pop %v367
    %v412 = vmul.f32 %v411, %v367
    %v413 = vmul.f32 %v412, %v411
    %v414 = vmul.f32 0.5, %v413
    %v415 = vsub.f32 1.5, %v414
    %v416 = vmul.f32 %v411, %v415
    %vm417 = vweird.f32 %v367
    %vm418 = vweird.f32 %v411
    %vm419 = vmor %vm417, %vm418
    %v420 = vsel %vm419, %v411, %v416
    %v421 = vrsqrt.pop %v368
    %v422 = vmul.f32 %v421, %v368
    %v423 = vmul.f32 %v422, %v421
    %v424 = vmul.f32 0.5, %v423
    %v425 = vsub.f32 1.5, %v424
    %v426 = vmul.f32 %v421, %v425
    %vm427 = vweird.f32 %v368
    %vm428 = vweird.f32 %v421
    %vm429 = vmor %vm427, %vm428
    %v430 = vsel %vm429, %v421, %v426
    %v431 = vrsqrt.pop %v369
    %v432 = vmul.f32 %v431, %v369
    %v433 = vmul.f32 %v432, %v431
    %v434 = vmul.f32 0.5, %v433
    %v435 = vsub.f32 1.5, %v434
    %v436 = vmul.f32 %v431, %v435
    %vm437 = vweird.f32 %v369
    %vm438 = vweird.f32 %v431
    %vm439 = vmor %vm437, %vm438
    %v440 = vsel %vm439, %v431, %v436
    %v441 = vrsqrt.pop %v370
    %v442 = vmul.f32 %v441, %v370
    %v443 = vmul.f32 %v442, %v441
    %v444 = vmul.f32 0.5, %v443
    %v445 = vsub.f32 1.5, %v444
    %v446 = vmul.f32 %v441, %v445
    %vm447 = vweird.f32 %v370
    %vm448 = vweird.f32 %v441
    %vm449 = vmor %vm447, %vm448
    %v450 = vsel %vm449, %v441, %v446
    %v451 = vmul.f32 %v323, %v380
    %v452 = vmul.f32 %v324, %v390
    %v453 = vmul.f32 %v325, %v400
    %v454 = vmul.f32 %v326, %v410
    %v455 = vmul.f32 %v327, %v420
    %v456 = vmul.f32 %v328, %v430
    %v457 = vmul.f32 %v329, %v440
    %v458 = vmul.f32 %v330, %v450
    %v460 = vperm.slane %v290, 0
    %v462 = vmul.f32 %v451, %v460
    %v463 = vmul.f32 %v452, %v460
    %v464 = vmul.f32 %v453, %v460
    %v465 = vmul.f32 %v454, %v460
    %v466 = vmul.f32 %v455, %v460
    %v467 = vmul.f32 %v456, %v460
    %v468 = vmul.f32 %v457, %v460
    %v469 = vmul.f32 %v458, %v460
    %v471 = vperm.slane %v291, 0
    %v473 = vadd.f32 %v462, %v471
    %v474 = vadd.f32 %v463, %v471
    %v475 = vadd.f32 %v464, %v471
    %v476 = vadd.f32 %v465, %v471
    %v477 = vadd.f32 %v466, %v471
    %v478 = vadd.f32 %v467, %v471
    %v479 = vadd.f32 %v468, %v471
    %v480 = vadd.f32 %v469, %v471
    %v481 = vld [vmem:[%s1] sm:$0xff]
    %v482 = vld [vmem:[%s1 + $0x8] sm:$0xff]
    %v483 = vld [vmem:[%s1 + $0x10] sm:$0xff]
    %v484 = vld [vmem:[%s1 + $0x18] sm:$0xff]
    %v485 = vld [vmem:[%s1 + $0x20] sm:$0xff]
    %v486 = vld [vmem:[%s1 + $0x28] sm:$0xff]
    %v487 = vld [vmem:[%s1 + $0x30] sm:$0xff]
    %v488 = vld [vmem:[%s1 + $0x38] sm:$0xff]
    %v489 = vpack.c.bf16 %v474, %v473
    %v490 = vpack.c.bf16 %v476, %v475
    %v491 = vpack.c.bf16 %v478, %v477
    %v492 = vpack.c.bf16 %v480, %v479
    %v493 = vld [vmem:[#allocation3] sm:$0xff]
    %v494 = vld [vmem:[#allocation3 + $0x8] sm:$0xf]
    %v495 = vld [vmem:[#allocation3 + $0xc] sm:$0xff]
    %v496 = vld [vmem:[#allocation3 + $0x14] sm:$0xf]
    %v497 = vld [vmem:[#allocation3 + $0x18] sm:$0xff]
    %v498 = vld [vmem:[#allocation3 + $0x20] sm:$0xf]
    %v499 = vld [vmem:[#allocation3 + $0x24] sm:$0xff]
    %v500 = vld [vmem:[#allocation3 + $0x2c] sm:$0xf]
    %v501 = vld [vmem:[#allocation3 + $0x30] sm:$0xff]
    %v502 = vld [vmem:[#allocation3 + $0x38] sm:$0xf]
    %v503 = vld [vmem:[#allocation3 + $0x3c] sm:$0xff]
    %v504 = vld [vmem:[#allocation3 + $0x44] sm:$0xf]
    %v505 = vld [vmem:[#allocation3 + $0x48] sm:$0xff]
    %v506 = vld [vmem:[#allocation3 + $0x50] sm:$0xf]
    %v507 = vld [vmem:[#allocation3 + $0x54] sm:$0xff]
    %v508 = vld [vmem:[#allocation3 + $0x5c] sm:$0xf]
    %v509 = vld [vmem:[#allocation3 + $0x60] sm:$0xff]
    %v510 = vld [vmem:[#allocation3 + $0x68] sm:$0xf]
    %v511 = vld [vmem:[#allocation3 + $0x6c] sm:$0xff]
    %v512 = vld [vmem:[#allocation3 + $0x74] sm:$0xf]
    %v513 = vld [vmem:[#allocation3 + $0x78] sm:$0xff]
    %v514 = vld [vmem:[#allocation3 + $0x80] sm:$0xf]
    %v515 = vld [vmem:[#allocation3 + $0x84] sm:$0xff]
    %v516 = vld [vmem:[#allocation3 + $0x8c] sm:$0xf]
    %v517 = vld [vmem:[#allocation3 + $0x90] sm:$0xff]
    %v518 = vld [vmem:[#allocation3 + $0x98] sm:$0xf]
    %v519 = vld [vmem:[#allocation3 + $0x9c] sm:$0xff]
    %v520 = vld [vmem:[#allocation3 + $0xa4] sm:$0xf]
    %v521 = vld [vmem:[#allocation3 + $0xa8] sm:$0xff]
    %v522 = vld [vmem:[#allocation3 + $0xb0] sm:$0xf]
    %v523 = vld [vmem:[#allocation3 + $0xb4] sm:$0xff]
    %v524 = vld [vmem:[#allocation3 + $0xbc] sm:$0xf]
    %v525 = vld [vmem:[%s8] sm:$0x7]
    %v527 = vperm.slane %v525, 0
    %v528 = vperm.slane %v525, 1
    %v529 = vperm.slane %v525, 2
    %v565 = vunpack.c.l.b16 %v493
    %v566 = vunpack.c.h.b16 %v493
    %v567 = vunpack.c.l.b16 %v494
    %v568 = vunpack.c.l.b16 %v495
    %v569 = vunpack.c.h.b16 %v495
    %v570 = vunpack.c.l.b16 %v496
    %v571 = vunpack.c.l.b16 %v497
    %v572 = vunpack.c.h.b16 %v497
    %v573 = vunpack.c.l.b16 %v498
    %v574 = vunpack.c.l.b16 %v499
    %v575 = vunpack.c.h.b16 %v499
    %v576 = vunpack.c.l.b16 %v500
    %v577 = vunpack.c.l.b16 %v501
    %v578 = vunpack.c.h.b16 %v501
    %v579 = vunpack.c.l.b16 %v502
    %v580 = vunpack.c.l.b16 %v503
    %v581 = vunpack.c.h.b16 %v503
    %v582 = vunpack.c.l.b16 %v504
    %v583 = vunpack.c.l.b16 %v505
    %v584 = vunpack.c.h.b16 %v505
    %v585 = vunpack.c.l.b16 %v506
    %v586 = vunpack.c.l.b16 %v507
    %v587 = vunpack.c.h.b16 %v507
    %v588 = vunpack.c.l.b16 %v508
    %v589 = vunpack.c.l.b16 %v509
    %v590 = vunpack.c.h.b16 %v509
    %v591 = vunpack.c.l.b16 %v510
    %v592 = vunpack.c.l.b16 %v511
    %v593 = vunpack.c.h.b16 %v511
    %v594 = vunpack.c.l.b16 %v512
    %v595 = vunpack.c.l.b16 %v513
    %v596 = vunpack.c.h.b16 %v513
    %v597 = vunpack.c.l.b16 %v514
    %v598 = vunpack.c.l.b16 %v515
    %v599 = vunpack.c.h.b16 %v515
    %v600 = vunpack.c.l.b16 %v516
    %v601 = vunpack.c.l.b16 %v517
    %v602 = vunpack.c.h.b16 %v517
    %v603 = vunpack.c.l.b16 %v518
    %v604 = vunpack.c.l.b16 %v519
    %v605 = vunpack.c.h.b16 %v519
    %v606 = vunpack.c.l.b16 %v520
    %v607 = vunpack.c.l.b16 %v521
    %v608 = vunpack.c.h.b16 %v521
    %v609 = vunpack.c.l.b16 %v522
    %v610 = vunpack.c.l.b16 %v523
    %v611 = vunpack.c.h.b16 %v523
    %v612 = vunpack.c.l.b16 %v524
    %v613 = vpack.c.b16 %v568, %v565
    %v614 = vpack.c.b16 %v569, %v566
    %v615 = vpack.c.b16 %v570, %v567
    %v616 = vpack.c.b16 %v574, %v571
    %v617 = vpack.c.b16 %v575, %v572
    %v618 = vpack.c.b16 %v576, %v573
    %v619 = vpack.c.b16 %v580, %v577
    %v620 = vpack.c.b16 %v581, %v578
    %v621 = vpack.c.b16 %v582, %v579
    %v622 = vpack.c.b16 %v586, %v583
    %v623 = vpack.c.b16 %v587, %v584
    %v624 = vpack.c.b16 %v588, %v585
    %v625 = vpack.c.b16 %v592, %v589
    %v626 = vpack.c.b16 %v593, %v590
    %v627 = vpack.c.b16 %v594, %v591
    %v628 = vpack.c.b16 %v598, %v595
    %v629 = vpack.c.b16 %v599, %v596
    %v630 = vpack.c.b16 %v600, %v597
    %v631 = vpack.c.b16 %v604, %v601
    %v632 = vpack.c.b16 %v605, %v602
    %v633 = vpack.c.b16 %v606, %v603
    %v634 = vpack.c.b16 %v610, %v607
    %v635 = vpack.c.b16 %v611, %v608
    %v636 = vpack.c.b16 %v612, %v609
    %661 = vmatpush.bf16.msra.mxu0 %v634
    %662 = vmatpush.bf16.msra.mxu0 %v631
    %663 = vmatpush.bf16.msra.mxu0 %v628
    %664 = vmatpush.bf16.msra.mxu0 %v625
    %665 = vmatpush.bf16.msra.mxu0 %v622
    %666 = vmatpush.bf16.msra.mxu0 %v619
    %667 = vmatpush.bf16.msra.mxu0 %v616
    %668 = vmatpush.bf16.msra.mxu0 %v613
    %669 = vmatmul.bf16.gmra.mxu0 %v489
    %v670 = vpop.f32.mrf.mxu0
    %v671 = vadd.f32 %v527, %v670
    %v672 = vpop.f32.mrf.mxu0
    %v673 = vadd.f32 %v527, %v672
    %674 = vmatmul.bf16.gmra.mxu0 %v490
    %v675 = vpop.f32.mrf.mxu0
    %v676 = vadd.f32 %v527, %v675
    %v677 = vpop.f32.mrf.mxu0
    %v678 = vadd.f32 %v527, %v677
    %679 = vmatmul.bf16.gmra.mxu0 %v491
    %v680 = vpop.f32.mrf.mxu0
    %v681 = vadd.f32 %v527, %v680
    %v682 = vpop.f32.mrf.mxu0
    %v683 = vadd.f32 %v527, %v682
    %684 = vmatmul.bf16.gmra.mxu0 %v492
    %v685 = vpop.f32.mrf.mxu0
    %v686 = vadd.f32 %v527, %v685
    %v687 = vpop.f32.mrf.mxu0
    %v688 = vadd.f32 %v527, %v687
    %689 = vdwg.mxu0
    %690 = vmatpush.bf16.msra.mxu0 %v635
    %691 = vmatpush.bf16.msra.mxu0 %v632
    %692 = vmatpush.bf16.msra.mxu0 %v629
    %693 = vmatpush.bf16.msra.mxu0 %v626
    %694 = vmatpush.bf16.msra.mxu0 %v623
    %695 = vmatpush.bf16.msra.mxu0 %v620
    %696 = vmatpush.bf16.msra.mxu0 %v617
    %697 = vmatpush.bf16.msra.mxu0 %v614
    %698 = vmatmul.bf16.gmra.mxu0 %v489
    %v699 = vpop.f32.mrf.mxu0
    %v700 = vadd.f32 %v528, %v699
    %v701 = vpop.f32.mrf.mxu0
    %v702 = vadd.f32 %v528, %v701
    %703 = vmatmul.bf16.gmra.mxu0 %v490
    %v704 = vpop.f32.mrf.mxu0
    %v705 = vadd.f32 %v528, %v704
    %v706 = vpop.f32.mrf.mxu0
    %v707 = vadd.f32 %v528, %v706
    %708 = vmatmul.bf16.gmra.mxu0 %v491
    %v709 = vpop.f32.mrf.mxu0
    %v710 = vadd.f32 %v528, %v709
    %v711 = vpop.f32.mrf.mxu0
    %v712 = vadd.f32 %v528, %v711
    %713 = vmatmul.bf16.gmra.mxu0 %v492
    %v714 = vpop.f32.mrf.mxu0
    %v715 = vadd.f32 %v528, %v714
    %v716 = vpop.f32.mrf.mxu0
    %v717 = vadd.f32 %v528, %v716
    %718 = vdwg.mxu0
    %719 = vmatpush.bf16.msra.mxu0 %v636
    %720 = vmatpush.bf16.msra.mxu0 %v633
    %721 = vmatpush.bf16.msra.mxu0 %v630
    %722 = vmatpush.bf16.msra.mxu0 %v627
    %723 = vmatpush.bf16.msra.mxu0 %v624
    %724 = vmatpush.bf16.msra.mxu0 %v621
    %725 = vmatpush.bf16.msra.mxu0 %v618
    %726 = vmatpush.bf16.msra.mxu0 %v615
    %727 = vmatmul.bf16.gmra.mxu0 %v489
    %v728 = vpop.f32.mrf.mxu0
    %v729 = vadd.f32 %v529, %v728
    %v730 = vpop.f32.mrf.mxu0
    %v731 = vadd.f32 %v529, %v730
    %732 = vmatmul.bf16.gmra.mxu0 %v490
    %v733 = vpop.f32.mrf.mxu0
    %v734 = vadd.f32 %v529, %v733
    %v735 = vpop.f32.mrf.mxu0
    %v736 = vadd.f32 %v529, %v735
    %737 = vmatmul.bf16.gmra.mxu0 %v491
    %v738 = vpop.f32.mrf.mxu0
    %v739 = vadd.f32 %v529, %v738
    %v740 = vpop.f32.mrf.mxu0
    %v741 = vadd.f32 %v529, %v740
    %742 = vmatmul.bf16.gmra.mxu0 %v492
    %v743 = vpop.f32.mrf.mxu0
    %v744 = vadd.f32 %v529, %v743
    %v745 = vpop.f32.mrf.mxu0
    %v746 = vadd.f32 %v529, %v745
    %747 = vdwg.mxu0
    %vm748 = vcmask 523264
    %v750 = vsel %vm748, %v671, 0
    %v753 = vsel %vm748, %v673, 0
    %v756 = vsel %vm748, %v676, 0
    %v759 = vsel %vm748, %v678, 0
    %v762 = vsel %vm748, %v681, 0
    %v765 = vsel %vm748, %v683, 0
    %v768 = vsel %vm748, %v686, 0
    %v771 = vsel %vm748, %v688, 0
    %v774 = vsel %vm748, %v700, 0
    %v777 = vsel %vm748, %v702, 0
    %v780 = vsel %vm748, %v705, 0
    %v783 = vsel %vm748, %v707, 0
    %v786 = vsel %vm748, %v710, 0
    %v789 = vsel %vm748, %v712, 0
    %v792 = vsel %vm748, %v715, 0
    %v795 = vsel %vm748, %v717, 0
    %797 = vmatpush.xpose.msra.mxu0 0.0
    %798 = vmatpush.xpose.msra.mxu0 0.0
    %799 = vmatpush.xpose.msra.mxu0 0.0
    %800 = vmatpush.xpose.msra.mxu0 0.0
    %801 = vmatpush.xpose.msra.mxu0 0.0
    %802 = vmatpush.xpose.msra.mxu0 0.0
    %803 = vmatpush.xpose.msra.mxu0 0.0
    %804 = vmatpush.xpose.msra.mxu0 0.0
    %805 = vmatpush.xpose.msra.mxu0 %v795
    %806 = vmatpush.xpose.msra.mxu0 %v792
    %807 = vmatpush.xpose.msra.mxu0 %v789
    %808 = vmatpush.xpose.msra.mxu0 %v786
    %809 = vmatpush.xpose.msra.mxu0 %v783
    %810 = vmatpush.xpose.msra.mxu0 %v780
    %811 = vmatpush.xpose.msra.mxu0 %v777
    %812 = vmatpush.xpose.msra.mxu0 %v774
    %813 = vmatmul.f32.gmra.mxu0 %v750
    %v814 = vpop.f32.mrf.mxu0
    %v815 = vadd.f32 %v481, %v814
    %816 = vmatmul.f32.gmra.mxu0 %v753
    %v817 = vpop.f32.mrf.mxu0
    %v818 = vadd.f32 %v482, %v817
    %819 = vmatmul.f32.gmra.mxu0 %v756
    %v820 = vpop.f32.mrf.mxu0
    %v821 = vadd.f32 %v483, %v820
    %822 = vmatmul.f32.gmra.mxu0 %v759
    %v823 = vpop.f32.mrf.mxu0
    %v824 = vadd.f32 %v484, %v823
    %825 = vmatmul.f32.gmra.mxu0 %v762
    %v826 = vpop.f32.mrf.mxu0
    %v827 = vadd.f32 %v485, %v826
    %828 = vmatmul.f32.gmra.mxu0 %v765
    %v829 = vpop.f32.mrf.mxu0
    %v830 = vadd.f32 %v486, %v829
    %831 = vmatmul.f32.gmra.mxu0 %v768
    %v832 = vpop.f32.mrf.mxu0
    %v833 = vadd.f32 %v487, %v832
    %834 = vmatmul.f32.gmra.mxu0 %v771
    %v835 = vpop.f32.mrf.mxu0
    %v836 = vadd.f32 %v488, %v835
    %837 = vdwg.mxu0
    %v838 = vsel %vm748, %v815, -inf
    %839 = vmax.xlane.f32.xlu0 %v838
    %v840 = vpop.xlane.xlu0 %839
    %v841 = vsel %vm748, %v818, -inf
    %842 = vmax.xlane.f32.xlu0 %v841
    %v843 = vpop.xlane.xlu0 %842
    %v844 = vsel %vm748, %v821, -inf
    %845 = vmax.xlane.f32.xlu0 %v844
    %v846 = vpop.xlane.xlu0 %845
    %v847 = vsel %vm748, %v824, -inf
    %848 = vmax.xlane.f32.xlu0 %v847
    %v849 = vpop.xlane.xlu0 %848
    %v850 = vsel %vm748, %v827, -inf
    %851 = vmax.xlane.f32.xlu0 %v850
    %v852 = vpop.xlane.xlu0 %851
    %v853 = vsel %vm748, %v830, -inf
    %854 = vmax.xlane.f32.xlu0 %v853
    %v855 = vpop.xlane.xlu0 %854
    %v856 = vsel %vm748, %v833, -inf
    %857 = vmax.xlane.f32.xlu0 %v856
    %v858 = vpop.xlane.xlu0 %857
    %v859 = vsel %vm748, %v836, -inf
    %860 = vmax.xlane.f32.xlu0 %v859
    %v861 = vpop.xlane.xlu0 %860
    %v862 = vsub.f32 %v815, %v840
    %v863 = vsub.f32 %v818, %v843
    %v864 = vsub.f32 %v821, %v846
    %v865 = vsub.f32 %v824, %v849
    %v866 = vsub.f32 %v827, %v852
    %v867 = vsub.f32 %v830, %v855
    %v868 = vsub.f32 %v833, %v858
    %v869 = vsub.f32 %v836, %v861
    %v870 = vmul.f32 %v862, 1.442695
    %v871 = vpow.pop %v870
    %v872 = vmul.f32 %v863, 1.442695
    %v873 = vpow.pop %v872
    %v874 = vmul.f32 %v864, 1.442695
    %v875 = vpow.pop %v874
    %v876 = vmul.f32 %v865, 1.442695
    %v877 = vpow.pop %v876
    %v878 = vmul.f32 %v866, 1.442695
    %v879 = vpow.pop %v878
    %v880 = vmul.f32 %v867, 1.442695
    %v881 = vpow.pop %v880
    %v882 = vmul.f32 %v868, 1.442695
    %v883 = vpow.pop %v882
    %v884 = vmul.f32 %v869, 1.442695
    %v885 = vpow.pop %v884
    %v886 = vsel %vm748, %v871, 0.0
    %887 = vadd.xlane.f32.xlu0 %v886
    %v888 = vpop.xlane.xlu0 %887
    %v889 = vsel %vm748, %v873, 0.0
    %890 = vadd.xlane.f32.xlu0 %v889
    %v891 = vpop.xlane.xlu0 %890
    %v892 = vsel %vm748, %v875, 0.0
    %893 = vadd.xlane.f32.xlu0 %v892
    %v894 = vpop.xlane.xlu0 %893
    %v895 = vsel %vm748, %v877, 0.0
    %896 = vadd.xlane.f32.xlu0 %v895
    %v897 = vpop.xlane.xlu0 %896
    %v898 = vsel %vm748, %v879, 0.0
    %899 = vadd.xlane.f32.xlu0 %v898
    %v900 = vpop.xlane.xlu0 %899
    %v901 = vsel %vm748, %v881, 0.0
    %902 = vadd.xlane.f32.xlu0 %v901
    %v903 = vpop.xlane.xlu0 %902
    %v904 = vsel %vm748, %v883, 0.0
    %905 = vadd.xlane.f32.xlu0 %v904
    %v906 = vpop.xlane.xlu0 %905
    %v907 = vsel %vm748, %v885, 0.0
    %908 = vadd.xlane.f32.xlu0 %v907
    %v909 = vpop.xlane.xlu0 %908
    %v910 = vrcp.pop %v888
    %v911 = vrcp.pop %v891
    %v912 = vrcp.pop %v894
    %v913 = vrcp.pop %v897
    %v914 = vrcp.pop %v900
    %v915 = vrcp.pop %v903
    %v916 = vrcp.pop %v906
    %v917 = vrcp.pop %v909
    %v918 = vmul.f32 %v871, %v910
    %v919 = vmul.f32 %v873, %v911
    %v920 = vmul.f32 %v875, %v912
    %v921 = vmul.f32 %v877, %v913
    %v922 = vmul.f32 %v879, %v914
    %v923 = vmul.f32 %v881, %v915
    %v924 = vmul.f32 %v883, %v916
    %v925 = vmul.f32 %v885, %v917
    %v927 = vsel %vm748, %v918, 0
    %v930 = vsel %vm748, %v919, 0
    %v933 = vsel %vm748, %v920, 0
    %v936 = vsel %vm748, %v921, 0
    %v939 = vsel %vm748, %v922, 0
    %v942 = vsel %vm748, %v923, 0
    %v945 = vsel %vm748, %v924, 0
    %v948 = vsel %vm748, %v925, 0
    %950 = vmatpush.msra.mxu0 0.0
    %951 = vmatpush.msra.mxu0 0.0
    %952 = vmatpush.msra.mxu0 0.0
    %953 = vmatpush.msra.mxu0 0.0
    %954 = vmatpush.msra.mxu0 0.0
    %955 = vmatpush.msra.mxu0 0.0
    %956 = vmatpush.msra.mxu0 0.0
    %957 = vmatpush.msra.mxu0 0.0
    %958 = vmatpush.msra.mxu0 %v746
    %959 = vmatpush.msra.mxu0 %v744
    %960 = vmatpush.msra.mxu0 %v741
    %961 = vmatpush.msra.mxu0 %v739
    %962 = vmatpush.msra.mxu0 %v736
    %963 = vmatpush.msra.mxu0 %v734
    %964 = vmatpush.msra.mxu0 %v731
    %965 = vmatpush.msra.mxu0 %v729
    %966 = vmatmul.f32.gmra.mxu0 %v927
    %v967 = vpop.f32.mrf.mxu0
    %v968 = vadd.f32 0.0, %v967
    %969 = vmatmul.f32.gmra.mxu0 %v930
    %v970 = vpop.f32.mrf.mxu0
    %v971 = vadd.f32 0.0, %v970
    %972 = vmatmul.f32.gmra.mxu0 %v933
    %v973 = vpop.f32.mrf.mxu0
    %v974 = vadd.f32 0.0, %v973
    %975 = vmatmul.f32.gmra.mxu0 %v936
    %v976 = vpop.f32.mrf.mxu0
    %v977 = vadd.f32 0.0, %v976
    %978 = vmatmul.f32.gmra.mxu0 %v939
    %v979 = vpop.f32.mrf.mxu0
    %v980 = vadd.f32 0.0, %v979
    %981 = vmatmul.f32.gmra.mxu0 %v942
    %v982 = vpop.f32.mrf.mxu0
    %v983 = vadd.f32 0.0, %v982
    %984 = vmatmul.f32.gmra.mxu0 %v945
    %v985 = vpop.f32.mrf.mxu0
    %v986 = vadd.f32 0.0, %v985
    %987 = vmatmul.f32.gmra.mxu0 %v948
    %v988 = vpop.f32.mrf.mxu0
    %v989 = vadd.f32 0.0, %v988
    %990 = vdwg.mxu0
    %991 = vst.msk [vmem:[#allocation2] sm:$0xff] %vm748, %v968
    %992 = vst.msk [vmem:[#allocation2 + $0x8] sm:$0xff] %vm748, %v971
    %993 = vst.msk [vmem:[#allocation2 + $0x10] sm:$0xff] %vm748, %v974
    %994 = vst.msk [vmem:[#allocation2 + $0x18] sm:$0xff] %vm748, %v977
    %995 = vst.msk [vmem:[#allocation2 + $0x20] sm:$0xff] %vm748, %v980
    %996 = vst.msk [vmem:[#allocation2 + $0x28] sm:$0xff] %vm748, %v983
    %997 = vst.msk [vmem:[#allocation2 + $0x30] sm:$0xff] %vm748, %v986
    %998 = vst.msk [vmem:[#allocation2 + $0x38] sm:$0xff] %vm748, %v989
    %999 = vrot.lane.b32.xlu0 %v671, 64
    %v1000 = vpop.permute.xlu0 %999
    %1001 = vrot.lane.b32.xlu0 %v673, 64
    %v1002 = vpop.permute.xlu0 %1001
    %1003 = vrot.lane.b32.xlu0 %v676, 64
    %v1004 = vpop.permute.xlu0 %1003
    %1005 = vrot.lane.b32.xlu0 %v678, 64
    %v1006 = vpop.permute.xlu0 %1005
    %1007 = vrot.lane.b32.xlu0 %v681, 64
    %v1008 = vpop.permute.xlu0 %1007
    %1009 = vrot.lane.b32.xlu0 %v683, 64
    %v1010 = vpop.permute.xlu0 %1009
    %1011 = vrot.lane.b32.xlu0 %v686, 64
    %v1012 = vpop.permute.xlu0 %1011
    %1013 = vrot.lane.b32.xlu0 %v688, 64
    %v1014 = vpop.permute.xlu0 %1013
    %1015 = vrot.lane.b32.xlu0 %v700, 64
    %v1016 = vpop.permute.xlu0 %1015
    %1017 = vrot.lane.b32.xlu0 %v702, 64
    %v1018 = vpop.permute.xlu0 %1017
    %1019 = vrot.lane.b32.xlu0 %v705, 64
    %v1020 = vpop.permute.xlu0 %1019
    %1021 = vrot.lane.b32.xlu0 %v707, 64
    %v1022 = vpop.permute.xlu0 %1021
    %1023 = vrot.lane.b32.xlu0 %v710, 64
    %v1024 = vpop.permute.xlu0 %1023
    %1025 = vrot.lane.b32.xlu0 %v712, 64
    %v1026 = vpop.permute.xlu0 %1025
    %1027 = vrot.lane.b32.xlu0 %v715, 64
    %v1028 = vpop.permute.xlu0 %1027
    %1029 = vrot.lane.b32.xlu0 %v717, 64
    %v1030 = vpop.permute.xlu0 %1029
    %v1031 = vsel %vm748, %v1000, 0
    %v1033 = vsel %vm748, %v1002, 0
    %v1035 = vsel %vm748, %v1004, 0
    %v1037 = vsel %vm748, %v1006, 0
    %v1039 = vsel %vm748, %v1008, 0
    %v1041 = vsel %vm748, %v1010, 0
    %v1043 = vsel %vm748, %v1012, 0
    %v1045 = vsel %vm748, %v1014, 0
    %v1047 = vsel %vm748, %v1016, 0
    %v1049 = vsel %vm748, %v1018, 0
    %v1051 = vsel %vm748, %v1020, 0
    %v1053 = vsel %vm748, %v1022, 0
    %v1055 = vsel %vm748, %v1024, 0
    %v1057 = vsel %vm748, %v1026, 0
    %v1059 = vsel %vm748, %v1028, 0
    %v1061 = vsel %vm748, %v1030, 0
    %1063 = vmatpush.xpose.msra.mxu0 0.0
    %1064 = vmatpush.xpose.msra.mxu0 0.0
    %1065 = vmatpush.xpose.msra.mxu0 0.0
    %1066 = vmatpush.xpose.msra.mxu0 0.0
    %1067 = vmatpush.xpose.msra.mxu0 0.0
    %1068 = vmatpush.xpose.msra.mxu0 0.0
    %1069 = vmatpush.xpose.msra.mxu0 0.0
    %1070 = vmatpush.xpose.msra.mxu0 0.0
    %1071 = vmatpush.xpose.msra.mxu0 %v1061
    %1072 = vmatpush.xpose.msra.mxu0 %v1059
    %1073 = vmatpush.xpose.msra.mxu0 %v1057
    %1074 = vmatpush.xpose.msra.mxu0 %v1055
    %1075 = vmatpush.xpose.msra.mxu0 %v1053
    %1076 = vmatpush.xpose.msra.mxu0 %v1051
    %1077 = vmatpush.xpose.msra.mxu0 %v1049
    %1078 = vmatpush.xpose.msra.mxu0 %v1047
    %1079 = vmatmul.f32.gmra.mxu0 %v1031
    %v1080 = vpop.f32.mrf.mxu0
    %v1081 = vadd.f32 %v481, %v1080
    %1082 = vmatmul.f32.gmra.mxu0 %v1033
    %v1083 = vpop.f32.mrf.mxu0
    %v1084 = vadd.f32 %v482, %v1083
    %1085 = vmatmul.f32.gmra.mxu0 %v1035
    %v1086 = vpop.f32.mrf.mxu0
    %v1087 = vadd.f32 %v483, %v1086
    %1088 = vmatmul.f32.gmra.mxu0 %v1037
    %v1089 = vpop.f32.mrf.mxu0
    %v1090 = vadd.f32 %v484, %v1089
    %1091 = vmatmul.f32.gmra.mxu0 %v1039
    %v1092 = vpop.f32.mrf.mxu0
    %v1093 = vadd.f32 %v485, %v1092
    %1094 = vmatmul.f32.gmra.mxu0 %v1041
    %v1095 = vpop.f32.mrf.mxu0
    %v1096 = vadd.f32 %v486, %v1095
    %1097 = vmatmul.f32.gmra.mxu0 %v1043
    %v1098 = vpop.f32.mrf.mxu0
    %v1099 = vadd.f32 %v487, %v1098
    %1100 = vmatmul.f32.gmra.mxu0 %v1045
    %v1101 = vpop.f32.mrf.mxu0
    %v1102 = vadd.f32 %v488, %v1101
    %1103 = vdwg.mxu0
    %v1104 = vsel %vm748, %v1081, -inf
    %1105 = vmax.xlane.f32.xlu0 %v1104
    %v1106 = vpop.xlane.xlu0 %1105
    %v1107 = vsel %vm748, %v1084, -inf
    %1108 = vmax.xlane.f32.xlu0 %v1107
    %v1109 = vpop.xlane.xlu0 %1108
    %v1110 = vsel %vm748, %v1087, -inf
    %1111 = vmax.xlane.f32.xlu0 %v1110
    %v1112 = vpop.xlane.xlu0 %1111
    %v1113 = vsel %vm748, %v1090, -inf
    %1114 = vmax.xlane.f32.xlu0 %v1113
    %v1115 = vpop.xlane.xlu0 %1114
    %v1116 = vsel %vm748, %v1093, -inf
    %1117 = vmax.xlane.f32.xlu0 %v1116
    %v1118 = vpop.xlane.xlu0 %1117
    %v1119 = vsel %vm748, %v1096, -inf
    %1120 = vmax.xlane.f32.xlu0 %v1119
    %v1121 = vpop.xlane.xlu0 %1120
    %v1122 = vsel %vm748, %v1099, -inf
    %1123 = vmax.xlane.f32.xlu0 %v1122
    %v1124 = vpop.xlane.xlu0 %1123
    %v1125 = vsel %vm748, %v1102, -inf
    %1126 = vmax.xlane.f32.xlu0 %v1125
    %v1127 = vpop.xlane.xlu0 %1126
    %v1128 = vsub.f32 %v1081, %v1106
    %v1129 = vsub.f32 %v1084, %v1109
    %v1130 = vsub.f32 %v1087, %v1112
    %v1131 = vsub.f32 %v1090, %v1115
    %v1132 = vsub.f32 %v1093, %v1118
    %v1133 = vsub.f32 %v1096, %v1121
    %v1134 = vsub.f32 %v1099, %v1124
    %v1135 = vsub.f32 %v1102, %v1127
    %v1136 = vmul.f32 %v1128, 1.442695
    %v1137 = vpow.pop %v1136
    %v1138 = vmul.f32 %v1129, 1.442695
    %v1139 = vpow.pop %v1138
    %v1140 = vmul.f32 %v1130, 1.442695
    %v1141 = vpow.pop %v1140
    %v1142 = vmul.f32 %v1131, 1.442695
    %v1143 = vpow.pop %v1142
    %v1144 = vmul.f32 %v1132, 1.442695
    %v1145 = vpow.pop %v1144
    %v1146 = vmul.f32 %v1133, 1.442695
    %v1147 = vpow.pop %v1146
    %v1148 = vmul.f32 %v1134, 1.442695
    %v1149 = vpow.pop %v1148
    %v1150 = vmul.f32 %v1135, 1.442695
    %v1151 = vpow.pop %v1150
    %v1152 = vsel %vm748, %v1137, 0.0
    %1153 = vadd.xlane.f32.xlu0 %v1152
    %v1154 = vpop.xlane.xlu0 %1153
    %v1155 = vsel %vm748, %v1139, 0.0
    %1156 = vadd.xlane.f32.xlu0 %v1155
    %v1157 = vpop.xlane.xlu0 %1156
    %v1158 = vsel %vm748, %v1141, 0.0
    %1159 = vadd.xlane.f32.xlu0 %v1158
    %v1160 = vpop.xlane.xlu0 %1159
    %v1161 = vsel %vm748, %v1143, 0.0
    %1162 = vadd.xlane.f32.xlu0 %v1161
    %v1163 = vpop.xlane.xlu0 %1162
    %v1164 = vsel %vm748, %v1145, 0.0
    %1165 = vadd.xlane.f32.xlu0 %v1164
    %v1166 = vpop.xlane.xlu0 %1165
    %v1167 = vsel %vm748, %v1147, 0.0
    %1168 = vadd.xlane.f32.xlu0 %v1167
    %v1169 = vpop.xlane.xlu0 %1168
    %v1170 = vsel %vm748, %v1149, 0.0
    %1171 = vadd.xlane.f32.xlu0 %v1170
    %v1172 = vpop.xlane.xlu0 %1171
    %v1173 = vsel %vm748, %v1151, 0.0
    %1174 = vadd.xlane.f32.xlu0 %v1173
    %v1175 = vpop.xlane.xlu0 %1174
    %v1176 = vrcp.pop %v1154
    %v1177 = vrcp.pop %v1157
    %v1178 = vrcp.pop %v1160
    %v1179 = vrcp.pop %v1163
    %v1180 = vrcp.pop %v1166
    %v1181 = vrcp.pop %v1169
    %v1182 = vrcp.pop %v1172
    %v1183 = vrcp.pop %v1175
    %v1184 = vmul.f32 %v1137, %v1176
    %v1185 = vmul.f32 %v1139, %v1177
    %v1186 = vmul.f32 %v1141, %v1178
    %v1187 = vmul.f32 %v1143, %v1179
    %v1188 = vmul.f32 %v1145, %v1180
    %v1189 = vmul.f32 %v1147, %v1181
    %v1190 = vmul.f32 %v1149, %v1182
    %v1191 = vmul.f32 %v1151, %v1183
    %1200 = vrot.lane.b32.xlu0 %v729, 64
    %v1201 = vpop.permute.xlu0 %1200
    %1202 = vrot.lane.b32.xlu0 %v731, 64
    %v1203 = vpop.permute.xlu0 %1202
    %1204 = vrot.lane.b32.xlu0 %v734, 64
    %v1205 = vpop.permute.xlu0 %1204
    %1206 = vrot.lane.b32.xlu0 %v736, 64
    %v1207 = vpop.permute.xlu0 %1206
    %1208 = vrot.lane.b32.xlu0 %v739, 64
    %v1209 = vpop.permute.xlu0 %1208
    %1210 = vrot.lane.b32.xlu0 %v741, 64
    %v1211 = vpop.permute.xlu0 %1210
    %1212 = vrot.lane.b32.xlu0 %v744, 64
    %v1213 = vpop.permute.xlu0 %1212
    %1214 = vrot.lane.b32.xlu0 %v746, 64
    %v1215 = vpop.permute.xlu0 %1214
    %v1225 = vsel %vm748, %v1184, 0
    %v1228 = vsel %vm748, %v1185, 0
    %v1231 = vsel %vm748, %v1186, 0
    %v1234 = vsel %vm748, %v1187, 0
    %v1237 = vsel %vm748, %v1188, 0
    %v1240 = vsel %vm748, %v1189, 0
    %v1243 = vsel %vm748, %v1190, 0
    %v1246 = vsel %vm748, %v1191, 0
    %1248 = vmatpush.msra.mxu0 0.0
    %1249 = vmatpush.msra.mxu0 0.0
    %1250 = vmatpush.msra.mxu0 0.0
    %1251 = vmatpush.msra.mxu0 0.0
    %1252 = vmatpush.msra.mxu0 0.0
    %1253 = vmatpush.msra.mxu0 0.0
    %1254 = vmatpush.msra.mxu0 0.0
    %1255 = vmatpush.msra.mxu0 0.0
    %1256 = vmatpush.msra.mxu0 %v1215
    %1257 = vmatpush.msra.mxu0 %v1213
    %1258 = vmatpush.msra.mxu0 %v1211
    %1259 = vmatpush.msra.mxu0 %v1209
    %1260 = vmatpush.msra.mxu0 %v1207
    %1261 = vmatpush.msra.mxu0 %v1205
    %1262 = vmatpush.msra.mxu0 %v1203
    %1263 = vmatpush.msra.mxu0 %v1201
    %1264 = vmatmul.f32.gmra.mxu0 %v1225
    %v1265 = vpop.f32.mrf.mxu0
    %v1266 = vadd.f32 0.0, %v1265
    %1267 = vmatmul.f32.gmra.mxu0 %v1228
    %v1268 = vpop.f32.mrf.mxu0
    %v1269 = vadd.f32 0.0, %v1268
    %1270 = vmatmul.f32.gmra.mxu0 %v1231
    %v1271 = vpop.f32.mrf.mxu0
    %v1272 = vadd.f32 0.0, %v1271
    %1273 = vmatmul.f32.gmra.mxu0 %v1234
    %v1274 = vpop.f32.mrf.mxu0
    %v1275 = vadd.f32 0.0, %v1274
    %1276 = vmatmul.f32.gmra.mxu0 %v1237
    %v1277 = vpop.f32.mrf.mxu0
    %v1278 = vadd.f32 0.0, %v1277
    %1279 = vmatmul.f32.gmra.mxu0 %v1240
    %v1280 = vpop.f32.mrf.mxu0
    %v1281 = vadd.f32 0.0, %v1280
    %1282 = vmatmul.f32.gmra.mxu0 %v1243
    %v1283 = vpop.f32.mrf.mxu0
    %v1284 = vadd.f32 0.0, %v1283
    %1285 = vmatmul.f32.gmra.mxu0 %v1246
    %v1286 = vpop.f32.mrf.mxu0
    %v1287 = vadd.f32 0.0, %v1286
    %1288 = vdwg.mxu0
    %1297 = vrot.lane.b32.xlu0 %v1266, 64
    %v1298 = vpop.permute.xlu0 %1297
    %1299 = vrot.lane.b32.xlu0 %v1269, 64
    %v1300 = vpop.permute.xlu0 %1299
    %1301 = vrot.lane.b32.xlu0 %v1272, 64
    %v1302 = vpop.permute.xlu0 %1301
    %1303 = vrot.lane.b32.xlu0 %v1275, 64
    %v1304 = vpop.permute.xlu0 %1303
    %1305 = vrot.lane.b32.xlu0 %v1278, 64
    %v1306 = vpop.permute.xlu0 %1305
    %1307 = vrot.lane.b32.xlu0 %v1281, 64
    %v1308 = vpop.permute.xlu0 %1307
    %1309 = vrot.lane.b32.xlu0 %v1284, 64
    %v1310 = vpop.permute.xlu0 %1309
    %1311 = vrot.lane.b32.xlu0 %v1287, 64
    %v1312 = vpop.permute.xlu0 %1311
    %vm1321 = vcmask 1048064
    %1322 = vst.msk [vmem:[#allocation2] sm:$0xff] %vm1321, %v1298
    %1323 = vst.msk [vmem:[#allocation2 + $0x8] sm:$0xff] %vm1321, %v1300
    %1324 = vst.msk [vmem:[#allocation2 + $0x10] sm:$0xff] %vm1321, %v1302
    %1325 = vst.msk [vmem:[#allocation2 + $0x18] sm:$0xff] %vm1321, %v1304
    %1326 = vst.msk [vmem:[#allocation2 + $0x20] sm:$0xff] %vm1321, %v1306
    %1327 = vst.msk [vmem:[#allocation2 + $0x28] sm:$0xff] %vm1321, %v1308
    %1328 = vst.msk [vmem:[#allocation2 + $0x30] sm:$0xff] %vm1321, %v1310
    %1329 = vst.msk [vmem:[#allocation2 + $0x38] sm:$0xff] %vm1321, %v1312
    %v1330 = vld [vmem:[#allocation2] sm:$0xff]
    %v1331 = vld [vmem:[#allocation2 + $0x8] sm:$0xff]
    %v1332 = vld [vmem:[#allocation2 + $0x10] sm:$0xff]
    %v1333 = vld [vmem:[#allocation2 + $0x18] sm:$0xff]
    %v1334 = vld [vmem:[#allocation2 + $0x20] sm:$0xff]
    %v1335 = vld [vmem:[#allocation2 + $0x28] sm:$0xff]
    %v1336 = vld [vmem:[#allocation2 + $0x30] sm:$0xff]
    %v1337 = vld [vmem:[#allocation2 + $0x38] sm:$0xff]
    %v1338 = vpack.c.bf16 %v1331, %v1330
    %v1339 = vpack.c.bf16 %v1333, %v1332
    %v1340 = vpack.c.bf16 %v1335, %v1334
    %v1341 = vpack.c.bf16 %v1337, %v1336
    %v1342 = vld [vmem:[%s9] sm:$0xf]
    %v1343 = vld [vmem:[%s9 + $0x4] sm:$0xf]
    %v1344 = vld [vmem:[%s9 + $0x8] sm:$0xf]
    %v1345 = vld [vmem:[%s9 + $0xc] sm:$0xf]
    %v1346 = vld [vmem:[%s9 + $0x10] sm:$0xf]
    %v1347 = vld [vmem:[%s9 + $0x14] sm:$0xf]
    %v1348 = vld [vmem:[%s9 + $0x18] sm:$0xf]
    %v1349 = vld [vmem:[%s9 + $0x1c] sm:$0xf]
    %v1350 = vld [vmem:[%s9 + $0x20] sm:$0xf]
    %v1351 = vld [vmem:[%s9 + $0x24] sm:$0xf]
    %v1352 = vld [vmem:[%s9 + $0x28] sm:$0xf]
    %v1353 = vld [vmem:[%s9 + $0x2c] sm:$0xf]
    %v1354 = vld [vmem:[%s9 + $0x30] sm:$0xf]
    %v1355 = vld [vmem:[%s9 + $0x34] sm:$0xf]
    %v1356 = vld [vmem:[%s9 + $0x38] sm:$0xf]
    %v1357 = vld [vmem:[%s9 + $0x3c] sm:$0xf]
    %v1358 = vld [vmem:[%s10] sm:$0x1]
    %v1360 = vperm.slane %v1358, 0
    %v1378 = vunpack.c.l.b16 %v1342
    %v1379 = vunpack.c.l.b16 %v1343
    %v1380 = vunpack.c.l.b16 %v1344
    %v1381 = vunpack.c.l.b16 %v1345
    %v1382 = vunpack.c.l.b16 %v1346
    %v1383 = vunpack.c.l.b16 %v1347
    %v1384 = vunpack.c.l.b16 %v1348
    %v1385 = vunpack.c.l.b16 %v1349
    %v1386 = vunpack.c.l.b16 %v1350
    %v1387 = vunpack.c.l.b16 %v1351
    %v1388 = vunpack.c.l.b16 %v1352
    %v1389 = vunpack.c.l.b16 %v1353
    %v1390 = vunpack.c.l.b16 %v1354
    %v1391 = vunpack.c.l.b16 %v1355
    %v1392 = vunpack.c.l.b16 %v1356
    %v1393 = vunpack.c.l.b16 %v1357
    %v1394 = vpack.c.b16 %v1379, %v1378
    %v1395 = vpack.c.b16 %v1381, %v1380
    %v1396 = vpack.c.b16 %v1383, %v1382
    %v1397 = vpack.c.b16 %v1385, %v1384
    %v1398 = vpack.c.b16 %v1387, %v1386
    %v1399 = vpack.c.b16 %v1389, %v1388
    %v1400 = vpack.c.b16 %v1391, %v1390
    %v1401 = vpack.c.b16 %v1393, %v1392
    %1410 = vmatpush.bf16.msra.mxu0 %v1401
    %1411 = vmatpush.bf16.msra.mxu0 %v1400
    %1412 = vmatpush.bf16.msra.mxu0 %v1399
    %1413 = vmatpush.bf16.msra.mxu0 %v1398
    %1414 = vmatpush.bf16.msra.mxu0 %v1397
    %1415 = vmatpush.bf16.msra.mxu0 %v1396
    %1416 = vmatpush.bf16.msra.mxu0 %v1395
    %1417 = vmatpush.bf16.msra.mxu0 %v1394
    %1418 = vmatmul.bf16.gmra.mxu0 %v1338
    %v1419 = vpop.f32.mrf.mxu0
    %v1420 = vadd.f32 %v1360, %v1419
    %v1421 = vpop.f32.mrf.mxu0
    %v1422 = vadd.f32 %v1360, %v1421
    %1423 = vmatmul.bf16.gmra.mxu0 %v1339
    %v1424 = vpop.f32.mrf.mxu0
    %v1425 = vadd.f32 %v1360, %v1424
    %v1426 = vpop.f32.mrf.mxu0
    %v1427 = vadd.f32 %v1360, %v1426
    %1428 = vmatmul.bf16.gmra.mxu0 %v1340
    %v1429 = vpop.f32.mrf.mxu0
    %v1430 = vadd.f32 %v1360, %v1429
    %v1431 = vpop.f32.mrf.mxu0
    %v1432 = vadd.f32 %v1360, %v1431
    %1433 = vmatmul.bf16.gmra.mxu0 %v1341
    %v1434 = vpop.f32.mrf.mxu0
    %v1435 = vadd.f32 %v1360, %v1434
    %v1436 = vpop.f32.mrf.mxu0
    %v1437 = vadd.f32 %v1360, %v1436
    %1438 = vdwg.mxu0
    %v1439 = vadd.f32 %v1420, %v473
    %v1440 = vadd.f32 %v1422, %v474
    %v1441 = vadd.f32 %v1425, %v475
    %v1442 = vadd.f32 %v1427, %v476
    %v1443 = vadd.f32 %v1430, %v477
    %v1444 = vadd.f32 %v1432, %v478
    %v1445 = vadd.f32 %v1435, %v479
    %v1446 = vadd.f32 %v1437, %v480
    %v1447 = vld [vmem:[%s11] sm:$0x1]
    %v1448 = vld [vmem:[%s12] sm:$0x1]
    %1449 = vadd.xlane.f32.xlu0 %v1439
    %v1450 = vpop.xlane.xlu0 %1449
    %1451 = vadd.xlane.f32.xlu0 %v1440
    %v1452 = vpop.xlane.xlu0 %1451
    %1453 = vadd.xlane.f32.xlu0 %v1441
    %v1454 = vpop.xlane.xlu0 %1453
    %1455 = vadd.xlane.f32.xlu0 %v1442
    %v1456 = vpop.xlane.xlu0 %1455
    %1457 = vadd.xlane.f32.xlu0 %v1443
    %v1458 = vpop.xlane.xlu0 %1457
    %1459 = vadd.xlane.f32.xlu0 %v1444
    %v1460 = vpop.xlane.xlu0 %1459
    %1461 = vadd.xlane.f32.xlu0 %v1445
    %v1462 = vpop.xlane.xlu0 %1461
    %1463 = vadd.xlane.f32.xlu0 %v1446
    %v1464 = vpop.xlane.xlu0 %1463
    %v1465 = vmul.f32 %v1450, %v314
    %v1466 = vmul.f32 %v1452, %v314
    %v1467 = vmul.f32 %v1454, %v314
    %v1468 = vmul.f32 %v1456, %v314
    %v1469 = vmul.f32 %v1458, %v314
    %v1470 = vmul.f32 %v1460, %v314
    %v1471 = vmul.f32 %v1462, %v314
    %v1472 = vmul.f32 %v1464, %v314
    %v1473 = vsub.f32 %v1439, %v1465
    %v1474 = vsub.f32 %v1440, %v1466
    %v1475 = vsub.f32 %v1441, %v1467
    %v1476 = vsub.f32 %v1442, %v1468
    %v1477 = vsub.f32 %v1443, %v1469
    %v1478 = vsub.f32 %v1444, %v1470
    %v1479 = vsub.f32 %v1445, %v1471
    %v1480 = vsub.f32 %v1446, %v1472
    %v1481 = vmul.f32 %v1473, %v1473
    %v1482 = vmul.f32 %v1474, %v1474
    %v1483 = vmul.f32 %v1475, %v1475
    %v1484 = vmul.f32 %v1476, %v1476
    %v1485 = vmul.f32 %v1477, %v1477
    %v1486 = vmul.f32 %v1478, %v1478
    %v1487 = vmul.f32 %v1479, %v1479
    %v1488 = vmul.f32 %v1480, %v1480
    %1489 = vadd.xlane.f32.xlu0 %v1481
    %v1490 = vpop.xlane.xlu0 %1489
    %1491 = vadd.xlane.f32.xlu0 %v1482
    %v1492 = vpop.xlane.xlu0 %1491
    %1493 = vadd.xlane.f32.xlu0 %v1483
    %v1494 = vpop.xlane.xlu0 %1493
    %1495 = vadd.xlane.f32.xlu0 %v1484
    %v1496 = vpop.xlane.xlu0 %1495
    %1497 = vadd.xlane.f32.xlu0 %v1485
    %v1498 = vpop.xlane.xlu0 %1497
    %1499 = vadd.xlane.f32.xlu0 %v1486
    %v1500 = vpop.xlane.xlu0 %1499
    %1501 = vadd.xlane.f32.xlu0 %v1487
    %v1502 = vpop.xlane.xlu0 %1501
    %1503 = vadd.xlane.f32.xlu0 %v1488
    %v1504 = vpop.xlane.xlu0 %1503
    %v1505 = vmul.f32 %v1490, %v314
    %v1506 = vmul.f32 %v1492, %v314
    %v1507 = vmul.f32 %v1494, %v314
    %v1508 = vmul.f32 %v1496, %v314
    %v1509 = vmul.f32 %v1498, %v314
    %v1510 = vmul.f32 %v1500, %v314
    %v1511 = vmul.f32 %v1502, %v314
    %v1512 = vmul.f32 %v1504, %v314
    %v1513 = vadd.f32 %v1505, 1e-12
    %v1514 = vadd.f32 %v1506, 1e-12
    %v1515 = vadd.f32 %v1507, 1e-12
    %v1516 = vadd.f32 %v1508, 1e-12
    %v1517 = vadd.f32 %v1509, 1e-12
    %v1518 = vadd.f32 %v1510, 1e-12
    %v1519 = vadd.f32 %v1511, 1e-12
    %v1520 = vadd.f32 %v1512, 1e-12
    %v1521 = vrsqrt.pop %v1513
    %v1522 = vmul.f32 %v1521, %v1513
    %v1523 = vmul.f32 %v1522, %v1521
    %v1524 = vmul.f32 0.5, %v1523
    %v1525 = vsub.f32 1.5, %v1524
    %v1526 = vmul.f32 %v1521, %v1525
    %vm1527 = vweird.f32 %v1513
    %vm1528 = vweird.f32 %v1521
    %vm1529 = vmor %vm1527, %vm1528
    %v1530 = vsel %vm1529, %v1521, %v1526
    %v1531 = vrsqrt.pop %v1514
    %v1532 = vmul.f32 %v1531, %v1514
    %v1533 = vmul.f32 %v1532, %v1531
    %v1534 = vmul.f32 0.5, %v1533
    %v1535 = vsub.f32 1.5, %v1534
    %v1536 = vmul.f32 %v1531, %v1535
    %vm1537 = vweird.f32 %v1514
    %vm1538 = vweird.f32 %v1531
    %vm1539 = vmor %vm1537, %vm1538
    %v1540 = vsel %vm1539, %v1531, %v1536
    %v1541 = vrsqrt.pop %v1515
    %v1542 = vmul.f32 %v1541, %v1515
    %v1543 = vmul.f32 %v1542, %v1541
    %v1544 = vmul.f32 0.5, %v1543
    %v1545 = vsub.f32 1.5, %v1544
    %v1546 = vmul.f32 %v1541, %v1545
    %vm1547 = vweird.f32 %v1515
    %vm1548 = vweird.f32 %v1541
    %vm1549 = vmor %vm1547, %vm1548
    %v1550 = vsel %vm1549, %v1541, %v1546
    %v1551 = vrsqrt.pop %v1516
    %v1552 = vmul.f32 %v1551, %v1516
    %v1553 = vmul.f32 %v1552, %v1551
    %v1554 = vmul.f32 0.5, %v1553
    %v1555 = vsub.f32 1.5, %v1554
    %v1556 = vmul.f32 %v1551, %v1555
    %vm1557 = vweird.f32 %v1516
    %vm1558 = vweird.f32 %v1551
    %vm1559 = vmor %vm1557, %vm1558
    %v1560 = vsel %vm1559, %v1551, %v1556
    %v1561 = vrsqrt.pop %v1517
    %v1562 = vmul.f32 %v1561, %v1517
    %v1563 = vmul.f32 %v1562, %v1561
    %v1564 = vmul.f32 0.5, %v1563
    %v1565 = vsub.f32 1.5, %v1564
    %v1566 = vmul.f32 %v1561, %v1565
    %vm1567 = vweird.f32 %v1517
    %vm1568 = vweird.f32 %v1561
    %vm1569 = vmor %vm1567, %vm1568
    %v1570 = vsel %vm1569, %v1561, %v1566
    %v1571 = vrsqrt.pop %v1518
    %v1572 = vmul.f32 %v1571, %v1518
    %v1573 = vmul.f32 %v1572, %v1571
    %v1574 = vmul.f32 0.5, %v1573
    %v1575 = vsub.f32 1.5, %v1574
    %v1576 = vmul.f32 %v1571, %v1575
    %vm1577 = vweird.f32 %v1518
    %vm1578 = vweird.f32 %v1571
    %vm1579 = vmor %vm1577, %vm1578
    %v1580 = vsel %vm1579, %v1571, %v1576
    %v1581 = vrsqrt.pop %v1519
    %v1582 = vmul.f32 %v1581, %v1519
    %v1583 = vmul.f32 %v1582, %v1581
    %v1584 = vmul.f32 0.5, %v1583
    %v1585 = vsub.f32 1.5, %v1584
    %v1586 = vmul.f32 %v1581, %v1585
    %vm1587 = vweird.f32 %v1519
    %vm1588 = vweird.f32 %v1581
    %vm1589 = vmor %vm1587, %vm1588
    %v1590 = vsel %vm1589, %v1581, %v1586
    %v1591 = vrsqrt.pop %v1520
    %v1592 = vmul.f32 %v1591, %v1520
    %v1593 = vmul.f32 %v1592, %v1591
    %v1594 = vmul.f32 0.5, %v1593
    %v1595 = vsub.f32 1.5, %v1594
    %v1596 = vmul.f32 %v1591, %v1595
    %vm1597 = vweird.f32 %v1520
    %vm1598 = vweird.f32 %v1591
    %vm1599 = vmor %vm1597, %vm1598
    %v1600 = vsel %vm1599, %v1591, %v1596
    %v1601 = vmul.f32 %v1473, %v1530
    %v1602 = vmul.f32 %v1474, %v1540
    %v1603 = vmul.f32 %v1475, %v1550
    %v1604 = vmul.f32 %v1476, %v1560
    %v1605 = vmul.f32 %v1477, %v1570
    %v1606 = vmul.f32 %v1478, %v1580
    %v1607 = vmul.f32 %v1479, %v1590
    %v1608 = vmul.f32 %v1480, %v1600
    %v1610 = vperm.slane %v1447, 0
    %v1612 = vmul.f32 %v1601, %v1610
    %v1613 = vmul.f32 %v1602, %v1610
    %v1614 = vmul.f32 %v1603, %v1610
    %v1615 = vmul.f32 %v1604, %v1610
    %v1616 = vmul.f32 %v1605, %v1610
    %v1617 = vmul.f32 %v1606, %v1610
    %v1618 = vmul.f32 %v1607, %v1610
    %v1619 = vmul.f32 %v1608, %v1610
    %v1621 = vperm.slane %v1448, 0
    %v1623 = vadd.f32 %v1612, %v1621
    %v1624 = vadd.f32 %v1613, %v1621
    %v1625 = vadd.f32 %v1614, %v1621
    %v1626 = vadd.f32 %v1615, %v1621
    %v1627 = vadd.f32 %v1616, %v1621
    %v1628 = vadd.f32 %v1617, %v1621
    %v1629 = vadd.f32 %v1618, %v1621
    %v1630 = vadd.f32 %v1619, %v1621
    %v1631 = vpack.c.bf16 %v1624, %v1623
    %v1632 = vpack.c.bf16 %v1626, %v1625
    %v1633 = vpack.c.bf16 %v1628, %v1627
    %v1634 = vpack.c.bf16 %v1630, %v1629
    %v1635 = vld [vmem:[#allocation5] sm:$0xff]
    %v1636 = vld [vmem:[#allocation5 + $0x8] sm:$0xff]
    %v1637 = vld [vmem:[#allocation5 + $0x10] sm:$0xff]
    %v1638 = vld [vmem:[#allocation5 + $0x18] sm:$0xff]
    %v1639 = vld [vmem:[#allocation5 + $0x20] sm:$0xff]
    %v1640 = vld [vmem:[#allocation5 + $0x28] sm:$0xff]
    %v1641 = vld [vmem:[#allocation5 + $0x30] sm:$0xff]
    %v1642 = vld [vmem:[#allocation5 + $0x38] sm:$0xff]
    %v1643 = vld [vmem:[#allocation5 + $0x40] sm:$0xff]
    %v1644 = vld [vmem:[#allocation5 + $0x48] sm:$0xff]
    %v1645 = vld [vmem:[#allocation5 + $0x50] sm:$0xff]
    %v1646 = vld [vmem:[#allocation5 + $0x58] sm:$0xff]
    %v1647 = vld [vmem:[#allocation5 + $0x60] sm:$0xff]
    %v1648 = vld [vmem:[#allocation5 + $0x68] sm:$0xff]
    %v1649 = vld [vmem:[#allocation5 + $0x70] sm:$0xff]
    %v1650 = vld [vmem:[#allocation5 + $0x78] sm:$0xff]
    %v1651 = vld [vmem:[#allocation5 + $0x80] sm:$0xff]
    %v1652 = vld [vmem:[#allocation5 + $0x88] sm:$0xff]
    %v1653 = vld [vmem:[#allocation5 + $0x90] sm:$0xff]
    %v1654 = vld [vmem:[#allocation5 + $0x98] sm:$0xff]
    %v1655 = vld [vmem:[#allocation5 + $0xa0] sm:$0xff]
    %v1656 = vld [vmem:[#allocation5 + $0xa8] sm:$0xff]
    %v1657 = vld [vmem:[#allocation5 + $0xb0] sm:$0xff]
    %v1658 = vld [vmem:[#allocation5 + $0xb8] sm:$0xff]
    %v1659 = vld [vmem:[#allocation5 + $0xc0] sm:$0xff]
    %v1660 = vld [vmem:[#allocation5 + $0xc8] sm:$0xff]
    %v1661 = vld [vmem:[#allocation5 + $0xd0] sm:$0xff]
    %v1662 = vld [vmem:[#allocation5 + $0xd8] sm:$0xff]
    %v1663 = vld [vmem:[#allocation5 + $0xe0] sm:$0xff]
    %v1664 = vld [vmem:[#allocation5 + $0xe8] sm:$0xff]
    %v1665 = vld [vmem:[#allocation5 + $0xf0] sm:$0xff]
    %v1666 = vld [vmem:[#allocation5 + $0xf8] sm:$0xff]
    %v1667 = vld [vmem:[%s14] sm:$0xf]
    %v1669 = vperm.slane %v1667, 0
    %v1670 = vperm.slane %v1667, 1
    %v1671 = vperm.slane %v1667, 2
    %v1672 = vperm.slane %v1667, 3
    %v1709 = vunpack.c.l.b16 %v1635
    %v1710 = vunpack.c.h.b16 %v1635
    %v1711 = vunpack.c.l.b16 %v1636
    %v1712 = vunpack.c.h.b16 %v1636
    %v1713 = vunpack.c.l.b16 %v1637
    %v1714 = vunpack.c.h.b16 %v1637
    %v1715 = vunpack.c.l.b16 %v1638
    %v1716 = vunpack.c.h.b16 %v1638
    %v1717 = vunpack.c.l.b16 %v1639
    %v1718 = vunpack.c.h.b16 %v1639
    %v1719 = vunpack.c.l.b16 %v1640
    %v1720 = vunpack.c.h.b16 %v1640
    %v1721 = vunpack.c.l.b16 %v1641
    %v1722 = vunpack.c.h.b16 %v1641
    %v1723 = vunpack.c.l.b16 %v1642
    %v1724 = vunpack.c.h.b16 %v1642
    %v1725 = vunpack.c.l.b16 %v1643
    %v1726 = vunpack.c.h.b16 %v1643
    %v1727 = vunpack.c.l.b16 %v1644
    %v1728 = vunpack.c.h.b16 %v1644
    %v1729 = vunpack.c.l.b16 %v1645
    %v1730 = vunpack.c.h.b16 %v1645
    %v1731 = vunpack.c.l.b16 %v1646
    %v1732 = vunpack.c.h.b16 %v1646
    %v1733 = vunpack.c.l.b16 %v1647
    %v1734 = vunpack.c.h.b16 %v1647
    %v1735 = vunpack.c.l.b16 %v1648
    %v1736 = vunpack.c.h.b16 %v1648
    %v1737 = vunpack.c.l.b16 %v1649
    %v1738 = vunpack.c.h.b16 %v1649
    %v1739 = vunpack.c.l.b16 %v1650
    %v1740 = vunpack.c.h.b16 %v1650
    %v1741 = vunpack.c.l.b16 %v1651
    %v1742 = vunpack.c.h.b16 %v1651
    %v1743 = vunpack.c.l.b16 %v1652
    %v1744 = vunpack.c.h.b16 %v1652
    %v1745 = vunpack.c.l.b16 %v1653
    %v1746 = vunpack.c.h.b16 %v1653
    %v1747 = vunpack.c.l.b16 %v1654
    %v1748 = vunpack.c.h.b16 %v1654
    %v1749 = vunpack.c.l.b16 %v1655
    %v1750 = vunpack.c.h.b16 %v1655
    %v1751 = vunpack.c.l.b16 %v1656
    %v1752 = vunpack.c.h.b16 %v1656
    %v1753 = vunpack.c.l.b16 %v1657
    %v1754 = vunpack.c.h.b16 %v1657
    %v1755 = vunpack.c.l.b16 %v1658
    %v1756 = vunpack.c.h.b16 %v1658
    %v1757 = vunpack.c.l.b16 %v1659
    %v1758 = vunpack.c.h.b16 %v1659
    %v1759 = vunpack.c.l.b16 %v1660
    %v1760 = vunpack.c.h.b16 %v1660
    %v1761 = vunpack.c.l.b16 %v1661
    %v1762 = vunpack.c.h.b16 %v1661
    %v1763 = vunpack.c.l.b16 %v1662
    %v1764 = vunpack.c.h.b16 %v1662
    %v1765 = vunpack.c.l.b16 %v1663
    %v1766 = vunpack.c.h.b16 %v1663
    %v1767 = vunpack.c.l.b16 %v1664
    %v1768 = vunpack.c.h.b16 %v1664
    %v1769 = vunpack.c.l.b16 %v1665
    %v1770 = vunpack.c.h.b16 %v1665
    %v1771 = vunpack.c.l.b16 %v1666
    %v1772 = vunpack.c.h.b16 %v1666
    %v1773 = vpack.c.b16 %v1713, %v1709
    %v1774 = vpack.c.b16 %v1714, %v1710
    %v1775 = vpack.c.b16 %v1715, %v1711
    %v1776 = vpack.c.b16 %v1716, %v1712
    %v1777 = vpack.c.b16 %v1721, %v1717
    %v1778 = vpack.c.b16 %v1722, %v1718
    %v1779 = vpack.c.b16 %v1723, %v1719
    %v1780 = vpack.c.b16 %v1724, %v1720
    %v1781 = vpack.c.b16 %v1729, %v1725
    %v1782 = vpack.c.b16 %v1730, %v1726
    %v1783 = vpack.c.b16 %v1731, %v1727
    %v1784 = vpack.c.b16 %v1732, %v1728
    %v1785 = vpack.c.b16 %v1737, %v1733
    %v1786 = vpack.c.b16 %v1738, %v1734
    %v1787 = vpack.c.b16 %v1739, %v1735
    %v1788 = vpack.c.b16 %v1740, %v1736
    %v1789 = vpack.c.b16 %v1745, %v1741
    %v1790 = vpack.c.b16 %v1746, %v1742
    %v1791 = vpack.c.b16 %v1747, %v1743
    %v1792 = vpack.c.b16 %v1748, %v1744
    %v1793 = vpack.c.b16 %v1753, %v1749
    %v1794 = vpack.c.b16 %v1754, %v1750
    %v1795 = vpack.c.b16 %v1755, %v1751
    %v1796 = vpack.c.b16 %v1756, %v1752
    %v1797 = vpack.c.b16 %v1761, %v1757
    %v1798 = vpack.c.b16 %v1762, %v1758
    %v1799 = vpack.c.b16 %v1763, %v1759
    %v1800 = vpack.c.b16 %v1764, %v1760
    %v1801 = vpack.c.b16 %v1769, %v1765
    %v1802 = vpack.c.b16 %v1770, %v1766
    %v1803 = vpack.c.b16 %v1771, %v1767
    %v1804 = vpack.c.b16 %v1772, %v1768
    %1837 = vmatpush.bf16.msra.mxu0 %v1801
    %1838 = vmatpush.bf16.msra.mxu0 %v1797
    %1839 = vmatpush.bf16.msra.mxu0 %v1793
    %1840 = vmatpush.bf16.msra.mxu0 %v1789
    %1841 = vmatpush.bf16.msra.mxu0 %v1785
    %1842 = vmatpush.bf16.msra.mxu0 %v1781
    %1843 = vmatpush.bf16.msra.mxu0 %v1777
    %1844 = vmatpush.bf16.msra.mxu0 %v1773
    %1845 = vmatmul.bf16.gmra.mxu0 %v1631
    %v1846 = vpop.f32.mrf.mxu0
    %v1847 = vadd.f32 %v1669, %v1846
    %v1848 = vpop.f32.mrf.mxu0
    %v1849 = vadd.f32 %v1669, %v1848
    %1850 = vmatmul.bf16.gmra.mxu0 %v1632
    %v1851 = vpop.f32.mrf.mxu0
    %v1852 = vadd.f32 %v1669, %v1851
    %v1853 = vpop.f32.mrf.mxu0
    %v1854 = vadd.f32 %v1669, %v1853
    %1855 = vmatmul.bf16.gmra.mxu0 %v1633
    %v1856 = vpop.f32.mrf.mxu0
    %v1857 = vadd.f32 %v1669, %v1856
    %v1858 = vpop.f32.mrf.mxu0
    %v1859 = vadd.f32 %v1669, %v1858
    %1860 = vmatmul.bf16.gmra.mxu0 %v1634
    %v1861 = vpop.f32.mrf.mxu0
    %v1862 = vadd.f32 %v1669, %v1861
    %v1863 = vpop.f32.mrf.mxu0
    %v1864 = vadd.f32 %v1669, %v1863
    %1865 = vdwg.mxu0
    %1866 = vmatpush.bf16.msra.mxu0 %v1802
    %1867 = vmatpush.bf16.msra.mxu0 %v1798
    %1868 = vmatpush.bf16.msra.mxu0 %v1794
    %1869 = vmatpush.bf16.msra.mxu0 %v1790
    %1870 = vmatpush.bf16.msra.mxu0 %v1786
    %1871 = vmatpush.bf16.msra.mxu0 %v1782
    %1872 = vmatpush.bf16.msra.mxu0 %v1778
    %1873 = vmatpush.bf16.msra.mxu0 %v1774
    %1874 = vmatmul.bf16.gmra.mxu0 %v1631
    %v1875 = vpop.f32.mrf.mxu0
    %v1876 = vadd.f32 %v1670, %v1875
    %v1877 = vpop.f32.mrf.mxu0
    %v1878 = vadd.f32 %v1670, %v1877
    %1879 = vmatmul.bf16.gmra.mxu0 %v1632
    %v1880 = vpop.f32.mrf.mxu0
    %v1881 = vadd.f32 %v1670, %v1880
    %v1882 = vpop.f32.mrf.mxu0
    %v1883 = vadd.f32 %v1670, %v1882
    %1884 = vmatmul.bf16.gmra.mxu0 %v1633
    %v1885 = vpop.f32.mrf.mxu0
    %v1886 = vadd.f32 %v1670, %v1885
    %v1887 = vpop.f32.mrf.mxu0
    %v1888 = vadd.f32 %v1670, %v1887
    %1889 = vmatmul.bf16.gmra.mxu0 %v1634
    %v1890 = vpop.f32.mrf.mxu0
    %v1891 = vadd.f32 %v1670, %v1890
    %v1892 = vpop.f32.mrf.mxu0
    %v1893 = vadd.f32 %v1670, %v1892
    %1894 = vdwg.mxu0
    %1895 = vmatpush.bf16.msra.mxu0 %v1803
    %1896 = vmatpush.bf16.msra.mxu0 %v1799
    %1897 = vmatpush.bf16.msra.mxu0 %v1795
    %1898 = vmatpush.bf16.msra.mxu0 %v1791
    %1899 = vmatpush.bf16.msra.mxu0 %v1787
    %1900 = vmatpush.bf16.msra.mxu0 %v1783
    %1901 = vmatpush.bf16.msra.mxu0 %v1779
    %1902 = vmatpush.bf16.msra.mxu0 %v1775
    %1903 = vmatmul.bf16.gmra.mxu0 %v1631
    %v1904 = vpop.f32.mrf.mxu0
    %v1905 = vadd.f32 %v1671, %v1904
    %v1906 = vpop.f32.mrf.mxu0
    %v1907 = vadd.f32 %v1671, %v1906
    %1908 = vmatmul.bf16.gmra.mxu0 %v1632
    %v1909 = vpop.f32.mrf.mxu0
    %v1910 = vadd.f32 %v1671, %v1909
    %v1911 = vpop.f32.mrf.mxu0
    %v1912 = vadd.f32 %v1671, %v1911
    %1913 = vmatmul.bf16.gmra.mxu0 %v1633
    %v1914 = vpop.f32.mrf.mxu0
    %v1915 = vadd.f32 %v1671, %v1914
    %v1916 = vpop.f32.mrf.mxu0
    %v1917 = vadd.f32 %v1671, %v1916
    %1918 = vmatmul.bf16.gmra.mxu0 %v1634
    %v1919 = vpop.f32.mrf.mxu0
    %v1920 = vadd.f32 %v1671, %v1919
    %v1921 = vpop.f32.mrf.mxu0
    %v1922 = vadd.f32 %v1671, %v1921
    %1923 = vdwg.mxu0
    %1924 = vmatpush.bf16.msra.mxu0 %v1804
    %1925 = vmatpush.bf16.msra.mxu0 %v1800
    %1926 = vmatpush.bf16.msra.mxu0 %v1796
    %1927 = vmatpush.bf16.msra.mxu0 %v1792
    %1928 = vmatpush.bf16.msra.mxu0 %v1788
    %1929 = vmatpush.bf16.msra.mxu0 %v1784
    %1930 = vmatpush.bf16.msra.mxu0 %v1780
    %1931 = vmatpush.bf16.msra.mxu0 %v1776
    %1932 = vmatmul.bf16.gmra.mxu0 %v1631
    %v1933 = vpop.f32.mrf.mxu0
    %v1934 = vadd.f32 %v1672, %v1933
    %v1935 = vpop.f32.mrf.mxu0
    %v1936 = vadd.f32 %v1672, %v1935
    %1937 = vmatmul.bf16.gmra.mxu0 %v1632
    %v1938 = vpop.f32.mrf.mxu0
    %v1939 = vadd.f32 %v1672, %v1938
    %v1940 = vpop.f32.mrf.mxu0
    %v1941 = vadd.f32 %v1672, %v1940
    %1942 = vmatmul.bf16.gmra.mxu0 %v1633
    %v1943 = vpop.f32.mrf.mxu0
    %v1944 = vadd.f32 %v1672, %v1943
    %v1945 = vpop.f32.mrf.mxu0
    %v1946 = vadd.f32 %v1672, %v1945
    %1947 = vmatmul.bf16.gmra.mxu0 %v1634
    %v1948 = vpop.f32.mrf.mxu0
    %v1949 = vadd.f32 %v1672, %v1948
    %v1950 = vpop.f32.mrf.mxu0
    %v1951 = vadd.f32 %v1672, %v1950
    %1952 = vdwg.mxu0
    %v1953 = vmul.f32 %v1847, 0.5
    %v1954 = vmul.f32 %v1876, 0.5
    %v1955 = vmul.f32 %v1905, 0.5
    %v1956 = vmul.f32 %v1934, 0.5
    %v1957 = vmul.f32 %v1849, 0.5
    %v1958 = vmul.f32 %v1878, 0.5
    %v1959 = vmul.f32 %v1907, 0.5
    %v1960 = vmul.f32 %v1936, 0.5
    %v1961 = vmul.f32 %v1852, 0.5
    %v1962 = vmul.f32 %v1881, 0.5
    %v1963 = vmul.f32 %v1910, 0.5
    %v1964 = vmul.f32 %v1939, 0.5
    %v1965 = vmul.f32 %v1854, 0.5
    %v1966 = vmul.f32 %v1883, 0.5
    %v1967 = vmul.f32 %v1912, 0.5
    %v1968 = vmul.f32 %v1941, 0.5
    %v1969 = vmul.f32 %v1857, 0.5
    %v1970 = vmul.f32 %v1886, 0.5
    %v1971 = vmul.f32 %v1915, 0.5
    %v1972 = vmul.f32 %v1944, 0.5
    %v1973 = vmul.f32 %v1859, 0.5
    %v1974 = vmul.f32 %v1888, 0.5
    %v1975 = vmul.f32 %v1917, 0.5
    %v1976 = vmul.f32 %v1946, 0.5
    %v1977 = vmul.f32 %v1862, 0.5
    %v1978 = vmul.f32 %v1891, 0.5
    %v1979 = vmul.f32 %v1920, 0.5
    %v1980 = vmul.f32 %v1949, 0.5
    %v1981 = vmul.f32 %v1864, 0.5
    %v1982 = vmul.f32 %v1893, 0.5
    %v1983 = vmul.f32 %v1922, 0.5
    %v1984 = vmul.f32 %v1951, 0.5
    %v1985 = vmul.f32 %v1847, 0.044715
    %v1986 = vmul.f32 %v1876, 0.044715
    %v1987 = vmul.f32 %v1905, 0.044715
    %v1988 = vmul.f32 %v1934, 0.044715
    %v1989 = vmul.f32 %v1849, 0.044715
    %v1990 = vmul.f32 %v1878, 0.044715
    %v1991 = vmul.f32 %v1907, 0.044715
    %v1992 = vmul.f32 %v1936, 0.044715
    %v1993 = vmul.f32 %v1852, 0.044715
    %v1994 = vmul.f32 %v1881, 0.044715
    %v1995 = vmul.f32 %v1910, 0.044715
    %v1996 = vmul.f32 %v1939, 0.044715
    %v1997 = vmul.f32 %v1854, 0.044715
    %v1998 = vmul.f32 %v1883, 0.044715
    %v1999 = vmul.f32 %v1912, 0.044715
    %v2000 = vmul.f32 %v1941, 0.044715
    %v2001 = vmul.f32 %v1857, 0.044715
    %v2002 = vmul.f32 %v1886, 0.044715
    %v2003 = vmul.f32 %v1915, 0.044715
    %v2004 = vmul.f32 %v1944, 0.044715
    %v2005 = vmul.f32 %v1859, 0.044715
    %v2006 = vmul.f32 %v1888, 0.044715
    %v2007 = vmul.f32 %v1917, 0.044715
    %v2008 = vmul.f32 %v1946, 0.044715
    %v2009 = vmul.f32 %v1862, 0.044715
    %v2010 = vmul.f32 %v1891, 0.044715
    %v2011 = vmul.f32 %v1920, 0.044715
    %v2012 = vmul.f32 %v1949, 0.044715
    %v2013 = vmul.f32 %v1864, 0.044715
    %v2014 = vmul.f32 %v1893, 0.044715
    %v2015 = vmul.f32 %v1922, 0.044715
    %v2016 = vmul.f32 %v1951, 0.044715
    %v2017 = vmul.f32 %v1985, %v1847
    %v2018 = vmul.f32 %v1986, %v1876
    %v2019 = vmul.f32 %v1987, %v1905
    %v2020 = vmul.f32 %v1988, %v1934
    %v2021 = vmul.f32 %v1989, %v1849
    %v2022 = vmul.f32 %v1990, %v1878
    %v2023 = vmul.f32 %v1991, %v1907
    %v2024 = vmul.f32 %v1992, %v1936
    %v2025 = vmul.f32 %v1993, %v1852
    %v2026 = vmul.f32 %v1994, %v1881
    %v2027 = vmul.f32 %v1995, %v1910
    %v2028 = vmul.f32 %v1996, %v1939
    %v2029 = vmul.f32 %v1997, %v1854
    %v2030 = vmul.f32 %v1998, %v1883
    %v2031 = vmul.f32 %v1999, %v1912
    %v2032 = vmul.f32 %v2000, %v1941
    %v2033 = vmul.f32 %v2001, %v1857
    %v2034 = vmul.f32 %v2002, %v1886
    %v2035 = vmul.f32 %v2003, %v1915
    %v2036 = vmul.f32 %v2004, %v1944
    %v2037 = vmul.f32 %v2005, %v1859
    %v2038 = vmul.f32 %v2006, %v1888
    %v2039 = vmul.f32 %v2007, %v1917
    %v2040 = vmul.f32 %v2008, %v1946
    %v2041 = vmul.f32 %v2009, %v1862
    %v2042 = vmul.f32 %v2010, %v1891
    %v2043 = vmul.f32 %v2011, %v1920
    %v2044 = vmul.f32 %v2012, %v1949
    %v2045 = vmul.f32 %v2013, %v1864
    %v2046 = vmul.f32 %v2014, %v1893
    %v2047 = vmul.f32 %v2015, %v1922
    %v2048 = vmul.f32 %v2016, %v1951
    %v2049 = vmul.f32 %v2017, %v1847
    %v2050 = vmul.f32 %v2018, %v1876
    %v2051 = vmul.f32 %v2019, %v1905
    %v2052 = vmul.f32 %v2020, %v1934
    %v2053 = vmul.f32 %v2021, %v1849
    %v2054 = vmul.f32 %v2022, %v1878
    %v2055 = vmul.f32 %v2023, %v1907
    %v2056 = vmul.f32 %v2024, %v1936
    %v2057 = vmul.f32 %v2025, %v1852
    %v2058 = vmul.f32 %v2026, %v1881
    %v2059 = vmul.f32 %v2027, %v1910
    %v2060 = vmul.f32 %v2028, %v1939
    %v2061 = vmul.f32 %v2029, %v1854
    %v2062 = vmul.f32 %v2030, %v1883
    %v2063 = vmul.f32 %v2031, %v1912
    %v2064 = vmul.f32 %v2032, %v1941
    %v2065 = vmul.f32 %v2033, %v1857
    %v2066 = vmul.f32 %v2034, %v1886
    %v2067 = vmul.f32 %v2035, %v1915
    %v2068 = vmul.f32 %v2036, %v1944
    %v2069 = vmul.f32 %v2037, %v1859
    %v2070 = vmul.f32 %v2038, %v1888
    %v2071 = vmul.f32 %v2039, %v1917
    %v2072 = vmul.f32 %v2040, %v1946
    %v2073 = vmul.f32 %v2041, %v1862
    %v2074 = vmul.f32 %v2042, %v1891
    %v2075 = vmul.f32 %v2043, %v1920
    %v2076 = vmul.f32 %v2044, %v1949
    %v2077 = vmul.f32 %v2045, %v1864
    %v2078 = vmul.f32 %v2046, %v1893
    %v2079 = vmul.f32 %v2047, %v1922
    %v2080 = vmul.f32 %v2048, %v1951
    %v2081 = vadd.f32 %v1847, %v2049
    %v2082 = vadd.f32 %v1876, %v2050
    %v2083 = vadd.f32 %v1905, %v2051
    %v2084 = vadd.f32 %v1934, %v2052
    %v2085 = vadd.f32 %v1849, %v2053
    %v2086 = vadd.f32 %v1878, %v2054
    %v2087 = vadd.f32 %v1907, %v2055
    %v2088 = vadd.f32 %v1936, %v2056
    %v2089 = vadd.f32 %v1852, %v2057
    %v2090 = vadd.f32 %v1881, %v2058
    %v2091 = vadd.f32 %v1910, %v2059
    %v2092 = vadd.f32 %v1939, %v2060
    %v2093 = vadd.f32 %v1854, %v2061
    %v2094 = vadd.f32 %v1883, %v2062
    %v2095 = vadd.f32 %v1912, %v2063
    %v2096 = vadd.f32 %v1941, %v2064
    %v2097 = vadd.f32 %v1857, %v2065
    %v2098 = vadd.f32 %v1886, %v2066
    %v2099 = vadd.f32 %v1915, %v2067
    %v2100 = vadd.f32 %v1944, %v2068
    %v2101 = vadd.f32 %v1859, %v2069
    %v2102 = vadd.f32 %v1888, %v2070
    %v2103 = vadd.f32 %v1917, %v2071
    %v2104 = vadd.f32 %v1946, %v2072
    %v2105 = vadd.f32 %v1862, %v2073
    %v2106 = vadd.f32 %v1891, %v2074
    %v2107 = vadd.f32 %v1920, %v2075
    %v2108 = vadd.f32 %v1949, %v2076
    %v2109 = vadd.f32 %v1864, %v2077
    %v2110 = vadd.f32 %v1893, %v2078
    %v2111 = vadd.f32 %v1922, %v2079
    %v2112 = vadd.f32 %v1951, %v2080
    %v2113 = vmul.f32 %v2081, 0.7978846
    %v2114 = vmul.f32 %v2082, 0.7978846
    %v2115 = vmul.f32 %v2083, 0.7978846
    %v2116 = vmul.f32 %v2084, 0.7978846
    %v2117 = vmul.f32 %v2085, 0.7978846
    %v2118 = vmul.f32 %v2086, 0.7978846
    %v2119 = vmul.f32 %v2087, 0.7978846
    %v2120 = vmul.f32 %v2088, 0.7978846
    %v2121 = vmul.f32 %v2089, 0.7978846
    %v2122 = vmul.f32 %v2090, 0.7978846
    %v2123 = vmul.f32 %v2091, 0.7978846
    %v2124 = vmul.f32 %v2092, 0.7978846
    %v2125 = vmul.f32 %v2093, 0.7978846
    %v2126 = vmul.f32 %v2094, 0.7978846
    %v2127 = vmul.f32 %v2095, 0.7978846
    %v2128 = vmul.f32 %v2096, 0.7978846
    %v2129 = vmul.f32 %v2097, 0.7978846
    %v2130 = vmul.f32 %v2098, 0.7978846
    %v2131 = vmul.f32 %v2099, 0.7978846
    %v2132 = vmul.f32 %v2100, 0.7978846
    %v2133 = vmul.f32 %v2101, 0.7978846
    %v2134 = vmul.f32 %v2102, 0.7978846
    %v2135 = vmul.f32 %v2103, 0.7978846
    %v2136 = vmul.f32 %v2104, 0.7978846
    %v2137 = vmul.f32 %v2105, 0.7978846
    %v2138 = vmul.f32 %v2106, 0.7978846
    %v2139 = vmul.f32 %v2107, 0.7978846
    %v2140 = vmul.f32 %v2108, 0.7978846
    %v2141 = vmul.f32 %v2109, 0.7978846
    %v2142 = vmul.f32 %v2110, 0.7978846
    %v2143 = vmul.f32 %v2111, 0.7978846
    %v2144 = vmul.f32 %v2112, 0.7978846
    %v2145 = vtanh.pop %v2113
    %v2146 = vtanh.pop %v2114
    %v2147 = vtanh.pop %v2115
    %v2148 = vtanh.pop %v2116
    %v2149 = vtanh.pop %v2117
    %v2150 = vtanh.pop %v2118
    %v2151 = vtanh.pop %v2119
    %v2152 = vtanh.pop %v2120
    %v2153 = vtanh.pop %v2121
    %v2154 = vtanh.pop %v2122
    %v2155 = vtanh.pop %v2123
    %v2156 = vtanh.pop %v2124
    %v2157 = vtanh.pop %v2125
    %v2158 = vtanh.pop %v2126
    %v2159 = vtanh.pop %v2127
    %v2160 = vtanh.pop %v2128
    %v2161 = vtanh.pop %v2129
    %v2162 = vtanh.pop %v2130
    %v2163 = vtanh.pop %v2131
    %v2164 = vtanh.pop %v2132
    %v2165 = vtanh.pop %v2133
    %v2166 = vtanh.pop %v2134
    %v2167 = vtanh.pop %v2135
    %v2168 = vtanh.pop %v2136
    %v2169 = vtanh.pop %v2137
    %v2170 = vtanh.pop %v2138
    %v2171 = vtanh.pop %v2139
    %v2172 = vtanh.pop %v2140
    %v2173 = vtanh.pop %v2141
    %v2174 = vtanh.pop %v2142
    %v2175 = vtanh.pop %v2143
    %v2176 = vtanh.pop %v2144
    %v2177 = vadd.f32 %v2145, 1.0
    %v2178 = vadd.f32 %v2146, 1.0
    %v2179 = vadd.f32 %v2147, 1.0
    %v2180 = vadd.f32 %v2148, 1.0
    %v2181 = vadd.f32 %v2149, 1.0
    %v2182 = vadd.f32 %v2150, 1.0
    %v2183 = vadd.f32 %v2151, 1.0
    %v2184 = vadd.f32 %v2152, 1.0
    %v2185 = vadd.f32 %v2153, 1.0
    %v2186 = vadd.f32 %v2154, 1.0
    %v2187 = vadd.f32 %v2155, 1.0
    %v2188 = vadd.f32 %v2156, 1.0
    %v2189 = vadd.f32 %v2157, 1.0
    %v2190 = vadd.f32 %v2158, 1.0
    %v2191 = vadd.f32 %v2159, 1.0
    %v2192 = vadd.f32 %v2160, 1.0
    %v2193 = vadd.f32 %v2161, 1.0
    %v2194 = vadd.f32 %v2162, 1.0
    %v2195 = vadd.f32 %v2163, 1.0
    %v2196 = vadd.f32 %v2164, 1.0
    %v2197 = vadd.f32 %v2165, 1.0
    %v2198 = vadd.f32 %v2166, 1.0
    %v2199 = vadd.f32 %v2167, 1.0
    %v2200 = vadd.f32 %v2168, 1.0
    %v2201 = vadd.f32 %v2169, 1.0
    %v2202 = vadd.f32 %v2170, 1.0
    %v2203 = vadd.f32 %v2171, 1.0
    %v2204 = vadd.f32 %v2172, 1.0
    %v2205 = vadd.f32 %v2173, 1.0
    %v2206 = vadd.f32 %v2174, 1.0
    %v2207 = vadd.f32 %v2175, 1.0
    %v2208 = vadd.f32 %v2176, 1.0
    %v2209 = vmul.f32 %v1953, %v2177
    %v2210 = vmul.f32 %v1954, %v2178
    %v2211 = vmul.f32 %v1955, %v2179
    %v2212 = vmul.f32 %v1956, %v2180
    %v2213 = vmul.f32 %v1957, %v2181
    %v2214 = vmul.f32 %v1958, %v2182
    %v2215 = vmul.f32 %v1959, %v2183
    %v2216 = vmul.f32 %v1960, %v2184
    %v2217 = vmul.f32 %v1961, %v2185
    %v2218 = vmul.f32 %v1962, %v2186
    %v2219 = vmul.f32 %v1963, %v2187
    %v2220 = vmul.f32 %v1964, %v2188
    %v2221 = vmul.f32 %v1965, %v2189
    %v2222 = vmul.f32 %v1966, %v2190
    %v2223 = vmul.f32 %v1967, %v2191
    %v2224 = vmul.f32 %v1968, %v2192
    %v2225 = vmul.f32 %v1969, %v2193
    %v2226 = vmul.f32 %v1970, %v2194
    %v2227 = vmul.f32 %v1971, %v2195
    %v2228 = vmul.f32 %v1972, %v2196
    %v2229 = vmul.f32 %v1973, %v2197
    %v2230 = vmul.f32 %v1974, %v2198
    %v2231 = vmul.f32 %v1975, %v2199
    %v2232 = vmul.f32 %v1976, %v2200
    %v2233 = vmul.f32 %v1977, %v2201
    %v2234 = vmul.f32 %v1978, %v2202
    %v2235 = vmul.f32 %v1979, %v2203
    %v2236 = vmul.f32 %v1980, %v2204
    %v2237 = vmul.f32 %v1981, %v2205
    %v2238 = vmul.f32 %v1982, %v2206
    %v2239 = vmul.f32 %v1983, %v2207
    %v2240 = vmul.f32 %v1984, %v2208
    %v2241 = vpack.c.bf16 %v2213, %v2209
    %v2242 = vpack.c.bf16 %v2214, %v2210
    %v2243 = vpack.c.bf16 %v2215, %v2211
    %v2244 = vpack.c.bf16 %v2216, %v2212
    %v2245 = vpack.c.bf16 %v2221, %v2217
    %v2246 = vpack.c.bf16 %v2222, %v2218
    %v2247 = vpack.c.bf16 %v2223, %v2219
    %v2248 = vpack.c.bf16 %v2224, %v2220
    %v2249 = vpack.c.bf16 %v2229, %v2225
    %v2250 = vpack.c.bf16 %v2230, %v2226
    %v2251 = vpack.c.bf16 %v2231, %v2227
    %v2252 = vpack.c.bf16 %v2232, %v2228
    %v2253 = vpack.c.bf16 %v2237, %v2233
    %v2254 = vpack.c.bf16 %v2238, %v2234
    %v2255 = vpack.c.bf16 %v2239, %v2235
    %v2256 = vpack.c.bf16 %v2240, %v2236
    %v2257 = vld [vmem:[#allocation7] sm:$0xf]
    %v2258 = vld [vmem:[#allocation7 + $0x4] sm:$0xf]
    %v2259 = vld [vmem:[#allocation7 + $0x8] sm:$0xf]
    %v2260 = vld [vmem:[#allocation7 + $0xc] sm:$0xf]
    %v2261 = vld [vmem:[#allocation7 + $0x10] sm:$0xf]
    %v2262 = vld [vmem:[#allocation7 + $0x14] sm:$0xf]
    %v2263 = vld [vmem:[#allocation7 + $0x18] sm:$0xf]
    %v2264 = vld [vmem:[#allocation7 + $0x1c] sm:$0xf]
    %v2265 = vld [vmem:[#allocation7 + $0x20] sm:$0xf]
    %v2266 = vld [vmem:[#allocation7 + $0x24] sm:$0xf]
    %v2267 = vld [vmem:[#allocation7 + $0x28] sm:$0xf]
    %v2268 = vld [vmem:[#allocation7 + $0x2c] sm:$0xf]
    %v2269 = vld [vmem:[#allocation7 + $0x30] sm:$0xf]
    %v2270 = vld [vmem:[#allocation7 + $0x34] sm:$0xf]
    %v2271 = vld [vmem:[#allocation7 + $0x38] sm:$0xf]
    %v2272 = vld [vmem:[#allocation7 + $0x3c] sm:$0xf]
    %v2273 = vld [vmem:[#allocation7 + $0x40] sm:$0xf]
    %v2274 = vld [vmem:[#allocation7 + $0x44] sm:$0xf]
    %v2275 = vld [vmem:[#allocation7 + $0x48] sm:$0xf]
    %v2276 = vld [vmem:[#allocation7 + $0x4c] sm:$0xf]
    %v2277 = vld [vmem:[#allocation7 + $0x50] sm:$0xf]
    %v2278 = vld [vmem:[#allocation7 + $0x54] sm:$0xf]
    %v2279 = vld [vmem:[#allocation7 + $0x58] sm:$0xf]
    %v2280 = vld [vmem:[#allocation7 + $0x5c] sm:$0xf]
    %v2281 = vld [vmem:[#allocation7 + $0x60] sm:$0xf]
    %v2282 = vld [vmem:[#allocation7 + $0x64] sm:$0xf]
    %v2283 = vld [vmem:[#allocation7 + $0x68] sm:$0xf]
    %v2284 = vld [vmem:[#allocation7 + $0x6c] sm:$0xf]
    %v2285 = vld [vmem:[#allocation7 + $0x70] sm:$0xf]
    %v2286 = vld [vmem:[#allocation7 + $0x74] sm:$0xf]
    %v2287 = vld [vmem:[#allocation7 + $0x78] sm:$0xf]
    %v2288 = vld [vmem:[#allocation7 + $0x7c] sm:$0xf]
    %v2289 = vld [vmem:[#allocation7 + $0x80] sm:$0xf]
    %v2290 = vld [vmem:[#allocation7 + $0x84] sm:$0xf]
    %v2291 = vld [vmem:[#allocation7 + $0x88] sm:$0xf]
    %v2292 = vld [vmem:[#allocation7 + $0x8c] sm:$0xf]
    %v2293 = vld [vmem:[#allocation7 + $0x90] sm:$0xf]
    %v2294 = vld [vmem:[#allocation7 + $0x94] sm:$0xf]
    %v2295 = vld [vmem:[#allocation7 + $0x98] sm:$0xf]
    %v2296 = vld [vmem:[#allocation7 + $0x9c] sm:$0xf]
    %v2297 = vld [vmem:[#allocation7 + $0xa0] sm:$0xf]
    %v2298 = vld [vmem:[#allocation7 + $0xa4] sm:$0xf]
    %v2299 = vld [vmem:[#allocation7 + $0xa8] sm:$0xf]
    %v2300 = vld [vmem:[#allocation7 + $0xac] sm:$0xf]
    %v2301 = vld [vmem:[#allocation7 + $0xb0] sm:$0xf]
    %v2302 = vld [vmem:[#allocation7 + $0xb4] sm:$0xf]
    %v2303 = vld [vmem:[#allocation7 + $0xb8] sm:$0xf]
    %v2304 = vld [vmem:[#allocation7 + $0xbc] sm:$0xf]
    %v2305 = vld [vmem:[#allocation7 + $0xc0] sm:$0xf]
    %v2306 = vld [vmem:[#allocation7 + $0xc4] sm:$0xf]
    %v2307 = vld [vmem:[#allocation7 + $0xc8] sm:$0xf]
    %v2308 = vld [vmem:[#allocation7 + $0xcc] sm:$0xf]
    %v2309 = vld [vmem:[#allocation7 + $0xd0] sm:$0xf]
    %v2310 = vld [vmem:[#allocation7 + $0xd4] sm:$0xf]
    %v2311 = vld [vmem:[#allocation7 + $0xd8] sm:$0xf]
    %v2312 = vld [vmem:[#allocation7 + $0xdc] sm:$0xf]
    %v2313 = vld [vmem:[#allocation7 + $0xe0] sm:$0xf]
    %v2314 = vld [vmem:[#allocation7 + $0xe4] sm:$0xf]
    %v2315 = vld [vmem:[#allocation7 + $0xe8] sm:$0xf]
    %v2316 = vld [vmem:[#allocation7 + $0xec] sm:$0xf]
    %v2317 = vld [vmem:[#allocation7 + $0xf0] sm:$0xf]
    %v2318 = vld [vmem:[#allocation7 + $0xf4] sm:$0xf]
    %v2319 = vld [vmem:[#allocation7 + $0xf8] sm:$0xf]
    %v2320 = vld [vmem:[#allocation7 + $0xfc] sm:$0xf]
    %v2321 = vld [vmem:[%s16] sm:$0x1]
    %v2323 = vperm.slane %v2321, 0
    %v2389 = vunpack.c.l.b16 %v2257
    %v2390 = vunpack.c.l.b16 %v2258
    %v2391 = vunpack.c.l.b16 %v2259
    %v2392 = vunpack.c.l.b16 %v2260
    %v2393 = vunpack.c.l.b16 %v2261
    %v2394 = vunpack.c.l.b16 %v2262
    %v2395 = vunpack.c.l.b16 %v2263
    %v2396 = vunpack.c.l.b16 %v2264
    %v2397 = vunpack.c.l.b16 %v2265
    %v2398 = vunpack.c.l.b16 %v2266
    %v2399 = vunpack.c.l.b16 %v2267
    %v2400 = vunpack.c.l.b16 %v2268
    %v2401 = vunpack.c.l.b16 %v2269
    %v2402 = vunpack.c.l.b16 %v2270
    %v2403 = vunpack.c.l.b16 %v2271
    %v2404 = vunpack.c.l.b16 %v2272
    %v2405 = vunpack.c.l.b16 %v2273
    %v2406 = vunpack.c.l.b16 %v2274
    %v2407 = vunpack.c.l.b16 %v2275
    %v2408 = vunpack.c.l.b16 %v2276
    %v2409 = vunpack.c.l.b16 %v2277
    %v2410 = vunpack.c.l.b16 %v2278
    %v2411 = vunpack.c.l.b16 %v2279
    %v2412 = vunpack.c.l.b16 %v2280
    %v2413 = vunpack.c.l.b16 %v2281
    %v2414 = vunpack.c.l.b16 %v2282
    %v2415 = vunpack.c.l.b16 %v2283
    %v2416 = vunpack.c.l.b16 %v2284
    %v2417 = vunpack.c.l.b16 %v2285
    %v2418 = vunpack.c.l.b16 %v2286
    %v2419 = vunpack.c.l.b16 %v2287
    %v2420 = vunpack.c.l.b16 %v2288
    %v2421 = vunpack.c.l.b16 %v2289
    %v2422 = vunpack.c.l.b16 %v2290
    %v2423 = vunpack.c.l.b16 %v2291
    %v2424 = vunpack.c.l.b16 %v2292
    %v2425 = vunpack.c.l.b16 %v2293
    %v2426 = vunpack.c.l.b16 %v2294
    %v2427 = vunpack.c.l.b16 %v2295
    %v2428 = vunpack.c.l.b16 %v2296
    %v2429 = vunpack.c.l.b16 %v2297
    %v2430 = vunpack.c.l.b16 %v2298
    %v2431 = vunpack.c.l.b16 %v2299
    %v2432 = vunpack.c.l.b16 %v2300
    %v2433 = vunpack.c.l.b16 %v2301
    %v2434 = vunpack.c.l.b16 %v2302
    %v2435 = vunpack.c.l.b16 %v2303
    %v2436 = vunpack.c.l.b16 %v2304
    %v2437 = vunpack.c.l.b16 %v2305
    %v2438 = vunpack.c.l.b16 %v2306
    %v2439 = vunpack.c.l.b16 %v2307
    %v2440 = vunpack.c.l.b16 %v2308
    %v2441 = vunpack.c.l.b16 %v2309
    %v2442 = vunpack.c.l.b16 %v2310
    %v2443 = vunpack.c.l.b16 %v2311
    %v2444 = vunpack.c.l.b16 %v2312
    %v2445 = vunpack.c.l.b16 %v2313
    %v2446 = vunpack.c.l.b16 %v2314
    %v2447 = vunpack.c.l.b16 %v2315
    %v2448 = vunpack.c.l.b16 %v2316
    %v2449 = vunpack.c.l.b16 %v2317
    %v2450 = vunpack.c.l.b16 %v2318
    %v2451 = vunpack.c.l.b16 %v2319
    %v2452 = vunpack.c.l.b16 %v2320
    %v2453 = vpack.c.b16 %v2390, %v2389
    %v2454 = vpack.c.b16 %v2392, %v2391
    %v2455 = vpack.c.b16 %v2394, %v2393
    %v2456 = vpack.c.b16 %v2396, %v2395
    %v2457 = vpack.c.b16 %v2398, %v2397
    %v2458 = vpack.c.b16 %v2400, %v2399
    %v2459 = vpack.c.b16 %v2402, %v2401
    %v2460 = vpack.c.b16 %v2404, %v2403
    %v2461 = vpack.c.b16 %v2406, %v2405
    %v2462 = vpack.c.b16 %v2408, %v2407
    %v2463 = vpack.c.b16 %v2410, %v2409
    %v2464 = vpack.c.b16 %v2412, %v2411
    %v2465 = vpack.c.b16 %v2414, %v2413
    %v2466 = vpack.c.b16 %v2416, %v2415
    %v2467 = vpack.c.b16 %v2418, %v2417
    %v2468 = vpack.c.b16 %v2420, %v2419
    %v2469 = vpack.c.b16 %v2422, %v2421
    %v2470 = vpack.c.b16 %v2424, %v2423
    %v2471 = vpack.c.b16 %v2426, %v2425
    %v2472 = vpack.c.b16 %v2428, %v2427
    %v2473 = vpack.c.b16 %v2430, %v2429
    %v2474 = vpack.c.b16 %v2432, %v2431
    %v2475 = vpack.c.b16 %v2434, %v2433
    %v2476 = vpack.c.b16 %v2436, %v2435
    %v2477 = vpack.c.b16 %v2438, %v2437
    %v2478 = vpack.c.b16 %v2440, %v2439
    %v2479 = vpack.c.b16 %v2442, %v2441
    %v2480 = vpack.c.b16 %v2444, %v2443
    %v2481 = vpack.c.b16 %v2446, %v2445
    %v2482 = vpack.c.b16 %v2448, %v2447
    %v2483 = vpack.c.b16 %v2450, %v2449
    %v2484 = vpack.c.b16 %v2452, %v2451
    %2517 = vmatpush.bf16.msra.mxu0 %v2460
    %2518 = vmatpush.bf16.msra.mxu0 %v2459
    %2519 = vmatpush.bf16.msra.mxu0 %v2458
    %2520 = vmatpush.bf16.msra.mxu0 %v2457
    %2521 = vmatpush.bf16.msra.mxu0 %v2456
    %2522 = vmatpush.bf16.msra.mxu0 %v2455
    %2523 = vmatpush.bf16.msra.mxu0 %v2454
    %2524 = vmatpush.bf16.msra.mxu0 %v2453
    %2525 = vmatmul.bf16.gmra.mxu0 %v2241
    %v2526 = vpop.f32.mrf.mxu0
    %v2527 = vadd.f32 %v2323, %v2526
    %v2528 = vpop.f32.mrf.mxu0
    %v2529 = vadd.f32 %v2323, %v2528
    %2530 = vmatmul.bf16.gmra.mxu0 %v2245
    %v2531 = vpop.f32.mrf.mxu0
    %v2532 = vadd.f32 %v2323, %v2531
    %v2533 = vpop.f32.mrf.mxu0
    %v2534 = vadd.f32 %v2323, %v2533
    %2535 = vmatmul.bf16.gmra.mxu0 %v2249
    %v2536 = vpop.f32.mrf.mxu0
    %v2537 = vadd.f32 %v2323, %v2536
    %v2538 = vpop.f32.mrf.mxu0
    %v2539 = vadd.f32 %v2323, %v2538
    %2540 = vmatmul.bf16.gmra.mxu0 %v2253
    %v2541 = vpop.f32.mrf.mxu0
    %v2542 = vadd.f32 %v2323, %v2541
    %v2543 = vpop.f32.mrf.mxu0
    %v2544 = vadd.f32 %v2323, %v2543
    %2545 = vdwg.mxu0
    %2546 = vmatpush.bf16.msra.mxu0 %v2468
    %2547 = vmatpush.bf16.msra.mxu0 %v2467
    %2548 = vmatpush.bf16.msra.mxu0 %v2466
    %2549 = vmatpush.bf16.msra.mxu0 %v2465
    %2550 = vmatpush.bf16.msra.mxu0 %v2464
    %2551 = vmatpush.bf16.msra.mxu0 %v2463
    %2552 = vmatpush.bf16.msra.mxu0 %v2462
    %2553 = vmatpush.bf16.msra.mxu0 %v2461
    %2554 = vmatmul.bf16.gmra.mxu0 %v2242
    %v2555 = vpop.f32.mrf.mxu0
    %v2556 = vadd.f32 %v2527, %v2555
    %v2557 = vpop.f32.mrf.mxu0
    %v2558 = vadd.f32 %v2529, %v2557
    %2559 = vmatmul.bf16.gmra.mxu0 %v2246
    %v2560 = vpop.f32.mrf.mxu0
    %v2561 = vadd.f32 %v2532, %v2560
    %v2562 = vpop.f32.mrf.mxu0
    %v2563 = vadd.f32 %v2534, %v2562
    %2564 = vmatmul.bf16.gmra.mxu0 %v2250
    %v2565 = vpop.f32.mrf.mxu0
    %v2566 = vadd.f32 %v2537, %v2565
    %v2567 = vpop.f32.mrf.mxu0
    %v2568 = vadd.f32 %v2539, %v2567
    %2569 = vmatmul.bf16.gmra.mxu0 %v2254
    %v2570 = vpop.f32.mrf.mxu0
    %v2571 = vadd.f32 %v2542, %v2570
    %v2572 = vpop.f32.mrf.mxu0
    %v2573 = vadd.f32 %v2544, %v2572
    %2574 = vdwg.mxu0
    %2575 = vmatpush.bf16.msra.mxu0 %v2476
    %2576 = vmatpush.bf16.msra.mxu0 %v2475
    %2577 = vmatpush.bf16.msra.mxu0 %v2474
    %2578 = vmatpush.bf16.msra.mxu0 %v2473
    %2579 = vmatpush.bf16.msra.mxu0 %v2472
    %2580 = vmatpush.bf16.msra.mxu0 %v2471
    %2581 = vmatpush.bf16.msra.mxu0 %v2470
    %2582 = vmatpush.bf16.msra.mxu0 %v2469
    %2583 = vmatmul.bf16.gmra.mxu0 %v2243
    %v2584 = vpop.f32.mrf.mxu0
    %v2585 = vadd.f32 %v2556, %v2584
    %v2586 = vpop.f32.mrf.mxu0
    %v2587 = vadd.f32 %v2558, %v2586
    %2588 = vmatmul.bf16.gmra.mxu0 %v2247
    %v2589 = vpop.f32.mrf.mxu0
    %v2590 = vadd.f32 %v2561, %v2589
    %v2591 = vpop.f32.mrf.mxu0
    %v2592 = vadd.f32 %v2563, %v2591
    %2593 = vmatmul.bf16.gmra.mxu0 %v2251
    %v2594 = vpop.f32.mrf.mxu0
    %v2595 = vadd.f32 %v2566, %v2594
    %v2596 = vpop.f32.mrf.mxu0
    %v2597 = vadd.f32 %v2568, %v2596
    %2598 = vmatmul.bf16.gmra.mxu0 %v2255
    %v2599 = vpop.f32.mrf.mxu0
    %v2600 = vadd.f32 %v2571, %v2599
    %v2601 = vpop.f32.mrf.mxu0
    %v2602 = vadd.f32 %v2573, %v2601
    %2603 = vdwg.mxu0
    %2604 = vmatpush.bf16.msra.mxu0 %v2484
    %2605 = vmatpush.bf16.msra.mxu0 %v2483
    %2606 = vmatpush.bf16.msra.mxu0 %v2482
    %2607 = vmatpush.bf16.msra.mxu0 %v2481
    %2608 = vmatpush.bf16.msra.mxu0 %v2480
    %2609 = vmatpush.bf16.msra.mxu0 %v2479
    %2610 = vmatpush.bf16.msra.mxu0 %v2478
    %2611 = vmatpush.bf16.msra.mxu0 %v2477
    %2612 = vmatmul.bf16.gmra.mxu0 %v2244
    %v2613 = vpop.f32.mrf.mxu0
    %v2614 = vadd.f32 %v2585, %v2613
    %v2615 = vpop.f32.mrf.mxu0
    %v2616 = vadd.f32 %v2587, %v2615
    %2617 = vmatmul.bf16.gmra.mxu0 %v2248
    %v2618 = vpop.f32.mrf.mxu0
    %v2619 = vadd.f32 %v2590, %v2618
    %v2620 = vpop.f32.mrf.mxu0
    %v2621 = vadd.f32 %v2592, %v2620
    %2622 = vmatmul.bf16.gmra.mxu0 %v2252
    %v2623 = vpop.f32.mrf.mxu0
    %v2624 = vadd.f32 %v2595, %v2623
    %v2625 = vpop.f32.mrf.mxu0
    %v2626 = vadd.f32 %v2597, %v2625
    %2627 = vmatmul.bf16.gmra.mxu0 %v2256
    %v2628 = vpop.f32.mrf.mxu0
    %v2629 = vadd.f32 %v2600, %v2628
    %v2630 = vpop.f32.mrf.mxu0
    %v2631 = vadd.f32 %v2602, %v2630
    %2632 = vdwg.mxu0
    %v2633 = vadd.f32 %v2614, %v1623
    %v2634 = vadd.f32 %v2616, %v1624
    %v2635 = vadd.f32 %v2619, %v1625
    %v2636 = vadd.f32 %v2621, %v1626
    %v2637 = vadd.f32 %v2624, %v1627
    %v2638 = vadd.f32 %v2626, %v1628
    %v2639 = vadd.f32 %v2629, %v1629
    %v2640 = vadd.f32 %v2631, %v1630
    %v2641 = vld [vmem:[%s17] sm:$0x1]
    %v2642 = vld [vmem:[%s18] sm:$0x1]
    %2643 = vadd.xlane.f32.xlu0 %v2633
    %v2644 = vpop.xlane.xlu0 %2643
    %2645 = vadd.xlane.f32.xlu0 %v2634
    %v2646 = vpop.xlane.xlu0 %2645
    %2647 = vadd.xlane.f32.xlu0 %v2635
    %v2648 = vpop.xlane.xlu0 %2647
    %2649 = vadd.xlane.f32.xlu0 %v2636
    %v2650 = vpop.xlane.xlu0 %2649
    %2651 = vadd.xlane.f32.xlu0 %v2637
    %v2652 = vpop.xlane.xlu0 %2651
    %2653 = vadd.xlane.f32.xlu0 %v2638
    %v2654 = vpop.xlane.xlu0 %2653
    %2655 = vadd.xlane.f32.xlu0 %v2639
    %v2656 = vpop.xlane.xlu0 %2655
    %2657 = vadd.xlane.f32.xlu0 %v2640
    %v2658 = vpop.xlane.xlu0 %2657
    %v2659 = vmul.f32 %v2644, %v314
    %v2660 = vmul.f32 %v2646, %v314
    %v2661 = vmul.f32 %v2648, %v314
    %v2662 = vmul.f32 %v2650, %v314
    %v2663 = vmul.f32 %v2652, %v314
    %v2664 = vmul.f32 %v2654, %v314
    %v2665 = vmul.f32 %v2656, %v314
    %v2666 = vmul.f32 %v2658, %v314
    %v2667 = vsub.f32 %v2633, %v2659
    %v2668 = vsub.f32 %v2634, %v2660
    %v2669 = vsub.f32 %v2635, %v2661
    %v2670 = vsub.f32 %v2636, %v2662
    %v2671 = vsub.f32 %v2637, %v2663
    %v2672 = vsub.f32 %v2638, %v2664
    %v2673 = vsub.f32 %v2639, %v2665
    %v2674 = vsub.f32 %v2640, %v2666
    %v2675 = vmul.f32 %v2667, %v2667
    %v2676 = vmul.f32 %v2668, %v2668
    %v2677 = vmul.f32 %v2669, %v2669
    %v2678 = vmul.f32 %v2670, %v2670
    %v2679 = vmul.f32 %v2671, %v2671
    %v2680 = vmul.f32 %v2672, %v2672
    %v2681 = vmul.f32 %v2673, %v2673
    %v2682 = vmul.f32 %v2674, %v2674
    %2683 = vadd.xlane.f32.xlu0 %v2675
    %v2684 = vpop.xlane.xlu0 %2683
    %2685 = vadd.xlane.f32.xlu0 %v2676
    %v2686 = vpop.xlane.xlu0 %2685
    %2687 = vadd.xlane.f32.xlu0 %v2677
    %v2688 = vpop.xlane.xlu0 %2687
    %2689 = vadd.xlane.f32.xlu0 %v2678
    %v2690 = vpop.xlane.xlu0 %2689
    %2691 = vadd.xlane.f32.xlu0 %v2679
    %v2692 = vpop.xlane.xlu0 %2691
    %2693 = vadd.xlane.f32.xlu0 %v2680
    %v2694 = vpop.xlane.xlu0 %2693
    %2695 = vadd.xlane.f32.xlu0 %v2681
    %v2696 = vpop.xlane.xlu0 %2695
    %2697 = vadd.xlane.f32.xlu0 %v2682
    %v2698 = vpop.xlane.xlu0 %2697
    %v2699 = vmul.f32 %v2684, %v314
    %v2700 = vmul.f32 %v2686, %v314
    %v2701 = vmul.f32 %v2688, %v314
    %v2702 = vmul.f32 %v2690, %v314
    %v2703 = vmul.f32 %v2692, %v314
    %v2704 = vmul.f32 %v2694, %v314
    %v2705 = vmul.f32 %v2696, %v314
    %v2706 = vmul.f32 %v2698, %v314
    %v2707 = vadd.f32 %v2699, 1e-12
    %v2708 = vadd.f32 %v2700, 1e-12
    %v2709 = vadd.f32 %v2701, 1e-12
    %v2710 = vadd.f32 %v2702, 1e-12
    %v2711 = vadd.f32 %v2703, 1e-12
    %v2712 = vadd.f32 %v2704, 1e-12
    %v2713 = vadd.f32 %v2705, 1e-12
    %v2714 = vadd.f32 %v2706, 1e-12
    %v2715 = vrsqrt.pop %v2707
    %v2716 = vmul.f32 %v2715, %v2707
    %v2717 = vmul.f32 %v2716, %v2715
    %v2718 = vmul.f32 0.5, %v2717
    %v2719 = vsub.f32 1.5, %v2718
    %v2720 = vmul.f32 %v2715, %v2719
    %vm2721 = vweird.f32 %v2707
    %vm2722 = vweird.f32 %v2715
    %vm2723 = vmor %vm2721, %vm2722
    %v2724 = vsel %vm2723, %v2715, %v2720
    %v2725 = vrsqrt.pop %v2708
    %v2726 = vmul.f32 %v2725, %v2708
    %v2727 = vmul.f32 %v2726, %v2725
    %v2728 = vmul.f32 0.5, %v2727
    %v2729 = vsub.f32 1.5, %v2728
    %v2730 = vmul.f32 %v2725, %v2729
    %vm2731 = vweird.f32 %v2708
    %vm2732 = vweird.f32 %v2725
    %vm2733 = vmor %vm2731, %vm2732
    %v2734 = vsel %vm2733, %v2725, %v2730
    %v2735 = vrsqrt.pop %v2709
    %v2736 = vmul.f32 %v2735, %v2709
    %v2737 = vmul.f32 %v2736, %v2735
    %v2738 = vmul.f32 0.5, %v2737
    %v2739 = vsub.f32 1.5, %v2738
    %v2740 = vmul.f32 %v2735, %v2739
    %vm2741 = vweird.f32 %v2709
    %vm2742 = vweird.f32 %v2735
    %vm2743 = vmor %vm2741, %vm2742
    %v2744 = vsel %vm2743, %v2735, %v2740
    %v2745 = vrsqrt.pop %v2710
    %v2746 = vmul.f32 %v2745, %v2710
    %v2747 = vmul.f32 %v2746, %v2745
    %v2748 = vmul.f32 0.5, %v2747
    %v2749 = vsub.f32 1.5, %v2748
    %v2750 = vmul.f32 %v2745, %v2749
    %vm2751 = vweird.f32 %v2710
    %vm2752 = vweird.f32 %v2745
    %vm2753 = vmor %vm2751, %vm2752
    %v2754 = vsel %vm2753, %v2745, %v2750
    %v2755 = vrsqrt.pop %v2711
    %v2756 = vmul.f32 %v2755, %v2711
    %v2757 = vmul.f32 %v2756, %v2755
    %v2758 = vmul.f32 0.5, %v2757
    %v2759 = vsub.f32 1.5, %v2758
    %v2760 = vmul.f32 %v2755, %v2759
    %vm2761 = vweird.f32 %v2711
    %vm2762 = vweird.f32 %v2755
    %vm2763 = vmor %vm2761, %vm2762
    %v2764 = vsel %vm2763, %v2755, %v2760
    %v2765 = vrsqrt.pop %v2712
    %v2766 = vmul.f32 %v2765, %v2712
    %v2767 = vmul.f32 %v2766, %v2765
    %v2768 = vmul.f32 0.5, %v2767
    %v2769 = vsub.f32 1.5, %v2768
    %v2770 = vmul.f32 %v2765, %v2769
    %vm2771 = vweird.f32 %v2712
    %vm2772 = vweird.f32 %v2765
    %vm2773 = vmor %vm2771, %vm2772
    %v2774 = vsel %vm2773, %v2765, %v2770
    %v2775 = vrsqrt.pop %v2713
    %v2776 = vmul.f32 %v2775, %v2713
    %v2777 = vmul.f32 %v2776, %v2775
    %v2778 = vmul.f32 0.5, %v2777
    %v2779 = vsub.f32 1.5, %v2778
    %v2780 = vmul.f32 %v2775, %v2779
    %vm2781 = vweird.f32 %v2713
    %vm2782 = vweird.f32 %v2775
    %vm2783 = vmor %vm2781, %vm2782
    %v2784 = vsel %vm2783, %v2775, %v2780
    %v2785 = vrsqrt.pop %v2714
    %v2786 = vmul.f32 %v2785, %v2714
    %v2787 = vmul.f32 %v2786, %v2785
    %v2788 = vmul.f32 0.5, %v2787
    %v2789 = vsub.f32 1.5, %v2788
    %v2790 = vmul.f32 %v2785, %v2789
    %vm2791 = vweird.f32 %v2714
    %vm2792 = vweird.f32 %v2785
    %vm2793 = vmor %vm2791, %vm2792
    %v2794 = vsel %vm2793, %v2785, %v2790
    %v2795 = vmul.f32 %v2667, %v2724
    %v2796 = vmul.f32 %v2668, %v2734
    %v2797 = vmul.f32 %v2669, %v2744
    %v2798 = vmul.f32 %v2670, %v2754
    %v2799 = vmul.f32 %v2671, %v2764
    %v2800 = vmul.f32 %v2672, %v2774
    %v2801 = vmul.f32 %v2673, %v2784
    %v2802 = vmul.f32 %v2674, %v2794
    %v2804 = vperm.slane %v2641, 0
    %v2806 = vmul.f32 %v2795, %v2804
    %v2807 = vmul.f32 %v2796, %v2804
    %v2808 = vmul.f32 %v2797, %v2804
    %v2809 = vmul.f32 %v2798, %v2804
    %v2810 = vmul.f32 %v2799, %v2804
    %v2811 = vmul.f32 %v2800, %v2804
    %v2812 = vmul.f32 %v2801, %v2804
    %v2813 = vmul.f32 %v2802, %v2804
    %v2815 = vperm.slane %v2642, 0
    %v2817 = vadd.f32 %v2806, %v2815
    %v2818 = vadd.f32 %v2807, %v2815
    %v2819 = vadd.f32 %v2808, %v2815
    %v2820 = vadd.f32 %v2809, %v2815
    %v2821 = vadd.f32 %v2810, %v2815
    %v2822 = vadd.f32 %v2811, %v2815
    %v2823 = vadd.f32 %v2812, %v2815
    %v2824 = vadd.f32 %v2813, %v2815
    %v2825 = vpack.c.bf16 %v2818, %v2817
    %v2826 = vpack.c.bf16 %v2820, %v2819
    %v2827 = vpack.c.bf16 %v2822, %v2821
    %v2828 = vpack.c.bf16 %v2824, %v2823
    %s2829 = scalar_lea.vmem [#allocation3], 192
    %v2830 = vld [vmem:[%s2829] sm:$0xff]
    %v2831 = vld [vmem:[%s2829 + $0x8] sm:$0xf]
    %v2832 = vld [vmem:[%s2829 + $0xc] sm:$0xff]
    %v2833 = vld [vmem:[%s2829 + $0x14] sm:$0xf]
    %v2834 = vld [vmem:[%s2829 + $0x18] sm:$0xff]
    %v2835 = vld [vmem:[%s2829 + $0x20] sm:$0xf]
    %v2836 = vld [vmem:[%s2829 + $0x24] sm:$0xff]
    %v2837 = vld [vmem:[%s2829 + $0x2c] sm:$0xf]
    %v2838 = vld [vmem:[%s2829 + $0x30] sm:$0xff]
    %v2839 = vld [vmem:[%s2829 + $0x38] sm:$0xf]
    %v2840 = vld [vmem:[%s2829 + $0x3c] sm:$0xff]
    %v2841 = vld [vmem:[%s2829 + $0x44] sm:$0xf]
    %v2842 = vld [vmem:[%s2829 + $0x48] sm:$0xff]
    %v2843 = vld [vmem:[%s2829 + $0x50] sm:$0xf]
    %v2844 = vld [vmem:[%s2829 + $0x54] sm:$0xff]
    %v2845 = vld [vmem:[%s2829 + $0x5c] sm:$0xf]
    %v2846 = vld [vmem:[%s2829 + $0x60] sm:$0xff]
    %v2847 = vld [vmem:[%s2829 + $0x68] sm:$0xf]
    %v2848 = vld [vmem:[%s2829 + $0x6c] sm:$0xff]
    %v2849 = vld [vmem:[%s2829 + $0x74] sm:$0xf]
    %v2850 = vld [vmem:[%s2829 + $0x78] sm:$0xff]
    %v2851 = vld [vmem:[%s2829 + $0x80] sm:$0xf]
    %v2852 = vld [vmem:[%s2829 + $0x84] sm:$0xff]
    %v2853 = vld [vmem:[%s2829 + $0x8c] sm:$0xf]
    %v2854 = vld [vmem:[%s2829 + $0x90] sm:$0xff]
    %v2855 = vld [vmem:[%s2829 + $0x98] sm:$0xf]
    %v2856 = vld [vmem:[%s2829 + $0x9c] sm:$0xff]
    %v2857 = vld [vmem:[%s2829 + $0xa4] sm:$0xf]
    %v2858 = vld [vmem:[%s2829 + $0xa8] sm:$0xff]
    %v2859 = vld [vmem:[%s2829 + $0xb0] sm:$0xf]
    %v2860 = vld [vmem:[%s2829 + $0xb4] sm:$0xff]
    %v2861 = vld [vmem:[%s2829 + $0xbc] sm:$0xf]
    %s2862 = scalar_lea.vmem %s8, 3
    %v2863 = vld [vmem:[%s2862] sm:$0x7]
    %v2865 = vperm.slane %v2863, 0
    %v2866 = vperm.slane %v2863, 1
    %v2867 = vperm.slane %v2863, 2
    %v2903 = vunpack.c.l.b16 %v2830
    %v2904 = vunpack.c.h.b16 %v2830
    %v2905 = vunpack.c.l.b16 %v2831
    %v2906 = vunpack.c.l.b16 %v2832
    %v2907 = vunpack.c.h.b16 %v2832
    %v2908 = vunpack.c.l.b16 %v2833
    %v2909 = vunpack.c.l.b16 %v2834
    %v2910 = vunpack.c.h.b16 %v2834
    %v2911 = vunpack.c.l.b16 %v2835
    %v2912 = vunpack.c.l.b16 %v2836
    %v2913 = vunpack.c.h.b16 %v2836
    %v2914 = vunpack.c.l.b16 %v2837
    %v2915 = vunpack.c.l.b16 %v2838
    %v2916 = vunpack.c.h.b16 %v2838
    %v2917 = vunpack.c.l.b16 %v2839
    %v2918 = vunpack.c.l.b16 %v2840
    %v2919 = vunpack.c.h.b16 %v2840
    %v2920 = vunpack.c.l.b16 %v2841
    %v2921 = vunpack.c.l.b16 %v2842
    %v2922 = vunpack.c.h.b16 %v2842
    %v2923 = vunpack.c.l.b16 %v2843
    %v2924 = vunpack.c.l.b16 %v2844
    %v2925 = vunpack.c.h.b16 %v2844
    %v2926 = vunpack.c.l.b16 %v2845
    %v2927 = vunpack.c.l.b16 %v2846
    %v2928 = vunpack.c.h.b16 %v2846
    %v2929 = vunpack.c.l.b16 %v2847
    %v2930 = vunpack.c.l.b16 %v2848
    %v2931 = vunpack.c.h.b16 %v2848
    %v2932 = vunpack.c.l.b16 %v2849
    %v2933 = vunpack.c.l.b16 %v2850
    %v2934 = vunpack.c.h.b16 %v2850
    %v2935 = vunpack.c.l.b16 %v2851
    %v2936 = vunpack.c.l.b16 %v2852
    %v2937 = vunpack.c.h.b16 %v2852
    %v2938 = vunpack.c.l.b16 %v2853
    %v2939 = vunpack.c.l.b16 %v2854
    %v2940 = vunpack.c.h.b16 %v2854
    %v2941 = vunpack.c.l.b16 %v2855
    %v2942 = vunpack.c.l.b16 %v2856
    %v2943 = vunpack.c.h.b16 %v2856
    %v2944 = vunpack.c.l.b16 %v2857
    %v2945 = vunpack.c.l.b16 %v2858
    %v2946 = vunpack.c.h.b16 %v2858
    %v2947 = vunpack.c.l.b16 %v2859
    %v2948 = vunpack.c.l.b16 %v2860
    %v2949 = vunpack.c.h.b16 %v2860
    %v2950 = vunpack.c.l.b16 %v2861
    %v2951 = vpack.c.b16 %v2906, %v2903
    %v2952 = vpack.c.b16 %v2907, %v2904
    %v2953 = vpack.c.b16 %v2908, %v2905
    %v2954 = vpack.c.b16 %v2912, %v2909
    %v2955 = vpack.c.b16 %v2913, %v2910
    %v2956 = vpack.c.b16 %v2914, %v2911
    %v2957 = vpack.c.b16 %v2918, %v2915
    %v2958 = vpack.c.b16 %v2919, %v2916
    %v2959 = vpack.c.b16 %v2920, %v2917
    %v2960 = vpack.c.b16 %v2924, %v2921
    %v2961 = vpack.c.b16 %v2925, %v2922
    %v2962 = vpack.c.b16 %v2926, %v2923
    %v2963 = vpack.c.b16 %v2930, %v2927
    %v2964 = vpack.c.b16 %v2931, %v2928
    %v2965 = vpack.c.b16 %v2932, %v2929
    %v2966 = vpack.c.b16 %v2936, %v2933
    %v2967 = vpack.c.b16 %v2937, %v2934
    %v2968 = vpack.c.b16 %v2938, %v2935
    %v2969 = vpack.c.b16 %v2942, %v2939
    %v2970 = vpack.c.b16 %v2943, %v2940
    %v2971 = vpack.c.b16 %v2944, %v2941
    %v2972 = vpack.c.b16 %v2948, %v2945
    %v2973 = vpack.c.b16 %v2949, %v2946
    %v2974 = vpack.c.b16 %v2950, %v2947
    %2999 = vmatpush.bf16.msra.mxu0 %v2972
    %3000 = vmatpush.bf16.msra.mxu0 %v2969
    %3001 = vmatpush.bf16.msra.mxu0 %v2966
    %3002 = vmatpush.bf16.msra.mxu0 %v2963
    %3003 = vmatpush.bf16.msra.mxu0 %v2960
    %3004 = vmatpush.bf16.msra.mxu0 %v2957
    %3005 = vmatpush.bf16.msra.mxu0 %v2954
    %3006 = vmatpush.bf16.msra.mxu0 %v2951
    %3007 = vmatmul.bf16.gmra.mxu0 %v2825
    %v3008 = vpop.f32.mrf.mxu0
    %v3009 = vadd.f32 %v2865, %v3008
    %v3010 = vpop.f32.mrf.mxu0
    %v3011 = vadd.f32 %v2865, %v3010
    %3012 = vmatmul.bf16.gmra.mxu0 %v2826
    %v3013 = vpop.f32.mrf.mxu0
    %v3014 = vadd.f32 %v2865, %v3013
    %v3015 = vpop.f32.mrf.mxu0
    %v3016 = vadd.f32 %v2865, %v3015
    %3017 = vmatmul.bf16.gmra.mxu0 %v2827
    %v3018 = vpop.f32.mrf.mxu0
    %v3019 = vadd.f32 %v2865, %v3018
    %v3020 = vpop.f32.mrf.mxu0
    %v3021 = vadd.f32 %v2865, %v3020
    %3022 = vmatmul.bf16.gmra.mxu0 %v2828
    %v3023 = vpop.f32.mrf.mxu0
    %v3024 = vadd.f32 %v2865, %v3023
    %v3025 = vpop.f32.mrf.mxu0
    %v3026 = vadd.f32 %v2865, %v3025
    %3027 = vdwg.mxu0
    %3028 = vmatpush.bf16.msra.mxu0 %v2973
    %3029 = vmatpush.bf16.msra.mxu0 %v2970
    %3030 = vmatpush.bf16.msra.mxu0 %v2967
    %3031 = vmatpush.bf16.msra.mxu0 %v2964
    %3032 = vmatpush.bf16.msra.mxu0 %v2961
    %3033 = vmatpush.bf16.msra.mxu0 %v2958
    %3034 = vmatpush.bf16.msra.mxu0 %v2955
    %3035 = vmatpush.bf16.msra.mxu0 %v2952
    %3036 = vmatmul.bf16.gmra.mxu0 %v2825
    %v3037 = vpop.f32.mrf.mxu0
    %v3038 = vadd.f32 %v2866, %v3037
    %v3039 = vpop.f32.mrf.mxu0
    %v3040 = vadd.f32 %v2866, %v3039
    %3041 = vmatmul.bf16.gmra.mxu0 %v2826
    %v3042 = vpop.f32.mrf.mxu0
    %v3043 = vadd.f32 %v2866, %v3042
    %v3044 = vpop.f32.mrf.mxu0
    %v3045 = vadd.f32 %v2866, %v3044
    %3046 = vmatmul.bf16.gmra.mxu0 %v2827
    %v3047 = vpop.f32.mrf.mxu0
    %v3048 = vadd.f32 %v2866, %v3047
    %v3049 = vpop.f32.mrf.mxu0
    %v3050 = vadd.f32 %v2866, %v3049
    %3051 = vmatmul.bf16.gmra.mxu0 %v2828
    %v3052 = vpop.f32.mrf.mxu0
    %v3053 = vadd.f32 %v2866, %v3052
    %v3054 = vpop.f32.mrf.mxu0
    %v3055 = vadd.f32 %v2866, %v3054
    %3056 = vdwg.mxu0
    %3057 = vmatpush.bf16.msra.mxu0 %v2974
    %3058 = vmatpush.bf16.msra.mxu0 %v2971
    %3059 = vmatpush.bf16.msra.mxu0 %v2968
    %3060 = vmatpush.bf16.msra.mxu0 %v2965
    %3061 = vmatpush.bf16.msra.mxu0 %v2962
    %3062 = vmatpush.bf16.msra.mxu0 %v2959
    %3063 = vmatpush.bf16.msra.mxu0 %v2956
    %3064 = vmatpush.bf16.msra.mxu0 %v2953
    %3065 = vmatmul.bf16.gmra.mxu0 %v2825
    %v3066 = vpop.f32.mrf.mxu0
    %v3067 = vadd.f32 %v2867, %v3066
    %v3068 = vpop.f32.mrf.mxu0
    %v3069 = vadd.f32 %v2867, %v3068
    %3070 = vmatmul.bf16.gmra.mxu0 %v2826
    %v3071 = vpop.f32.mrf.mxu0
    %v3072 = vadd.f32 %v2867, %v3071
    %v3073 = vpop.f32.mrf.mxu0
    %v3074 = vadd.f32 %v2867, %v3073
    %3075 = vmatmul.bf16.gmra.mxu0 %v2827
    %v3076 = vpop.f32.mrf.mxu0
    %v3077 = vadd.f32 %v2867, %v3076
    %v3078 = vpop.f32.mrf.mxu0
    %v3079 = vadd.f32 %v2867, %v3078
    %3080 = vmatmul.bf16.gmra.mxu0 %v2828
    %v3081 = vpop.f32.mrf.mxu0
    %v3082 = vadd.f32 %v2867, %v3081
    %v3083 = vpop.f32.mrf.mxu0
    %v3084 = vadd.f32 %v2867, %v3083
    %3085 = vdwg.mxu0
    %v3087 = vsel %vm748, %v3009, 0
    %v3090 = vsel %vm748, %v3011, 0
    %v3093 = vsel %vm748, %v3014, 0
    %v3096 = vsel %vm748, %v3016, 0
    %v3099 = vsel %vm748, %v3019, 0
    %v3102 = vsel %vm748, %v3021, 0
    %v3105 = vsel %vm748, %v3024, 0
    %v3108 = vsel %vm748, %v3026, 0
    %v3111 = vsel %vm748, %v3038, 0
    %v3114 = vsel %vm748, %v3040, 0
    %v3117 = vsel %vm748, %v3043, 0
    %v3120 = vsel %vm748, %v3045, 0
    %v3123 = vsel %vm748, %v3048, 0
    %v3126 = vsel %vm748, %v3050, 0
    %v3129 = vsel %vm748, %v3053, 0
    %v3132 = vsel %vm748, %v3055, 0
    %3134 = vmatpush.xpose.msra.mxu0 0.0
    %3135 = vmatpush.xpose.msra.mxu0 0.0
    %3136 = vmatpush.xpose.msra.mxu0 0.0
    %3137 = vmatpush.xpose.msra.mxu0 0.0
    %3138 = vmatpush.xpose.msra.mxu0 0.0
    %3139 = vmatpush.xpose.msra.mxu0 0.0
    %3140 = vmatpush.xpose.msra.mxu0 0.0
    %3141 = vmatpush.xpose.msra.mxu0 0.0
    %3142 = vmatpush.xpose.msra.mxu0 %v3132
    %3143 = vmatpush.xpose.msra.mxu0 %v3129
    %3144 = vmatpush.xpose.msra.mxu0 %v3126
    %3145 = vmatpush.xpose.msra.mxu0 %v3123
    %3146 = vmatpush.xpose.msra.mxu0 %v3120
    %3147 = vmatpush.xpose.msra.mxu0 %v3117
    %3148 = vmatpush.xpose.msra.mxu0 %v3114
    %3149 = vmatpush.xpose.msra.mxu0 %v3111
    %3150 = vmatmul.f32.gmra.mxu0 %v3087
    %v3151 = vpop.f32.mrf.mxu0
    %v3152 = vadd.f32 %v481, %v3151
    %3153 = vmatmul.f32.gmra.mxu0 %v3090
    %v3154 = vpop.f32.mrf.mxu0
    %v3155 = vadd.f32 %v482, %v3154
    %3156 = vmatmul.f32.gmra.mxu0 %v3093
    %v3157 = vpop.f32.mrf.mxu0
    %v3158 = vadd.f32 %v483, %v3157
    %3159 = vmatmul.f32.gmra.mxu0 %v3096
    %v3160 = vpop.f32.mrf.mxu0
    %v3161 = vadd.f32 %v484, %v3160
    %3162 = vmatmul.f32.gmra.mxu0 %v3099
    %v3163 = vpop.f32.mrf.mxu0
    %v3164 = vadd.f32 %v485, %v3163
    %3165 = vmatmul.f32.gmra.mxu0 %v3102
    %v3166 = vpop.f32.mrf.mxu0
    %v3167 = vadd.f32 %v486, %v3166
    %3168 = vmatmul.f32.gmra.mxu0 %v3105
    %v3169 = vpop.f32.mrf.mxu0
    %v3170 = vadd.f32 %v487, %v3169
    %3171 = vmatmul.f32.gmra.mxu0 %v3108
    %v3172 = vpop.f32.mrf.mxu0
    %v3173 = vadd.f32 %v488, %v3172
    %3174 = vdwg.mxu0
    %v3175 = vsel %vm748, %v3152, -inf
    %3176 = vmax.xlane.f32.xlu0 %v3175
    %v3177 = vpop.xlane.xlu0 %3176
    %v3178 = vsel %vm748, %v3155, -inf
    %3179 = vmax.xlane.f32.xlu0 %v3178
    %v3180 = vpop.xlane.xlu0 %3179
    %v3181 = vsel %vm748, %v3158, -inf
    %3182 = vmax.xlane.f32.xlu0 %v3181
    %v3183 = vpop.xlane.xlu0 %3182
    %v3184 = vsel %vm748, %v3161, -inf
    %3185 = vmax.xlane.f32.xlu0 %v3184
    %v3186 = vpop.xlane.xlu0 %3185
    %v3187 = vsel %vm748, %v3164, -inf
    %3188 = vmax.xlane.f32.xlu0 %v3187
    %v3189 = vpop.xlane.xlu0 %3188
    %v3190 = vsel %vm748, %v3167, -inf
    %3191 = vmax.xlane.f32.xlu0 %v3190
    %v3192 = vpop.xlane.xlu0 %3191
    %v3193 = vsel %vm748, %v3170, -inf
    %3194 = vmax.xlane.f32.xlu0 %v3193
    %v3195 = vpop.xlane.xlu0 %3194
    %v3196 = vsel %vm748, %v3173, -inf
    %3197 = vmax.xlane.f32.xlu0 %v3196
    %v3198 = vpop.xlane.xlu0 %3197
    %v3199 = vsub.f32 %v3152, %v3177
    %v3200 = vsub.f32 %v3155, %v3180
    %v3201 = vsub.f32 %v3158, %v3183
    %v3202 = vsub.f32 %v3161, %v3186
    %v3203 = vsub.f32 %v3164, %v3189
    %v3204 = vsub.f32 %v3167, %v3192
    %v3205 = vsub.f32 %v3170, %v3195
    %v3206 = vsub.f32 %v3173, %v3198
    %v3207 = vmul.f32 %v3199, 1.442695
    %v3208 = vpow.pop %v3207
    %v3209 = vmul.f32 %v3200, 1.442695
    %v3210 = vpow.pop %v3209
    %v3211 = vmul.f32 %v3201, 1.442695
    %v3212 = vpow.pop %v3211
    %v3213 = vmul.f32 %v3202, 1.442695
    %v3214 = vpow.pop %v3213
    %v3215 = vmul.f32 %v3203, 1.442695
    %v3216 = vpow.pop %v3215
    %v3217 = vmul.f32 %v3204, 1.442695
    %v3218 = vpow.pop %v3217
    %v3219 = vmul.f32 %v3205, 1.442695
    %v3220 = vpow.pop %v3219
    %v3221 = vmul.f32 %v3206, 1.442695
    %v3222 = vpow.pop %v3221
    %v3223 = vsel %vm748, %v3208, 0.0
    %3224 = vadd.xlane.f32.xlu0 %v3223
    %v3225 = vpop.xlane.xlu0 %3224
    %v3226 = vsel %vm748, %v3210, 0.0
    %3227 = vadd.xlane.f32.xlu0 %v3226
    %v3228 = vpop.xlane.xlu0 %3227
    %v3229 = vsel %vm748, %v3212, 0.0
    %3230 = vadd.xlane.f32.xlu0 %v3229
    %v3231 = vpop.xlane.xlu0 %3230
    %v3232 = vsel %vm748, %v3214, 0.0
    %3233 = vadd.xlane.f32.xlu0 %v3232
    %v3234 = vpop.xlane.xlu0 %3233
    %v3235 = vsel %vm748, %v3216, 0.0
    %3236 = vadd.xlane.f32.xlu0 %v3235
    %v3237 = vpop.xlane.xlu0 %3236
    %v3238 = vsel %vm748, %v3218, 0.0
    %3239 = vadd.xlane.f32.xlu0 %v3238
    %v3240 = vpop.xlane.xlu0 %3239
    %v3241 = vsel %vm748, %v3220, 0.0
    %3242 = vadd.xlane.f32.xlu0 %v3241
    %v3243 = vpop.xlane.xlu0 %3242
    %v3244 = vsel %vm748, %v3222, 0.0
    %3245 = vadd.xlane.f32.xlu0 %v3244
    %v3246 = vpop.xlane.xlu0 %3245
    %v3247 = vrcp.pop %v3225
    %v3248 = vrcp.pop %v3228
    %v3249 = vrcp.pop %v3231
    %v3250 = vrcp.pop %v3234
    %v3251 = vrcp.pop %v3237
    %v3252 = vrcp.pop %v3240
    %v3253 = vrcp.pop %v3243
    %v3254 = vrcp.pop %v3246
    %v3255 = vmul.f32 %v3208, %v3247
    %v3256 = vmul.f32 %v3210, %v3248
    %v3257 = vmul.f32 %v3212, %v3249
    %v3258 = vmul.f32 %v3214, %v3250
    %v3259 = vmul.f32 %v3216, %v3251
    %v3260 = vmul.f32 %v3218, %v3252
    %v3261 = vmul.f32 %v3220, %v3253
    %v3262 = vmul.f32 %v3222, %v3254
    %v3264 = vsel %vm748, %v3255, 0
    %v3267 = vsel %vm748, %v3256, 0
    %v3270 = vsel %vm748, %v3257, 0
    %v3273 = vsel %vm748, %v3258, 0
    %v3276 = vsel %vm748, %v3259, 0
    %v3279 = vsel %vm748, %v3260, 0
    %v3282 = vsel %vm748, %v3261, 0
    %v3285 = vsel %vm748, %v3262, 0
    %3287 = vmatpush.msra.mxu0 0.0
    %3288 = vmatpush.msra.mxu0 0.0
    %3289 = vmatpush.msra.mxu0 0.0
    %3290 = vmatpush.msra.mxu0 0.0
    %3291 = vmatpush.msra.mxu0 0.0
    %3292 = vmatpush.msra.mxu0 0.0
    %3293 = vmatpush.msra.mxu0 0.0
    %3294 = vmatpush.msra.mxu0 0.0
    %3295 = vmatpush.msra.mxu0 %v3084
    %3296 = vmatpush.msra.mxu0 %v3082
    %3297 = vmatpush.msra.mxu0 %v3079
    %3298 = vmatpush.msra.mxu0 %v3077
    %3299 = vmatpush.msra.mxu0 %v3074
    %3300 = vmatpush.msra.mxu0 %v3072
    %3301 = vmatpush.msra.mxu0 %v3069
    %3302 = vmatpush.msra.mxu0 %v3067
    %3303 = vmatmul.f32.gmra.mxu0 %v3264
    %v3304 = vpop.f32.mrf.mxu0
    %v3305 = vadd.f32 0.0, %v3304
    %3306 = vmatmul.f32.gmra.mxu0 %v3267
    %v3307 = vpop.f32.mrf.mxu0
    %v3308 = vadd.f32 0.0, %v3307
    %3309 = vmatmul.f32.gmra.mxu0 %v3270
    %v3310 = vpop.f32.mrf.mxu0
    %v3311 = vadd.f32 0.0, %v3310
    %3312 = vmatmul.f32.gmra.mxu0 %v3273
    %v3313 = vpop.f32.mrf.mxu0
    %v3314 = vadd.f32 0.0, %v3313
    %3315 = vmatmul.f32.gmra.mxu0 %v3276
    %v3316 = vpop.f32.mrf.mxu0
    %v3317 = vadd.f32 0.0, %v3316
    %3318 = vmatmul.f32.gmra.mxu0 %v3279
    %v3319 = vpop.f32.mrf.mxu0
    %v3320 = vadd.f32 0.0, %v3319
    %3321 = vmatmul.f32.gmra.mxu0 %v3282
    %v3322 = vpop.f32.mrf.mxu0
    %v3323 = vadd.f32 0.0, %v3322
    %3324 = vmatmul.f32.gmra.mxu0 %v3285
    %v3325 = vpop.f32.mrf.mxu0
    %v3326 = vadd.f32 0.0, %v3325
    %3327 = vdwg.mxu0
    %3328 = vst.msk [vmem:[#allocation2] sm:$0xff] %vm748, %v3305
    %3329 = vst.msk [vmem:[#allocation2 + $0x8] sm:$0xff] %vm748, %v3308
    %3330 = vst.msk [vmem:[#allocation2 + $0x10] sm:$0xff] %vm748, %v3311
    %3331 = vst.msk [vmem:[#allocation2 + $0x18] sm:$0xff] %vm748, %v3314
    %3332 = vst.msk [vmem:[#allocation2 + $0x20] sm:$0xff] %vm748, %v3317
    %3333 = vst.msk [vmem:[#allocation2 + $0x28] sm:$0xff] %vm748, %v3320
    %3334 = vst.msk [vmem:[#allocation2 + $0x30] sm:$0xff] %vm748, %v3323
    %3335 = vst.msk [vmem:[#allocation2 + $0x38] sm:$0xff] %vm748, %v3326
    %3336 = vrot.lane.b32.xlu0 %v3009, 64
    %v3337 = vpop.permute.xlu0 %3336
    %3338 = vrot.lane.b32.xlu0 %v3011, 64
    %v3339 = vpop.permute.xlu0 %3338
    %3340 = vrot.lane.b32.xlu0 %v3014, 64
    %v3341 = vpop.permute.xlu0 %3340
    %3342 = vrot.lane.b32.xlu0 %v3016, 64
    %v3343 = vpop.permute.xlu0 %3342
    %3344 = vrot.lane.b32.xlu0 %v3019, 64
    %v3345 = vpop.permute.xlu0 %3344
    %3346 = vrot.lane.b32.xlu0 %v3021, 64
    %v3347 = vpop.permute.xlu0 %3346
    %3348 = vrot.lane.b32.xlu0 %v3024, 64
    %v3349 = vpop.permute.xlu0 %3348
    %3350 = vrot.lane.b32.xlu0 %v3026, 64
    %v3351 = vpop.permute.xlu0 %3350
    %3352 = vrot.lane.b32.xlu0 %v3038, 64
    %v3353 = vpop.permute.xlu0 %3352
    %3354 = vrot.lane.b32.xlu0 %v3040, 64
    %v3355 = vpop.permute.xlu0 %3354
    %3356 = vrot.lane.b32.xlu0 %v3043, 64
    %v3357 = vpop.permute.xlu0 %3356
    %3358 = vrot.lane.b32.xlu0 %v3045, 64
    %v3359 = vpop.permute.xlu0 %3358
    %3360 = vrot.lane.b32.xlu0 %v3048, 64
    %v3361 = vpop.permute.xlu0 %3360
    %3362 = vrot.lane.b32.xlu0 %v3050, 64
    %v3363 = vpop.permute.xlu0 %3362
    %3364 = vrot.lane.b32.xlu0 %v3053, 64
    %v3365 = vpop.permute.xlu0 %3364
    %3366 = vrot.lane.b32.xlu0 %v3055, 64
    %v3367 = vpop.permute.xlu0 %3366
    %v3368 = vsel %vm748, %v3337, 0
    %v3370 = vsel %vm748, %v3339, 0
    %v3372 = vsel %vm748, %v3341, 0
    %v3374 = vsel %vm748, %v3343, 0
    %v3376 = vsel %vm748, %v3345, 0
    %v3378 = vsel %vm748, %v3347, 0
    %v3380 = vsel %vm748, %v3349, 0
    %v3382 = vsel %vm748, %v3351, 0
    %v3384 = vsel %vm748, %v3353, 0
    %v3386 = vsel %vm748, %v3355, 0
    %v3388 = vsel %vm748, %v3357, 0
    %v3390 = vsel %vm748, %v3359, 0
    %v3392 = vsel %vm748, %v3361, 0
    %v3394 = vsel %vm748, %v3363, 0
    %v3396 = vsel %vm748, %v3365, 0
    %v3398 = vsel %vm748, %v3367, 0
    %3400 = vmatpush.xpose.msra.mxu0 0.0
    %3401 = vmatpush.xpose.msra.mxu0 0.0
    %3402 = vmatpush.xpose.msra.mxu0 0.0
    %3403 = vmatpush.xpose.msra.mxu0 0.0
    %3404 = vmatpush.xpose.msra.mxu0 0.0
    %3405 = vmatpush.xpose.msra.mxu0 0.0
    %3406 = vmatpush.xpose.msra.mxu0 0.0
    %3407 = vmatpush.xpose.msra.mxu0 0.0
    %3408 = vmatpush.xpose.msra.mxu0 %v3398
    %3409 = vmatpush.xpose.msra.mxu0 %v3396
    %3410 = vmatpush.xpose.msra.mxu0 %v3394
    %3411 = vmatpush.xpose.msra.mxu0 %v3392
    %3412 = vmatpush.xpose.msra.mxu0 %v3390
    %3413 = vmatpush.xpose.msra.mxu0 %v3388
    %3414 = vmatpush.xpose.msra.mxu0 %v3386
    %3415 = vmatpush.xpose.msra.mxu0 %v3384
    %3416 = vmatmul.f32.gmra.mxu0 %v3368
    %v3417 = vpop.f32.mrf.mxu0
    %v3418 = vadd.f32 %v481, %v3417
    %3419 = vmatmul.f32.gmra.mxu0 %v3370
    %v3420 = vpop.f32.mrf.mxu0
    %v3421 = vadd.f32 %v482, %v3420
    %3422 = vmatmul.f32.gmra.mxu0 %v3372
    %v3423 = vpop.f32.mrf.mxu0
    %v3424 = vadd.f32 %v483, %v3423
    %3425 = vmatmul.f32.gmra.mxu0 %v3374
    %v3426 = vpop.f32.mrf.mxu0
    %v3427 = vadd.f32 %v484, %v3426
    %3428 = vmatmul.f32.gmra.mxu0 %v3376
    %v3429 = vpop.f32.mrf.mxu0
    %v3430 = vadd.f32 %v485, %v3429
    %3431 = vmatmul.f32.gmra.mxu0 %v3378
    %v3432 = vpop.f32.mrf.mxu0
    %v3433 = vadd.f32 %v486, %v3432
    %3434 = vmatmul.f32.gmra.mxu0 %v3380
    %v3435 = vpop.f32.mrf.mxu0
    %v3436 = vadd.f32 %v487, %v3435
    %3437 = vmatmul.f32.gmra.mxu0 %v3382
    %v3438 = vpop.f32.mrf.mxu0
    %v3439 = vadd.f32 %v488, %v3438
    %3440 = vdwg.mxu0
    %v3441 = vsel %vm748, %v3418, -inf
    %3442 = vmax.xlane.f32.xlu0 %v3441
    %v3443 = vpop.xlane.xlu0 %3442
    %v3444 = vsel %vm748, %v3421, -inf
    %3445 = vmax.xlane.f32.xlu0 %v3444
    %v3446 = vpop.xlane.xlu0 %3445
    %v3447 = vsel %vm748, %v3424, -inf
    %3448 = vmax.xlane.f32.xlu0 %v3447
    %v3449 = vpop.xlane.xlu0 %3448
    %v3450 = vsel %vm748, %v3427, -inf
    %3451 = vmax.xlane.f32.xlu0 %v3450
    %v3452 = vpop.xlane.xlu0 %3451
    %v3453 = vsel %vm748, %v3430, -inf
    %3454 = vmax.xlane.f32.xlu0 %v3453
    %v3455 = vpop.xlane.xlu0 %3454
    %v3456 = vsel %vm748, %v3433, -inf
    %3457 = vmax.xlane.f32.xlu0 %v3456
    %v3458 = vpop.xlane.xlu0 %3457
    %v3459 = vsel %vm748, %v3436, -inf
    %3460 = vmax.xlane.f32.xlu0 %v3459
    %v3461 = vpop.xlane.xlu0 %3460
    %v3462 = vsel %vm748, %v3439, -inf
    %3463 = vmax.xlane.f32.xlu0 %v3462
    %v3464 = vpop.xlane.xlu0 %3463
    %v3465 = vsub.f32 %v3418, %v3443
    %v3466 = vsub.f32 %v3421, %v3446
    %v3467 = vsub.f32 %v3424, %v3449
    %v3468 = vsub.f32 %v3427, %v3452
    %v3469 = vsub.f32 %v3430, %v3455
    %v3470 = vsub.f32 %v3433, %v3458
    %v3471 = vsub.f32 %v3436, %v3461
    %v3472 = vsub.f32 %v3439, %v3464
    %v3473 = vmul.f32 %v3465, 1.442695
    %v3474 = vpow.pop %v3473
    %v3475 = vmul.f32 %v3466, 1.442695
    %v3476 = vpow.pop %v3475
    %v3477 = vmul.f32 %v3467, 1.442695
    %v3478 = vpow.pop %v3477
    %v3479 = vmul.f32 %v3468, 1.442695
    %v3480 = vpow.pop %v3479
    %v3481 = vmul.f32 %v3469, 1.442695
    %v3482 = vpow.pop %v3481
    %v3483 = vmul.f32 %v3470, 1.442695
    %v3484 = vpow.pop %v3483
    %v3485 = vmul.f32 %v3471, 1.442695
    %v3486 = vpow.pop %v3485
    %v3487 = vmul.f32 %v3472, 1.442695
    %v3488 = vpow.pop %v3487
    %v3489 = vsel %vm748, %v3474, 0.0
    %3490 = vadd.xlane.f32.xlu0 %v3489
    %v3491 = vpop.xlane.xlu0 %3490
    %v3492 = vsel %vm748, %v3476, 0.0
    %3493 = vadd.xlane.f32.xlu0 %v3492
    %v3494 = vpop.xlane.xlu0 %3493
    %v3495 = vsel %vm748, %v3478, 0.0
    %3496 = vadd.xlane.f32.xlu0 %v3495
    %v3497 = vpop.xlane.xlu0 %3496
    %v3498 = vsel %vm748, %v3480, 0.0
    %3499 = vadd.xlane.f32.xlu0 %v3498
    %v3500 = vpop.xlane.xlu0 %3499
    %v3501 = vsel %vm748, %v3482, 0.0
    %3502 = vadd.xlane.f32.xlu0 %v3501
    %v3503 = vpop.xlane.xlu0 %3502
    %v3504 = vsel %vm748, %v3484, 0.0
    %3505 = vadd.xlane.f32.xlu0 %v3504
    %v3506 = vpop.xlane.xlu0 %3505
    %v3507 = vsel %vm748, %v3486, 0.0
    %3508 = vadd.xlane.f32.xlu0 %v3507
    %v3509 = vpop.xlane.xlu0 %3508
    %v3510 = vsel %vm748, %v3488, 0.0
    %3511 = vadd.xlane.f32.xlu0 %v3510
    %v3512 = vpop.xlane.xlu0 %3511
    %v3513 = vrcp.pop %v3491
    %v3514 = vrcp.pop %v3494
    %v3515 = vrcp.pop %v3497
    %v3516 = vrcp.pop %v3500
    %v3517 = vrcp.pop %v3503
    %v3518 = vrcp.pop %v3506
    %v3519 = vrcp.pop %v3509
    %v3520 = vrcp.pop %v3512
    %v3521 = vmul.f32 %v3474, %v3513
    %v3522 = vmul.f32 %v3476, %v3514
    %v3523 = vmul.f32 %v3478, %v3515
    %v3524 = vmul.f32 %v3480, %v3516
    %v3525 = vmul.f32 %v3482, %v3517
    %v3526 = vmul.f32 %v3484, %v3518
    %v3527 = vmul.f32 %v3486, %v3519
    %v3528 = vmul.f32 %v3488, %v3520
    %3537 = vrot.lane.b32.xlu0 %v3067, 64
    %v3538 = vpop.permute.xlu0 %3537
    %3539 = vrot.lane.b32.xlu0 %v3069, 64
    %v3540 = vpop.permute.xlu0 %3539
    %3541 = vrot.lane.b32.xlu0 %v3072, 64
    %v3542 = vpop.permute.xlu0 %3541
    %3543 = vrot.lane.b32.xlu0 %v3074, 64
    %v3544 = vpop.permute.xlu0 %3543
    %3545 = vrot.lane.b32.xlu0 %v3077, 64
    %v3546 = vpop.permute.xlu0 %3545
    %3547 = vrot.lane.b32.xlu0 %v3079, 64
    %v3548 = vpop.permute.xlu0 %3547
    %3549 = vrot.lane.b32.xlu0 %v3082, 64
    %v3550 = vpop.permute.xlu0 %3549
    %3551 = vrot.lane.b32.xlu0 %v3084, 64
    %v3552 = vpop.permute.xlu0 %3551
    %v3562 = vsel %vm748, %v3521, 0
    %v3565 = vsel %vm748, %v3522, 0
    %v3568 = vsel %vm748, %v3523, 0
    %v3571 = vsel %vm748, %v3524, 0
    %v3574 = vsel %vm748, %v3525, 0
    %v3577 = vsel %vm748, %v3526, 0
    %v3580 = vsel %vm748, %v3527, 0
    %v3583 = vsel %vm748, %v3528, 0
    %3585 = vmatpush.msra.mxu0 0.0
    %3586 = vmatpush.msra.mxu0 0.0
    %3587 = vmatpush.msra.mxu0 0.0
    %3588 = vmatpush.msra.mxu0 0.0
    %3589 = vmatpush.msra.mxu0 0.0
    %3590 = vmatpush.msra.mxu0 0.0
    %3591 = vmatpush.msra.mxu0 0.0
    %3592 = vmatpush.msra.mxu0 0.0
    %3593 = vmatpush.msra.mxu0 %v3552
    %3594 = vmatpush.msra.mxu0 %v3550
    %3595 = vmatpush.msra.mxu0 %v3548
    %3596 = vmatpush.msra.mxu0 %v3546
    %3597 = vmatpush.msra.mxu0 %v3544
    %3598 = vmatpush.msra.mxu0 %v3542
    %3599 = vmatpush.msra.mxu0 %v3540
    %3600 = vmatpush.msra.mxu0 %v3538
    %3601 = vmatmul.f32.gmra.mxu0 %v3562
    %v3602 = vpop.f32.mrf.mxu0
    %v3603 = vadd.f32 0.0, %v3602
    %3604 = vmatmul.f32.gmra.mxu0 %v3565
    %v3605 = vpop.f32.mrf.mxu0
    %v3606 = vadd.f32 0.0, %v3605
    %3607 = vmatmul.f32.gmra.mxu0 %v3568
    %v3608 = vpop.f32.mrf.mxu0
    %v3609 = vadd.f32 0.0, %v3608
    %3610 = vmatmul.f32.gmra.mxu0 %v3571
    %v3611 = vpop.f32.mrf.mxu0
    %v3612 = vadd.f32 0.0, %v3611
    %3613 = vmatmul.f32.gmra.mxu0 %v3574
    %v3614 = vpop.f32.mrf.mxu0
    %v3615 = vadd.f32 0.0, %v3614
    %3616 = vmatmul.f32.gmra.mxu0 %v3577
    %v3617 = vpop.f32.mrf.mxu0
    %v3618 = vadd.f32 0.0, %v3617
    %3619 = vmatmul.f32.gmra.mxu0 %v3580
    %v3620 = vpop.f32.mrf.mxu0
    %v3621 = vadd.f32 0.0, %v3620
    %3622 = vmatmul.f32.gmra.mxu0 %v3583
    %v3623 = vpop.f32.mrf.mxu0
    %v3624 = vadd.f32 0.0, %v3623
    %3625 = vdwg.mxu0
    %3634 = vrot.lane.b32.xlu0 %v3603, 64
    %v3635 = vpop.permute.xlu0 %3634
    %3636 = vrot.lane.b32.xlu0 %v3606, 64
    %v3637 = vpop.permute.xlu0 %3636
    %3638 = vrot.lane.b32.xlu0 %v3609, 64
    %v3639 = vpop.permute.xlu0 %3638
    %3640 = vrot.lane.b32.xlu0 %v3612, 64
    %v3641 = vpop.permute.xlu0 %3640
    %3642 = vrot.lane.b32.xlu0 %v3615, 64
    %v3643 = vpop.permute.xlu0 %3642
    %3644 = vrot.lane.b32.xlu0 %v3618, 64
    %v3645 = vpop.permute.xlu0 %3644
    %3646 = vrot.lane.b32.xlu0 %v3621, 64
    %v3647 = vpop.permute.xlu0 %3646
    %3648 = vrot.lane.b32.xlu0 %v3624, 64
    %v3649 = vpop.permute.xlu0 %3648
    %3658 = vst.msk [vmem:[#allocation2] sm:$0xff] %vm1321, %v3635
    %3659 = vst.msk [vmem:[#allocation2 + $0x8] sm:$0xff] %vm1321, %v3637
    %3660 = vst.msk [vmem:[#allocation2 + $0x10] sm:$0xff] %vm1321, %v3639
    %3661 = vst.msk [vmem:[#allocation2 + $0x18] sm:$0xff] %vm1321, %v3641
    %3662 = vst.msk [vmem:[#allocation2 + $0x20] sm:$0xff] %vm1321, %v3643
    %3663 = vst.msk [vmem:[#allocation2 + $0x28] sm:$0xff] %vm1321, %v3645
    %3664 = vst.msk [vmem:[#allocation2 + $0x30] sm:$0xff] %vm1321, %v3647
    %3665 = vst.msk [vmem:[#allocation2 + $0x38] sm:$0xff] %vm1321, %v3649
    %v3666 = vld [vmem:[#allocation2] sm:$0xff]
    %v3667 = vld [vmem:[#allocation2 + $0x8] sm:$0xff]
    %v3668 = vld [vmem:[#allocation2 + $0x10] sm:$0xff]
    %v3669 = vld [vmem:[#allocation2 + $0x18] sm:$0xff]
    %v3670 = vld [vmem:[#allocation2 + $0x20] sm:$0xff]
    %v3671 = vld [vmem:[#allocation2 + $0x28] sm:$0xff]
    %v3672 = vld [vmem:[#allocation2 + $0x30] sm:$0xff]
    %v3673 = vld [vmem:[#allocation2 + $0x38] sm:$0xff]
    %v3674 = vpack.c.bf16 %v3667, %v3666
    %v3675 = vpack.c.bf16 %v3669, %v3668
    %v3676 = vpack.c.bf16 %v3671, %v3670
    %v3677 = vpack.c.bf16 %v3673, %v3672
    %s3678 = scalar_lea.vmem %s9, 64
    %v3679 = vld [vmem:[%s3678] sm:$0xf]
    %v3680 = vld [vmem:[%s3678 + $0x4] sm:$0xf]
    %v3681 = vld [vmem:[%s3678 + $0x8] sm:$0xf]
    %v3682 = vld [vmem:[%s3678 + $0xc] sm:$0xf]
    %v3683 = vld [vmem:[%s3678 + $0x10] sm:$0xf]
    %v3684 = vld [vmem:[%s3678 + $0x14] sm:$0xf]
    %v3685 = vld [vmem:[%s3678 + $0x18] sm:$0xf]
    %v3686 = vld [vmem:[%s3678 + $0x1c] sm:$0xf]
    %v3687 = vld [vmem:[%s3678 + $0x20] sm:$0xf]
    %v3688 = vld [vmem:[%s3678 + $0x24] sm:$0xf]
    %v3689 = vld [vmem:[%s3678 + $0x28] sm:$0xf]
    %v3690 = vld [vmem:[%s3678 + $0x2c] sm:$0xf]
    %v3691 = vld [vmem:[%s3678 + $0x30] sm:$0xf]
    %v3692 = vld [vmem:[%s3678 + $0x34] sm:$0xf]
    %v3693 = vld [vmem:[%s3678 + $0x38] sm:$0xf]
    %v3694 = vld [vmem:[%s3678 + $0x3c] sm:$0xf]
    %s3695 = scalar_lea.vmem %s10, 1
    %v3696 = vld [vmem:[%s3695] sm:$0x1]
    %v3698 = vperm.slane %v3696, 0
    %v3716 = vunpack.c.l.b16 %v3679
    %v3717 = vunpack.c.l.b16 %v3680
    %v3718 = vunpack.c.l.b16 %v3681
    %v3719 = vunpack.c.l.b16 %v3682
    %v3720 = vunpack.c.l.b16 %v3683
    %v3721 = vunpack.c.l.b16 %v3684
    %v3722 = vunpack.c.l.b16 %v3685
    %v3723 = vunpack.c.l.b16 %v3686
    %v3724 = vunpack.c.l.b16 %v3687
    %v3725 = vunpack.c.l.b16 %v3688
    %v3726 = vunpack.c.l.b16 %v3689
    %v3727 = vunpack.c.l.b16 %v3690
    %v3728 = vunpack.c.l.b16 %v3691
    %v3729 = vunpack.c.l.b16 %v3692
    %v3730 = vunpack.c.l.b16 %v3693
    %v3731 = vunpack.c.l.b16 %v3694
    %v3732 = vpack.c.b16 %v3717, %v3716
    %v3733 = vpack.c.b16 %v3719, %v3718
    %v3734 = vpack.c.b16 %v3721, %v3720
    %v3735 = vpack.c.b16 %v3723, %v3722
    %v3736 = vpack.c.b16 %v3725, %v3724
    %v3737 = vpack.c.b16 %v3727, %v3726
    %v3738 = vpack.c.b16 %v3729, %v3728
    %v3739 = vpack.c.b16 %v3731, %v3730
    %3748 = vmatpush.bf16.msra.mxu0 %v3739
    %3749 = vmatpush.bf16.msra.mxu0 %v3738
    %3750 = vmatpush.bf16.msra.mxu0 %v3737
    %3751 = vmatpush.bf16.msra.mxu0 %v3736
    %3752 = vmatpush.bf16.msra.mxu0 %v3735
    %3753 = vmatpush.bf16.msra.mxu0 %v3734
    %3754 = vmatpush.bf16.msra.mxu0 %v3733
    %3755 = vmatpush.bf16.msra.mxu0 %v3732
    %3756 = vmatmul.bf16.gmra.mxu0 %v3674
    %v3757 = vpop.f32.mrf.mxu0
    %v3758 = vadd.f32 %v3698, %v3757
    %v3759 = vpop.f32.mrf.mxu0
    %v3760 = vadd.f32 %v3698, %v3759
    %3761 = vmatmul.bf16.gmra.mxu0 %v3675
    %v3762 = vpop.f32.mrf.mxu0
    %v3763 = vadd.f32 %v3698, %v3762
    %v3764 = vpop.f32.mrf.mxu0
    %v3765 = vadd.f32 %v3698, %v3764
    %3766 = vmatmul.bf16.gmra.mxu0 %v3676
    %v3767 = vpop.f32.mrf.mxu0
    %v3768 = vadd.f32 %v3698, %v3767
    %v3769 = vpop.f32.mrf.mxu0
    %v3770 = vadd.f32 %v3698, %v3769
    %3771 = vmatmul.bf16.gmra.mxu0 %v3677
    %v3772 = vpop.f32.mrf.mxu0
    %v3773 = vadd.f32 %v3698, %v3772
    %v3774 = vpop.f32.mrf.mxu0
    %v3775 = vadd.f32 %v3698, %v3774
    %3776 = vdwg.mxu0
    %v3777 = vadd.f32 %v3758, %v2817
    %v3778 = vadd.f32 %v3760, %v2818
    %v3779 = vadd.f32 %v3763, %v2819
    %v3780 = vadd.f32 %v3765, %v2820
    %v3781 = vadd.f32 %v3768, %v2821
    %v3782 = vadd.f32 %v3770, %v2822
    %v3783 = vadd.f32 %v3773, %v2823
    %v3784 = vadd.f32 %v3775, %v2824
    %s3785 = scalar_lea.vmem %s11, 1
    %v3786 = vld [vmem:[%s3785] sm:$0x1]
    %s3787 = scalar_lea.vmem %s12, 1
    %v3788 = vld [vmem:[%s3787] sm:$0x1]
    %3789 = vadd.xlane.f32.xlu0 %v3777
    %v3790 = vpop.xlane.xlu0 %3789
    %3791 = vadd.xlane.f32.xlu0 %v3778
    %v3792 = vpop.xlane.xlu0 %3791
    %3793 = vadd.xlane.f32.xlu0 %v3779
    %v3794 = vpop.xlane.xlu0 %3793
    %3795 = vadd.xlane.f32.xlu0 %v3780
    %v3796 = vpop.xlane.xlu0 %3795
    %3797 = vadd.xlane.f32.xlu0 %v3781
    %v3798 = vpop.xlane.xlu0 %3797
    %3799 = vadd.xlane.f32.xlu0 %v3782
    %v3800 = vpop.xlane.xlu0 %3799
    %3801 = vadd.xlane.f32.xlu0 %v3783
    %v3802 = vpop.xlane.xlu0 %3801
    %3803 = vadd.xlane.f32.xlu0 %v3784
    %v3804 = vpop.xlane.xlu0 %3803
    %v3805 = vmul.f32 %v3790, %v314
    %v3806 = vmul.f32 %v3792, %v314
    %v3807 = vmul.f32 %v3794, %v314
    %v3808 = vmul.f32 %v3796, %v314
    %v3809 = vmul.f32 %v3798, %v314
    %v3810 = vmul.f32 %v3800, %v314
    %v3811 = vmul.f32 %v3802, %v314
    %v3812 = vmul.f32 %v3804, %v314
    %v3813 = vsub.f32 %v3777, %v3805
    %v3814 = vsub.f32 %v3778, %v3806
    %v3815 = vsub.f32 %v3779, %v3807
    %v3816 = vsub.f32 %v3780, %v3808
    %v3817 = vsub.f32 %v3781, %v3809
    %v3818 = vsub.f32 %v3782, %v3810
    %v3819 = vsub.f32 %v3783, %v3811
    %v3820 = vsub.f32 %v3784, %v3812
    %v3821 = vmul.f32 %v3813, %v3813
    %v3822 = vmul.f32 %v3814, %v3814
    %v3823 = vmul.f32 %v3815, %v3815
    %v3824 = vmul.f32 %v3816, %v3816
    %v3825 = vmul.f32 %v3817, %v3817
    %v3826 = vmul.f32 %v3818, %v3818
    %v3827 = vmul.f32 %v3819, %v3819
    %v3828 = vmul.f32 %v3820, %v3820
    %3829 = vadd.xlane.f32.xlu0 %v3821
    %v3830 = vpop.xlane.xlu0 %3829
    %3831 = vadd.xlane.f32.xlu0 %v3822
    %v3832 = vpop.xlane.xlu0 %3831
    %3833 = vadd.xlane.f32.xlu0 %v3823
    %v3834 = vpop.xlane.xlu0 %3833
    %3835 = vadd.xlane.f32.xlu0 %v3824
    %v3836 = vpop.xlane.xlu0 %3835
    %3837 = vadd.xlane.f32.xlu0 %v3825
    %v3838 = vpop.xlane.xlu0 %3837
    %3839 = vadd.xlane.f32.xlu0 %v3826
    %v3840 = vpop.xlane.xlu0 %3839
    %3841 = vadd.xlane.f32.xlu0 %v3827
    %v3842 = vpop.xlane.xlu0 %3841
    %3843 = vadd.xlane.f32.xlu0 %v3828
    %v3844 = vpop.xlane.xlu0 %3843
    %v3845 = vmul.f32 %v3830, %v314
    %v3846 = vmul.f32 %v3832, %v314
    %v3847 = vmul.f32 %v3834, %v314
    %v3848 = vmul.f32 %v3836, %v314
    %v3849 = vmul.f32 %v3838, %v314
    %v3850 = vmul.f32 %v3840, %v314
    %v3851 = vmul.f32 %v3842, %v314
    %v3852 = vmul.f32 %v3844, %v314
    %v3853 = vadd.f32 %v3845, 1e-12
    %v3854 = vadd.f32 %v3846, 1e-12
    %v3855 = vadd.f32 %v3847, 1e-12
    %v3856 = vadd.f32 %v3848, 1e-12
    %v3857 = vadd.f32 %v3849, 1e-12
    %v3858 = vadd.f32 %v3850, 1e-12
    %v3859 = vadd.f32 %v3851, 1e-12
    %v3860 = vadd.f32 %v3852, 1e-12
    %v3861 = vrsqrt.pop %v3853
    %v3862 = vmul.f32 %v3861, %v3853
    %v3863 = vmul.f32 %v3862, %v3861
    %v3864 = vmul.f32 0.5, %v3863
    %v3865 = vsub.f32 1.5, %v3864
    %v3866 = vmul.f32 %v3861, %v3865
    %vm3867 = vweird.f32 %v3853
    %vm3868 = vweird.f32 %v3861
    %vm3869 = vmor %vm3867, %vm3868
    %v3870 = vsel %vm3869, %v3861, %v3866
    %v3871 = vrsqrt.pop %v3854
    %v3872 = vmul.f32 %v3871, %v3854
    %v3873 = vmul.f32 %v3872, %v3871
    %v3874 = vmul.f32 0.5, %v3873
    %v3875 = vsub.f32 1.5, %v3874
    %v3876 = vmul.f32 %v3871, %v3875
    %vm3877 = vweird.f32 %v3854
    %vm3878 = vweird.f32 %v3871
    %vm3879 = vmor %vm3877, %vm3878
    %v3880 = vsel %vm3879, %v3871, %v3876
    %v3881 = vrsqrt.pop %v3855
    %v3882 = vmul.f32 %v3881, %v3855
    %v3883 = vmul.f32 %v3882, %v3881
    %v3884 = vmul.f32 0.5, %v3883
    %v3885 = vsub.f32 1.5, %v3884
    %v3886 = vmul.f32 %v3881, %v3885
    %vm3887 = vweird.f32 %v3855
    %vm3888 = vweird.f32 %v3881
    %vm3889 = vmor %vm3887, %vm3888
    %v3890 = vsel %vm3889, %v3881, %v3886
    %v3891 = vrsqrt.pop %v3856
    %v3892 = vmul.f32 %v3891, %v3856
    %v3893 = vmul.f32 %v3892, %v3891
    %v3894 = vmul.f32 0.5, %v3893
    %v3895 = vsub.f32 1.5, %v3894
    %v3896 = vmul.f32 %v3891, %v3895
    %vm3897 = vweird.f32 %v3856
    %vm3898 = vweird.f32 %v3891
    %vm3899 = vmor %vm3897, %vm3898
    %v3900 = vsel %vm3899, %v3891, %v3896
    %v3901 = vrsqrt.pop %v3857
    %v3902 = vmul.f32 %v3901, %v3857
    %v3903 = vmul.f32 %v3902, %v3901
    %v3904 = vmul.f32 0.5, %v3903
    %v3905 = vsub.f32 1.5, %v3904
    %v3906 = vmul.f32 %v3901, %v3905
    %vm3907 = vweird.f32 %v3857
    %vm3908 = vweird.f32 %v3901
    %vm3909 = vmor %vm3907, %vm3908
    %v3910 = vsel %vm3909, %v3901, %v3906
    %v3911 = vrsqrt.pop %v3858
    %v3912 = vmul.f32 %v3911, %v3858
    %v3913 = vmul.f32 %v3912, %v3911
    %v3914 = vmul.f32 0.5, %v3913
    %v3915 = vsub.f32 1.5, %v3914
    %v3916 = vmul.f32 %v3911, %v3915
    %vm3917 = vweird.f32 %v3858
    %vm3918 = vweird.f32 %v3911
    %vm3919 = vmor %vm3917, %vm3918
    %v3920 = vsel %vm3919, %v3911, %v3916
    %v3921 = vrsqrt.pop %v3859
    %v3922 = vmul.f32 %v3921, %v3859
    %v3923 = vmul.f32 %v3922, %v3921
    %v3924 = vmul.f32 0.5, %v3923
    %v3925 = vsub.f32 1.5, %v3924
    %v3926 = vmul.f32 %v3921, %v3925
    %vm3927 = vweird.f32 %v3859
    %vm3928 = vweird.f32 %v3921
    %vm3929 = vmor %vm3927, %vm3928
    %v3930 = vsel %vm3929, %v3921, %v3926
    %v3931 = vrsqrt.pop %v3860
    %v3932 = vmul.f32 %v3931, %v3860
    %v3933 = vmul.f32 %v3932, %v3931
    %v3934 = vmul.f32 0.5, %v3933
    %v3935 = vsub.f32 1.5, %v3934
    %v3936 = vmul.f32 %v3931, %v3935
    %vm3937 = vweird.f32 %v3860
    %vm3938 = vweird.f32 %v3931
    %vm3939 = vmor %vm3937, %vm3938
    %v3940 = vsel %vm3939, %v3931, %v3936
    %v3941 = vmul.f32 %v3813, %v3870
    %v3942 = vmul.f32 %v3814, %v3880
    %v3943 = vmul.f32 %v3815, %v3890
    %v3944 = vmul.f32 %v3816, %v3900
    %v3945 = vmul.f32 %v3817, %v3910
    %v3946 = vmul.f32 %v3818, %v3920
    %v3947 = vmul.f32 %v3819, %v3930
    %v3948 = vmul.f32 %v3820, %v3940
    %v3950 = vperm.slane %v3786, 0
    %v3952 = vmul.f32 %v3941, %v3950
    %v3953 = vmul.f32 %v3942, %v3950
    %v3954 = vmul.f32 %v3943, %v3950
    %v3955 = vmul.f32 %v3944, %v3950
    %v3956 = vmul.f32 %v3945, %v3950
    %v3957 = vmul.f32 %v3946, %v3950
    %v3958 = vmul.f32 %v3947, %v3950
    %v3959 = vmul.f32 %v3948, %v3950
    %v3961 = vperm.slane %v3788, 0
    %v3963 = vadd.f32 %v3952, %v3961
    %v3964 = vadd.f32 %v3953, %v3961
    %v3965 = vadd.f32 %v3954, %v3961
    %v3966 = vadd.f32 %v3955, %v3961
    %v3967 = vadd.f32 %v3956, %v3961
    %v3968 = vadd.f32 %v3957, %v3961
    %v3969 = vadd.f32 %v3958, %v3961
    %v3970 = vadd.f32 %v3959, %v3961
    %v3971 = vpack.c.bf16 %v3964, %v3963
    %v3972 = vpack.c.bf16 %v3966, %v3965
    %v3973 = vpack.c.bf16 %v3968, %v3967
    %v3974 = vpack.c.bf16 %v3970, %v3969
    %s3975 = scalar_lea.vmem [#allocation5], 256
    %v3976 = vld [vmem:[%s3975] sm:$0xff]
    %v3977 = vld [vmem:[%s3975 + $0x8] sm:$0xff]
    %v3978 = vld [vmem:[%s3975 + $0x10] sm:$0xff]
    %v3979 = vld [vmem:[%s3975 + $0x18] sm:$0xff]
    %v3980 = vld [vmem:[%s3975 + $0x20] sm:$0xff]
    %v3981 = vld [vmem:[%s3975 + $0x28] sm:$0xff]
    %v3982 = vld [vmem:[%s3975 + $0x30] sm:$0xff]
    %v3983 = vld [vmem:[%s3975 + $0x38] sm:$0xff]
    %v3984 = vld [vmem:[%s3975 + $0x40] sm:$0xff]
    %v3985 = vld [vmem:[%s3975 + $0x48] sm:$0xff]
    %v3986 = vld [vmem:[%s3975 + $0x50] sm:$0xff]
    %v3987 = vld [vmem:[%s3975 + $0x58] sm:$0xff]
    %v3988 = vld [vmem:[%s3975 + $0x60] sm:$0xff]
    %v3989 = vld [vmem:[%s3975 + $0x68] sm:$0xff]
    %v3990 = vld [vmem:[%s3975 + $0x70] sm:$0xff]
    %v3991 = vld [vmem:[%s3975 + $0x78] sm:$0xff]
    %v3992 = vld [vmem:[%s3975 + $0x80] sm:$0xff]
    %v3993 = vld [vmem:[%s3975 + $0x88] sm:$0xff]
    %v3994 = vld [vmem:[%s3975 + $0x90] sm:$0xff]
    %v3995 = vld [vmem:[%s3975 + $0x98] sm:$0xff]
    %v3996 = vld [vmem:[%s3975 + $0xa0] sm:$0xff]
    %v3997 = vld [vmem:[%s3975 + $0xa8] sm:$0xff]
    %v3998 = vld [vmem:[%s3975 + $0xb0] sm:$0xff]
    %v3999 = vld [vmem:[%s3975 + $0xb8] sm:$0xff]
    %v4000 = vld [vmem:[%s3975 + $0xc0] sm:$0xff]
    %v4001 = vld [vmem:[%s3975 + $0xc8] sm:$0xff]
    %v4002 = vld [vmem:[%s3975 + $0xd0] sm:$0xff]
    %v4003 = vld [vmem:[%s3975 + $0xd8] sm:$0xff]
    %v4004 = vld [vmem:[%s3975 + $0xe0] sm:$0xff]
    %v4005 = vld [vmem:[%s3975 + $0xe8] sm:$0xff]
    %v4006 = vld [vmem:[%s3975 + $0xf0] sm:$0xff]
    %v4007 = vld [vmem:[%s3975 + $0xf8] sm:$0xff]
    %s4008 = scalar_lea.vmem %s14, 4
    %v4009 = vld [vmem:[%s4008] sm:$0xf]
    %v4011 = vperm.slane %v4009, 0
    %v4012 = vperm.slane %v4009, 1
    %v4013 = vperm.slane %v4009, 2
    %v4014 = vperm.slane %v4009, 3
    %v4051 = vunpack.c.l.b16 %v3976
    %v4052 = vunpack.c.h.b16 %v3976
    %v4053 = vunpack.c.l.b16 %v3977
    %v4054 = vunpack.c.h.b16 %v3977
    %v4055 = vunpack.c.l.b16 %v3978
    %v4056 = vunpack.c.h.b16 %v3978
    %v4057 = vunpack.c.l.b16 %v3979
    %v4058 = vunpack.c.h.b16 %v3979
    %v4059 = vunpack.c.l.b16 %v3980
    %v4060 = vunpack.c.h.b16 %v3980
    %v4061 = vunpack.c.l.b16 %v3981
    %v4062 = vunpack.c.h.b16 %v3981
    %v4063 = vunpack.c.l.b16 %v3982
    %v4064 = vunpack.c.h.b16 %v3982
    %v4065 = vunpack.c.l.b16 %v3983
    %v4066 = vunpack.c.h.b16 %v3983
    %v4067 = vunpack.c.l.b16 %v3984
    %v4068 = vunpack.c.h.b16 %v3984
    %v4069 = vunpack.c.l.b16 %v3985
    %v4070 = vunpack.c.h.b16 %v3985
    %v4071 = vunpack.c.l.b16 %v3986
    %v4072 = vunpack.c.h.b16 %v3986
    %v4073 = vunpack.c.l.b16 %v3987
    %v4074 = vunpack.c.h.b16 %v3987
    %v4075 = vunpack.c.l.b16 %v3988
    %v4076 = vunpack.c.h.b16 %v3988
    %v4077 = vunpack.c.l.b16 %v3989
    %v4078 = vunpack.c.h.b16 %v3989
    %v4079 = vunpack.c.l.b16 %v3990
    %v4080 = vunpack.c.h.b16 %v3990
    %v4081 = vunpack.c.l.b16 %v3991
    %v4082 = vunpack.c.h.b16 %v3991
    %v4083 = vunpack.c.l.b16 %v3992
    %v4084 = vunpack.c.h.b16 %v3992
    %v4085 = vunpack.c.l.b16 %v3993
    %v4086 = vunpack.c.h.b16 %v3993
    %v4087 = vunpack.c.l.b16 %v3994
    %v4088 = vunpack.c.h.b16 %v3994
    %v4089 = vunpack.c.l.b16 %v3995
    %v4090 = vunpack.c.h.b16 %v3995
    %v4091 = vunpack.c.l.b16 %v3996
    %v4092 = vunpack.c.h.b16 %v3996
    %v4093 = vunpack.c.l.b16 %v3997
    %v4094 = vunpack.c.h.b16 %v3997
    %v4095 = vunpack.c.l.b16 %v3998
    %v4096 = vunpack.c.h.b16 %v3998
    %v4097 = vunpack.c.l.b16 %v3999
    %v4098 = vunpack.c.h.b16 %v3999
    %v4099 = vunpack.c.l.b16 %v4000
    %v4100 = vunpack.c.h.b16 %v4000
    %v4101 = vunpack.c.l.b16 %v4001
    %v4102 = vunpack.c.h.b16 %v4001
    %v4103 = vunpack.c.l.b16 %v4002
    %v4104 = vunpack.c.h.b16 %v4002
    %v4105 = vunpack.c.l.b16 %v4003
    %v4106 = vunpack.c.h.b16 %v4003
    %v4107 = vunpack.c.l.b16 %v4004
    %v4108 = vunpack.c.h.b16 %v4004
    %v4109 = vunpack.c.l.b16 %v4005
    %v4110 = vunpack.c.h.b16 %v4005
    %v4111 = vunpack.c.l.b16 %v4006
    %v4112 = vunpack.c.h.b16 %v4006
    %v4113 = vunpack.c.l.b16 %v4007
    %v4114 = vunpack.c.h.b16 %v4007
    %v4115 = vpack.c.b16 %v4055, %v4051
    %v4116 = vpack.c.b16 %v4056, %v4052
    %v4117 = vpack.c.b16 %v4057, %v4053
    %v4118 = vpack.c.b16 %v4058, %v4054
    %v4119 = vpack.c.b16 %v4063, %v4059
    %v4120 = vpack.c.b16 %v4064, %v4060
    %v4121 = vpack.c.b16 %v4065, %v4061
    %v4122 = vpack.c.b16 %v4066, %v4062
    %v4123 = vpack.c.b16 %v4071, %v4067
    %v4124 = vpack.c.b16 %v4072, %v4068
    %v4125 = vpack.c.b16 %v4073, %v4069
    %v4126 = vpack.c.b16 %v4074, %v4070
    %v4127 = vpack.c.b16 %v4079, %v4075
    %v4128 = vpack.c.b16 %v4080, %v4076
    %v4129 = vpack.c.b16 %v4081, %v4077
    %v4130 = vpack.c.b16 %v4082, %v4078
    %v4131 = vpack.c.b16 %v4087, %v4083
    %v4132 = vpack.c.b16 %v4088, %v4084
    %v4133 = vpack.c.b16 %v4089, %v4085
    %v4134 = vpack.c.b16 %v4090, %v4086
    %v4135 = vpack.c.b16 %v4095, %v4091
    %v4136 = vpack.c.b16 %v4096, %v4092
    %v4137 = vpack.c.b16 %v4097, %v4093
    %v4138 = vpack.c.b16 %v4098, %v4094
    %v4139 = vpack.c.b16 %v4103, %v4099
    %v4140 = vpack.c.b16 %v4104, %v4100
    %v4141 = vpack.c.b16 %v4105, %v4101
    %v4142 = vpack.c.b16 %v4106, %v4102
    %v4143 = vpack.c.b16 %v4111, %v4107
    %v4144 = vpack.c.b16 %v4112, %v4108
    %v4145 = vpack.c.b16 %v4113, %v4109
    %v4146 = vpack.c.b16 %v4114, %v4110
    %4179 = vmatpush.bf16.msra.mxu0 %v4143
    %4180 = vmatpush.bf16.msra.mxu0 %v4139
    %4181 = vmatpush.bf16.msra.mxu0 %v4135
    %4182 = vmatpush.bf16.msra.mxu0 %v4131
    %4183 = vmatpush.bf16.msra.mxu0 %v4127
    %4184 = vmatpush.bf16.msra.mxu0 %v4123
    %4185 = vmatpush.bf16.msra.mxu0 %v4119
    %4186 = vmatpush.bf16.msra.mxu0 %v4115
    %4187 = vmatmul.bf16.gmra.mxu0 %v3971
    %v4188 = vpop.f32.mrf.mxu0
    %v4189 = vadd.f32 %v4011, %v4188
    %v4190 = vpop.f32.mrf.mxu0
    %v4191 = vadd.f32 %v4011, %v4190
    %4192 = vmatmul.bf16.gmra.mxu0 %v3972
    %v4193 = vpop.f32.mrf.mxu0
    %v4194 = vadd.f32 %v4011, %v4193
    %v4195 = vpop.f32.mrf.mxu0
    %v4196 = vadd.f32 %v4011, %v4195
    %4197 = vmatmul.bf16.gmra.mxu0 %v3973
    %v4198 = vpop.f32.mrf.mxu0
    %v4199 = vadd.f32 %v4011, %v4198
    %v4200 = vpop.f32.mrf.mxu0
    %v4201 = vadd.f32 %v4011, %v4200
    %4202 = vmatmul.bf16.gmra.mxu0 %v3974
    %v4203 = vpop.f32.mrf.mxu0
    %v4204 = vadd.f32 %v4011, %v4203
    %v4205 = vpop.f32.mrf.mxu0
    %v4206 = vadd.f32 %v4011, %v4205
    %4207 = vdwg.mxu0
    %4208 = vmatpush.bf16.msra.mxu0 %v4144
    %4209 = vmatpush.bf16.msra.mxu0 %v4140
    %4210 = vmatpush.bf16.msra.mxu0 %v4136
    %4211 = vmatpush.bf16.msra.mxu0 %v4132
    %4212 = vmatpush.bf16.msra.mxu0 %v4128
    %4213 = vmatpush.bf16.msra.mxu0 %v4124
    %4214 = vmatpush.bf16.msra.mxu0 %v4120
    %4215 = vmatpush.bf16.msra.mxu0 %v4116
    %4216 = vmatmul.bf16.gmra.mxu0 %v3971
    %v4217 = vpop.f32.mrf.mxu0
    %v4218 = vadd.f32 %v4012, %v4217
    %v4219 = vpop.f32.mrf.mxu0
    %v4220 = vadd.f32 %v4012, %v4219
    %4221 = vmatmul.bf16.gmra.mxu0 %v3972
    %v4222 = vpop.f32.mrf.mxu0
    %v4223 = vadd.f32 %v4012, %v4222
    %v4224 = vpop.f32.mrf.mxu0
    %v4225 = vadd.f32 %v4012, %v4224
    %4226 = vmatmul.bf16.gmra.mxu0 %v3973
    %v4227 = vpop.f32.mrf.mxu0
    %v4228 = vadd.f32 %v4012, %v4227
    %v4229 = vpop.f32.mrf.mxu0
    %v4230 = vadd.f32 %v4012, %v4229
    %4231 = vmatmul.bf16.gmra.mxu0 %v3974
    %v4232 = vpop.f32.mrf.mxu0
    %v4233 = vadd.f32 %v4012, %v4232
    %v4234 = vpop.f32.mrf.mxu0
    %v4235 = vadd.f32 %v4012, %v4234
    %4236 = vdwg.mxu0
    %4237 = vmatpush.bf16.msra.mxu0 %v4145
    %4238 = vmatpush.bf16.msra.mxu0 %v4141
    %4239 = vmatpush.bf16.msra.mxu0 %v4137
    %4240 = vmatpush.bf16.msra.mxu0 %v4133
    %4241 = vmatpush.bf16.msra.mxu0 %v4129
    %4242 = vmatpush.bf16.msra.mxu0 %v4125
    %4243 = vmatpush.bf16.msra.mxu0 %v4121
    %4244 = vmatpush.bf16.msra.mxu0 %v4117
    %4245 = vmatmul.bf16.gmra.mxu0 %v3971
    %v4246 = vpop.f32.mrf.mxu0
    %v4247 = vadd.f32 %v4013, %v4246
    %v4248 = vpop.f32.mrf.mxu0
    %v4249 = vadd.f32 %v4013, %v4248
    %4250 = vmatmul.bf16.gmra.mxu0 %v3972
    %v4251 = vpop.f32.mrf.mxu0
    %v4252 = vadd.f32 %v4013, %v4251
    %v4253 = vpop.f32.mrf.mxu0
    %v4254 = vadd.f32 %v4013, %v4253
    %4255 = vmatmul.bf16.gmra.mxu0 %v3973
    %v4256 = vpop.f32.mrf.mxu0
    %v4257 = vadd.f32 %v4013, %v4256
    %v4258 = vpop.f32.mrf.mxu0
    %v4259 = vadd.f32 %v4013, %v4258
    %4260 = vmatmul.bf16.gmra.mxu0 %v3974
    %v4261 = vpop.f32.mrf.mxu0
    %v4262 = vadd.f32 %v4013, %v4261
    %v4263 = vpop.f32.mrf.mxu0
    %v4264 = vadd.f32 %v4013, %v4263
    %4265 = vdwg.mxu0
    %4266 = vmatpush.bf16.msra.mxu0 %v4146
    %4267 = vmatpush.bf16.msra.mxu0 %v4142
    %4268 = vmatpush.bf16.msra.mxu0 %v4138
    %4269 = vmatpush.bf16.msra.mxu0 %v4134
    %4270 = vmatpush.bf16.msra.mxu0 %v4130
    %4271 = vmatpush.bf16.msra.mxu0 %v4126
    %4272 = vmatpush.bf16.msra.mxu0 %v4122
    %4273 = vmatpush.bf16.msra.mxu0 %v4118
    %4274 = vmatmul.bf16.gmra.mxu0 %v3971
    %v4275 = vpop.f32.mrf.mxu0
    %v4276 = vadd.f32 %v4014, %v4275
    %v4277 = vpop.f32.mrf.mxu0
    %v4278 = vadd.f32 %v4014, %v4277
    %4279 = vmatmul.bf16.gmra.mxu0 %v3972
    %v4280 = vpop.f32.mrf.mxu0
    %v4281 = vadd.f32 %v4014, %v4280
    %v4282 = vpop.f32.mrf.mxu0
    %v4283 = vadd.f32 %v4014, %v4282
    %4284 = vmatmul.bf16.gmra.mxu0 %v3973
    %v4285 = vpop.f32.mrf.mxu0
    %v4286 = vadd.f32 %v4014, %v4285
    %v4287 = vpop.f32.mrf.mxu0
    %v4288 = vadd.f32 %v4014, %v4287
    %4289 = vmatmul.bf16.gmra.mxu0 %v3974
    %v4290 = vpop.f32.mrf.mxu0
    %v4291 = vadd.f32 %v4014, %v4290
    %v4292 = vpop.f32.mrf.mxu0
    %v4293 = vadd.f32 %v4014, %v4292
    %4294 = vdwg.mxu0
    %v4295 = vmul.f32 %v4189, 0.5
    %v4296 = vmul.f32 %v4218, 0.5
    %v4297 = vmul.f32 %v4247, 0.5
    %v4298 = vmul.f32 %v4276, 0.5
    %v4299 = vmul.f32 %v4191, 0.5
    %v4300 = vmul.f32 %v4220, 0.5
    %v4301 = vmul.f32 %v4249, 0.5
    %v4302 = vmul.f32 %v4278, 0.5
    %v4303 = vmul.f32 %v4194, 0.5
    %v4304 = vmul.f32 %v4223, 0.5
    %v4305 = vmul.f32 %v4252, 0.5
    %v4306 = vmul.f32 %v4281, 0.5
    %v4307 = vmul.f32 %v4196, 0.5
    %v4308 = vmul.f32 %v4225, 0.5
    %v4309 = vmul.f32 %v4254, 0.5
    %v4310 = vmul.f32 %v4283, 0.5
    %v4311 = vmul.f32 %v4199, 0.5
    %v4312 = vmul.f32 %v4228, 0.5
    %v4313 = vmul.f32 %v4257, 0.5
    %v4314 = vmul.f32 %v4286, 0.5
    %v4315 = vmul.f32 %v4201, 0.5
    %v4316 = vmul.f32 %v4230, 0.5
    %v4317 = vmul.f32 %v4259, 0.5
    %v4318 = vmul.f32 %v4288, 0.5
    %v4319 = vmul.f32 %v4204, 0.5
    %v4320 = vmul.f32 %v4233, 0.5
    %v4321 = vmul.f32 %v4262, 0.5
    %v4322 = vmul.f32 %v4291, 0.5
    %v4323 = vmul.f32 %v4206, 0.5
    %v4324 = vmul.f32 %v4235, 0.5
    %v4325 = vmul.f32 %v4264, 0.5
    %v4326 = vmul.f32 %v4293, 0.5
    %v4327 = vmul.f32 %v4189, 0.044715
    %v4328 = vmul.f32 %v4218, 0.044715
    %v4329 = vmul.f32 %v4247, 0.044715
    %v4330 = vmul.f32 %v4276, 0.044715
    %v4331 = vmul.f32 %v4191, 0.044715
    %v4332 = vmul.f32 %v4220, 0.044715
    %v4333 = vmul.f32 %v4249, 0.044715
    %v4334 = vmul.f32 %v4278, 0.044715
    %v4335 = vmul.f32 %v4194, 0.044715
    %v4336 = vmul.f32 %v4223, 0.044715
    %v4337 = vmul.f32 %v4252, 0.044715
    %v4338 = vmul.f32 %v4281, 0.044715
    %v4339 = vmul.f32 %v4196, 0.044715
    %v4340 = vmul.f32 %v4225, 0.044715
    %v4341 = vmul.f32 %v4254, 0.044715
    %v4342 = vmul.f32 %v4283, 0.044715
    %v4343 = vmul.f32 %v4199, 0.044715
    %v4344 = vmul.f32 %v4228, 0.044715
    %v4345 = vmul.f32 %v4257, 0.044715
    %v4346 = vmul.f32 %v4286, 0.044715
    %v4347 = vmul.f32 %v4201, 0.044715
    %v4348 = vmul.f32 %v4230, 0.044715
    %v4349 = vmul.f32 %v4259, 0.044715
    %v4350 = vmul.f32 %v4288, 0.044715
    %v4351 = vmul.f32 %v4204, 0.044715
    %v4352 = vmul.f32 %v4233, 0.044715
    %v4353 = vmul.f32 %v4262, 0.044715
    %v4354 = vmul.f32 %v4291, 0.044715
    %v4355 = vmul.f32 %v4206, 0.044715
    %v4356 = vmul.f32 %v4235, 0.044715
    %v4357 = vmul.f32 %v4264, 0.044715
    %v4358 = vmul.f32 %v4293, 0.044715
    %v4359 = vmul.f32 %v4327, %v4189
    %v4360 = vmul.f32 %v4328, %v4218
    %v4361 = vmul.f32 %v4329, %v4247
    %v4362 = vmul.f32 %v4330, %v4276
    %v4363 = vmul.f32 %v4331, %v4191
    %v4364 = vmul.f32 %v4332, %v4220
    %v4365 = vmul.f32 %v4333, %v4249
    %v4366 = vmul.f32 %v4334, %v4278
    %v4367 = vmul.f32 %v4335, %v4194
    %v4368 = vmul.f32 %v4336, %v4223
    %v4369 = vmul.f32 %v4337, %v4252
    %v4370 = vmul.f32 %v4338, %v4281
    %v4371 = vmul.f32 %v4339, %v4196
    %v4372 = vmul.f32 %v4340, %v4225
    %v4373 = vmul.f32 %v4341, %v4254
    %v4374 = vmul.f32 %v4342, %v4283
    %v4375 = vmul.f32 %v4343, %v4199
    %v4376 = vmul.f32 %v4344, %v4228
    %v4377 = vmul.f32 %v4345, %v4257
    %v4378 = vmul.f32 %v4346, %v4286
    %v4379 = vmul.f32 %v4347, %v4201
    %v4380 = vmul.f32 %v4348, %v4230
    %v4381 = vmul.f32 %v4349, %v4259
    %v4382 = vmul.f32 %v4350, %v4288
    %v4383 = vmul.f32 %v4351, %v4204
    %v4384 = vmul.f32 %v4352, %v4233
    %v4385 = vmul.f32 %v4353, %v4262
    %v4386 = vmul.f32 %v4354, %v4291
    %v4387 = vmul.f32 %v4355, %v4206
    %v4388 = vmul.f32 %v4356, %v4235
    %v4389 = vmul.f32 %v4357, %v4264
    %v4390 = vmul.f32 %v4358, %v4293
    %v4391 = vmul.f32 %v4359, %v4189
    %v4392 = vmul.f32 %v4360, %v4218
    %v4393 = vmul.f32 %v4361, %v4247
    %v4394 = vmul.f32 %v4362, %v4276
    %v4395 = vmul.f32 %v4363, %v4191
    %v4396 = vmul.f32 %v4364, %v4220
    %v4397 = vmul.f32 %v4365, %v4249
    %v4398 = vmul.f32 %v4366, %v4278
    %v4399 = vmul.f32 %v4367, %v4194
    %v4400 = vmul.f32 %v4368, %v4223
    %v4401 = vmul.f32 %v4369, %v4252
    %v4402 = vmul.f32 %v4370, %v4281
    %v4403 = vmul.f32 %v4371, %v4196
    %v4404 = vmul.f32 %v4372, %v4225
    %v4405 = vmul.f32 %v4373, %v4254
    %v4406 = vmul.f32 %v4374, %v4283
    %v4407 = vmul.f32 %v4375, %v4199
    %v4408 = vmul.f32 %v4376, %v4228
    %v4409 = vmul.f32 %v4377, %v4257
    %v4410 = vmul.f32 %v4378, %v4286
    %v4411 = vmul.f32 %v4379, %v4201
    %v4412 = vmul.f32 %v4380, %v4230
    %v4413 = vmul.f32 %v4381, %v4259
    %v4414 = vmul.f32 %v4382, %v4288
    %v4415 = vmul.f32 %v4383, %v4204
    %v4416 = vmul.f32 %v4384, %v4233
    %v4417 = vmul.f32 %v4385, %v4262
    %v4418 = vmul.f32 %v4386, %v4291
    %v4419 = vmul.f32 %v4387, %v4206
    %v4420 = vmul.f32 %v4388, %v4235
    %v4421 = vmul.f32 %v4389, %v4264
    %v4422 = vmul.f32 %v4390, %v4293
    %v4423 = vadd.f32 %v4189, %v4391
    %v4424 = vadd.f32 %v4218, %v4392
    %v4425 = vadd.f32 %v4247, %v4393
    %v4426 = vadd.f32 %v4276, %v4394
    %v4427 = vadd.f32 %v4191, %v4395
    %v4428 = vadd.f32 %v4220, %v4396
    %v4429 = vadd.f32 %v4249, %v4397
    %v4430 = vadd.f32 %v4278, %v4398
    %v4431 = vadd.f32 %v4194, %v4399
    %v4432 = vadd.f32 %v4223, %v4400
    %v4433 = vadd.f32 %v4252, %v4401
    %v4434 = vadd.f32 %v4281, %v4402
    %v4435 = vadd.f32 %v4196, %v4403
    %v4436 = vadd.f32 %v4225, %v4404
    %v4437 = vadd.f32 %v4254, %v4405
    %v4438 = vadd.f32 %v4283, %v4406
    %v4439 = vadd.f32 %v4199, %v4407
    %v4440 = vadd.f32 %v4228, %v4408
    %v4441 = vadd.f32 %v4257, %v4409
    %v4442 = vadd.f32 %v4286, %v4410
    %v4443 = vadd.f32 %v4201, %v4411
    %v4444 = vadd.f32 %v4230, %v4412
    %v4445 = vadd.f32 %v4259, %v4413
    %v4446 = vadd.f32 %v4288, %v4414
    %v4447 = vadd.f32 %v4204, %v4415
    %v4448 = vadd.f32 %v4233, %v4416
    %v4449 = vadd.f32 %v4262, %v4417
    %v4450 = vadd.f32 %v4291, %v4418
    %v4451 = vadd.f32 %v4206, %v4419
    %v4452 = vadd.f32 %v4235, %v4420
    %v4453 = vadd.f32 %v4264, %v4421
    %v4454 = vadd.f32 %v4293, %v4422
    %v4455 = vmul.f32 %v4423, 0.7978846
    %v4456 = vmul.f32 %v4424, 0.7978846
    %v4457 = vmul.f32 %v4425, 0.7978846
    %v4458 = vmul.f32 %v4426, 0.7978846
    %v4459 = vmul.f32 %v4427, 0.7978846
    %v4460 = vmul.f32 %v4428, 0.7978846
    %v4461 = vmul.f32 %v4429, 0.7978846
    %v4462 = vmul.f32 %v4430, 0.7978846
    %v4463 = vmul.f32 %v4431, 0.7978846
    %v4464 = vmul.f32 %v4432, 0.7978846
    %v4465 = vmul.f32 %v4433, 0.7978846
    %v4466 = vmul.f32 %v4434, 0.7978846
    %v4467 = vmul.f32 %v4435, 0.7978846
    %v4468 = vmul.f32 %v4436, 0.7978846
    %v4469 = vmul.f32 %v4437, 0.7978846
    %v4470 = vmul.f32 %v4438, 0.7978846
    %v4471 = vmul.f32 %v4439, 0.7978846
    %v4472 = vmul.f32 %v4440, 0.7978846
    %v4473 = vmul.f32 %v4441, 0.7978846
    %v4474 = vmul.f32 %v4442, 0.7978846
    %v4475 = vmul.f32 %v4443, 0.7978846
    %v4476 = vmul.f32 %v4444, 0.7978846
    %v4477 = vmul.f32 %v4445, 0.7978846
    %v4478 = vmul.f32 %v4446, 0.7978846
    %v4479 = vmul.f32 %v4447, 0.7978846
    %v4480 = vmul.f32 %v4448, 0.7978846
    %v4481 = vmul.f32 %v4449, 0.7978846
    %v4482 = vmul.f32 %v4450, 0.7978846
    %v4483 = vmul.f32 %v4451, 0.7978846
    %v4484 = vmul.f32 %v4452, 0.7978846
    %v4485 = vmul.f32 %v4453, 0.7978846
    %v4486 = vmul.f32 %v4454, 0.7978846
    %v4487 = vtanh.pop %v4455
    %v4488 = vtanh.pop %v4456
    %v4489 = vtanh.pop %v4457
    %v4490 = vtanh.pop %v4458
    %v4491 = vtanh.pop %v4459
    %v4492 = vtanh.pop %v4460
    %v4493 = vtanh.pop %v4461
    %v4494 = vtanh.pop %v4462
    %v4495 = vtanh.pop %v4463
    %v4496 = vtanh.pop %v4464
    %v4497 = vtanh.pop %v4465
    %v4498 = vtanh.pop %v4466
    %v4499 = vtanh.pop %v4467
    %v4500 = vtanh.pop %v4468
    %v4501 = vtanh.pop %v4469
    %v4502 = vtanh.pop %v4470
    %v4503 = vtanh.pop %v4471
    %v4504 = vtanh.pop %v4472
    %v4505 = vtanh.pop %v4473
    %v4506 = vtanh.pop %v4474
    %v4507 = vtanh.pop %v4475
    %v4508 = vtanh.pop %v4476
    %v4509 = vtanh.pop %v4477
    %v4510 = vtanh.pop %v4478
    %v4511 = vtanh.pop %v4479
    %v4512 = vtanh.pop %v4480
    %v4513 = vtanh.pop %v4481
    %v4514 = vtanh.pop %v4482
    %v4515 = vtanh.pop %v4483
    %v4516 = vtanh.pop %v4484
    %v4517 = vtanh.pop %v4485
    %v4518 = vtanh.pop %v4486
    %v4519 = vadd.f32 %v4487, 1.0
    %v4520 = vadd.f32 %v4488, 1.0
    %v4521 = vadd.f32 %v4489, 1.0
    %v4522 = vadd.f32 %v4490, 1.0
    %v4523 = vadd.f32 %v4491, 1.0
    %v4524 = vadd.f32 %v4492, 1.0
    %v4525 = vadd.f32 %v4493, 1.0
    %v4526 = vadd.f32 %v4494, 1.0
    %v4527 = vadd.f32 %v4495, 1.0
    %v4528 = vadd.f32 %v4496, 1.0
    %v4529 = vadd.f32 %v4497, 1.0
    %v4530 = vadd.f32 %v4498, 1.0
    %v4531 = vadd.f32 %v4499, 1.0
    %v4532 = vadd.f32 %v4500, 1.0
    %v4533 = vadd.f32 %v4501, 1.0
    %v4534 = vadd.f32 %v4502, 1.0
    %v4535 = vadd.f32 %v4503, 1.0
    %v4536 = vadd.f32 %v4504, 1.0
    %v4537 = vadd.f32 %v4505, 1.0
    %v4538 = vadd.f32 %v4506, 1.0
    %v4539 = vadd.f32 %v4507, 1.0
    %v4540 = vadd.f32 %v4508, 1.0
    %v4541 = vadd.f32 %v4509, 1.0
    %v4542 = vadd.f32 %v4510, 1.0
    %v4543 = vadd.f32 %v4511, 1.0
    %v4544 = vadd.f32 %v4512, 1.0
    %v4545 = vadd.f32 %v4513, 1.0
    %v4546 = vadd.f32 %v4514, 1.0
    %v4547 = vadd.f32 %v4515, 1.0
    %v4548 = vadd.f32 %v4516, 1.0
    %v4549 = vadd.f32 %v4517, 1.0
    %v4550 = vadd.f32 %v4518, 1.0
    %v4551 = vmul.f32 %v4295, %v4519
    %v4552 = vmul.f32 %v4296, %v4520
    %v4553 = vmul.f32 %v4297, %v4521
    %v4554 = vmul.f32 %v4298, %v4522
    %v4555 = vmul.f32 %v4299, %v4523
    %v4556 = vmul.f32 %v4300, %v4524
    %v4557 = vmul.f32 %v4301, %v4525
    %v4558 = vmul.f32 %v4302, %v4526
    %v4559 = vmul.f32 %v4303, %v4527
    %v4560 = vmul.f32 %v4304, %v4528
    %v4561 = vmul.f32 %v4305, %v4529
    %v4562 = vmul.f32 %v4306, %v4530
    %v4563 = vmul.f32 %v4307, %v4531
    %v4564 = vmul.f32 %v4308, %v4532
    %v4565 = vmul.f32 %v4309, %v4533
    %v4566 = vmul.f32 %v4310, %v4534
    %v4567 = vmul.f32 %v4311, %v4535
    %v4568 = vmul.f32 %v4312, %v4536
    %v4569 = vmul.f32 %v4313, %v4537
    %v4570 = vmul.f32 %v4314, %v4538
    %v4571 = vmul.f32 %v4315, %v4539
    %v4572 = vmul.f32 %v4316, %v4540
    %v4573 = vmul.f32 %v4317, %v4541
    %v4574 = vmul.f32 %v4318, %v4542
    %v4575 = vmul.f32 %v4319, %v4543
    %v4576 = vmul.f32 %v4320, %v4544
    %v4577 = vmul.f32 %v4321, %v4545
    %v4578 = vmul.f32 %v4322, %v4546
    %v4579 = vmul.f32 %v4323, %v4547
    %v4580 = vmul.f32 %v4324, %v4548
    %v4581 = vmul.f32 %v4325, %v4549
    %v4582 = vmul.f32 %v4326, %v4550
    %v4583 = vpack.c.bf16 %v4555, %v4551
    %v4584 = vpack.c.bf16 %v4556, %v4552
    %v4585 = vpack.c.bf16 %v4557, %v4553
    %v4586 = vpack.c.bf16 %v4558, %v4554
    %v4587 = vpack.c.bf16 %v4563, %v4559
    %v4588 = vpack.c.bf16 %v4564, %v4560
    %v4589 = vpack.c.bf16 %v4565, %v4561
    %v4590 = vpack.c.bf16 %v4566, %v4562
    %v4591 = vpack.c.bf16 %v4571, %v4567
    %v4592 = vpack.c.bf16 %v4572, %v4568
    %v4593 = vpack.c.bf16 %v4573, %v4569
    %v4594 = vpack.c.bf16 %v4574, %v4570
    %v4595 = vpack.c.bf16 %v4579, %v4575
    %v4596 = vpack.c.bf16 %v4580, %v4576
    %v4597 = vpack.c.bf16 %v4581, %v4577
    %v4598 = vpack.c.bf16 %v4582, %v4578
    %s4599 = scalar_lea.vmem [#allocation7], 256
    %v4600 = vld [vmem:[%s4599] sm:$0xf]
    %v4601 = vld [vmem:[%s4599 + $0x4] sm:$0xf]
    %v4602 = vld [vmem:[%s4599 + $0x8] sm:$0xf]
    %v4603 = vld [vmem:[%s4599 + $0xc] sm:$0xf]
    %v4604 = vld [vmem:[%s4599 + $0x10] sm:$0xf]
    %v4605 = vld [vmem:[%s4599 + $0x14] sm:$0xf]
    %v4606 = vld [vmem:[%s4599 + $0x18] sm:$0xf]
    %v4607 = vld [vmem:[%s4599 + $0x1c] sm:$0xf]
    %v4608 = vld [vmem:[%s4599 + $0x20] sm:$0xf]
    %v4609 = vld [vmem:[%s4599 + $0x24] sm:$0xf]
    %v4610 = vld [vmem:[%s4599 + $0x28] sm:$0xf]
    %v4611 = vld [vmem:[%s4599 + $0x2c] sm:$0xf]
    %v4612 = vld [vmem:[%s4599 + $0x30] sm:$0xf]
    %v4613 = vld [vmem:[%s4599 + $0x34] sm:$0xf]
    %v4614 = vld [vmem:[%s4599 + $0x38] sm:$0xf]
    %v4615 = vld [vmem:[%s4599 + $0x3c] sm:$0xf]
    %v4616 = vld [vmem:[%s4599 + $0x40] sm:$0xf]
    %v4617 = vld [vmem:[%s4599 + $0x44] sm:$0xf]
    %v4618 = vld [vmem:[%s4599 + $0x48] sm:$0xf]
    %v4619 = vld [vmem:[%s4599 + $0x4c] sm:$0xf]
    %v4620 = vld [vmem:[%s4599 + $0x50] sm:$0xf]
    %v4621 = vld [vmem:[%s4599 + $0x54] sm:$0xf]
    %v4622 = vld [vmem:[%s4599 + $0x58] sm:$0xf]
    %v4623 = vld [vmem:[%s4599 + $0x5c] sm:$0xf]
    %v4624 = vld [vmem:[%s4599 + $0x60] sm:$0xf]
    %v4625 = vld [vmem:[%s4599 + $0x64] sm:$0xf]
    %v4626 = vld [vmem:[%s4599 + $0x68] sm:$0xf]
    %v4627 = vld [vmem:[%s4599 + $0x6c] sm:$0xf]
    %v4628 = vld [vmem:[%s4599 + $0x70] sm:$0xf]
    %v4629 = vld [vmem:[%s4599 + $0x74] sm:$0xf]
    %v4630 = vld [vmem:[%s4599 + $0x78] sm:$0xf]
    %v4631 = vld [vmem:[%s4599 + $0x7c] sm:$0xf]
    %v4632 = vld [vmem:[%s4599 + $0x80] sm:$0xf]
    %v4633 = vld [vmem:[%s4599 + $0x84] sm:$0xf]
    %v4634 = vld [vmem:[%s4599 + $0x88] sm:$0xf]
    %v4635 = vld [vmem:[%s4599 + $0x8c] sm:$0xf]
    %v4636 = vld [vmem:[%s4599 + $0x90] sm:$0xf]
    %v4637 = vld [vmem:[%s4599 + $0x94] sm:$0xf]
    %v4638 = vld [vmem:[%s4599 + $0x98] sm:$0xf]
    %v4639 = vld [vmem:[%s4599 + $0x9c] sm:$0xf]
    %v4640 = vld [vmem:[%s4599 + $0xa0] sm:$0xf]
    %v4641 = vld [vmem:[%s4599 + $0xa4] sm:$0xf]
    %v4642 = vld [vmem:[%s4599 + $0xa8] sm:$0xf]
    %v4643 = vld [vmem:[%s4599 + $0xac] sm:$0xf]
    %v4644 = vld [vmem:[%s4599 + $0xb0] sm:$0xf]
    %v4645 = vld [vmem:[%s4599 + $0xb4] sm:$0xf]
    %v4646 = vld [vmem:[%s4599 + $0xb8] sm:$0xf]
    %v4647 = vld [vmem:[%s4599 + $0xbc] sm:$0xf]
    %v4648 = vld [vmem:[%s4599 + $0xc0] sm:$0xf]
    %v4649 = vld [vmem:[%s4599 + $0xc4] sm:$0xf]
    %v4650 = vld [vmem:[%s4599 + $0xc8] sm:$0xf]
    %v4651 = vld [vmem:[%s4599 + $0xcc] sm:$0xf]
    %v4652 = vld [vmem:[%s4599 + $0xd0] sm:$0xf]
    %v4653 = vld [vmem:[%s4599 + $0xd4] sm:$0xf]
    %v4654 = vld [vmem:[%s4599 + $0xd8] sm:$0xf]
    %v4655 = vld [vmem:[%s4599 + $0xdc] sm:$0xf]
    %v4656 = vld [vmem:[%s4599 + $0xe0] sm:$0xf]
    %v4657 = vld [vmem:[%s4599 + $0xe4] sm:$0xf]
    %v4658 = vld [vmem:[%s4599 + $0xe8] sm:$0xf]
    %v4659 = vld [vmem:[%s4599 + $0xec] sm:$0xf]
    %v4660 = vld [vmem:[%s4599 + $0xf0] sm:$0xf]
    %v4661 = vld [vmem:[%s4599 + $0xf4] sm:$0xf]
    %v4662 = vld [vmem:[%s4599 + $0xf8] sm:$0xf]
    %v4663 = vld [vmem:[%s4599 + $0xfc] sm:$0xf]
    %s4664 = scalar_lea.vmem %s16, 1
    %v4665 = vld [vmem:[%s4664] sm:$0x1]
    %v4667 = vperm.slane %v4665, 0
    %v4733 = vunpack.c.l.b16 %v4600
    %v4734 = vunpack.c.l.b16 %v4601
    %v4735 = vunpack.c.l.b16 %v4602
    %v4736 = vunpack.c.l.b16 %v4603
    %v4737 = vunpack.c.l.b16 %v4604
    %v4738 = vunpack.c.l.b16 %v4605
    %v4739 = vunpack.c.l.b16 %v4606
    %v4740 = vunpack.c.l.b16 %v4607
    %v4741 = vunpack.c.l.b16 %v4608
    %v4742 = vunpack.c.l.b16 %v4609
    %v4743 = vunpack.c.l.b16 %v4610
    %v4744 = vunpack.c.l.b16 %v4611
    %v4745 = vunpack.c.l.b16 %v4612
    %v4746 = vunpack.c.l.b16 %v4613
    %v4747 = vunpack.c.l.b16 %v4614
    %v4748 = vunpack.c.l.b16 %v4615
    %v4749 = vunpack.c.l.b16 %v4616
    %v4750 = vunpack.c.l.b16 %v4617
    %v4751 = vunpack.c.l.b16 %v4618
    %v4752 = vunpack.c.l.b16 %v4619
    %v4753 = vunpack.c.l.b16 %v4620
    %v4754 = vunpack.c.l.b16 %v4621
    %v4755 = vunpack.c.l.b16 %v4622
    %v4756 = vunpack.c.l.b16 %v4623
    %v4757 = vunpack.c.l.b16 %v4624
    %v4758 = vunpack.c.l.b16 %v4625
    %v4759 = vunpack.c.l.b16 %v4626
    %v4760 = vunpack.c.l.b16 %v4627
    %v4761 = vunpack.c.l.b16 %v4628
    %v4762 = vunpack.c.l.b16 %v4629
    %v4763 = vunpack.c.l.b16 %v4630
    %v4764 = vunpack.c.l.b16 %v4631
    %v4765 = vunpack.c.l.b16 %v4632
    %v4766 = vunpack.c.l.b16 %v4633
    %v4767 = vunpack.c.l.b16 %v4634
    %v4768 = vunpack.c.l.b16 %v4635
    %v4769 = vunpack.c.l.b16 %v4636
    %v4770 = vunpack.c.l.b16 %v4637
    %v4771 = vunpack.c.l.b16 %v4638
    %v4772 = vunpack.c.l.b16 %v4639
    %v4773 = vunpack.c.l.b16 %v4640
    %v4774 = vunpack.c.l.b16 %v4641
    %v4775 = vunpack.c.l.b16 %v4642
    %v4776 = vunpack.c.l.b16 %v4643
    %v4777 = vunpack.c.l.b16 %v4644
    %v4778 = vunpack.c.l.b16 %v4645
    %v4779 = vunpack.c.l.b16 %v4646
    %v4780 = vunpack.c.l.b16 %v4647
    %v4781 = vunpack.c.l.b16 %v4648
    %v4782 = vunpack.c.l.b16 %v4649
    %v4783 = vunpack.c.l.b16 %v4650
    %v4784 = vunpack.c.l.b16 %v4651
    %v4785 = vunpack.c.l.b16 %v4652
    %v4786 = vunpack.c.l.b16 %v4653
    %v4787 = vunpack.c.l.b16 %v4654
    %v4788 = vunpack.c.l.b16 %v4655
    %v4789 = vunpack.c.l.b16 %v4656
    %v4790 = vunpack.c.l.b16 %v4657
    %v4791 = vunpack.c.l.b16 %v4658
    %v4792 = vunpack.c.l.b16 %v4659
    %v4793 = vunpack.c.l.b16 %v4660
    %v4794 = vunpack.c.l.b16 %v4661
    %v4795 = vunpack.c.l.b16 %v4662
    %v4796 = vunpack.c.l.b16 %v4663
    %v4797 = vpack.c.b16 %v4734, %v4733
    %v4798 = vpack.c.b16 %v4736, %v4735
    %v4799 = vpack.c.b16 %v4738, %v4737
    %v4800 = vpack.c.b16 %v4740, %v4739
    %v4801 = vpack.c.b16 %v4742, %v4741
    %v4802 = vpack.c.b16 %v4744, %v4743
    %v4803 = vpack.c.b16 %v4746, %v4745
    %v4804 = vpack.c.b16 %v4748, %v4747
    %v4805 = vpack.c.b16 %v4750, %v4749
    %v4806 = vpack.c.b16 %v4752, %v4751
    %v4807 = vpack.c.b16 %v4754, %v4753
    %v4808 = vpack.c.b16 %v4756, %v4755
    %v4809 = vpack.c.b16 %v4758, %v4757
    %v4810 = vpack.c.b16 %v4760, %v4759
    %v4811 = vpack.c.b16 %v4762, %v4761
    %v4812 = vpack.c.b16 %v4764, %v4763
    %v4813 = vpack.c.b16 %v4766, %v4765
    %v4814 = vpack.c.b16 %v4768, %v4767
    %v4815 = vpack.c.b16 %v4770, %v4769
    %v4816 = vpack.c.b16 %v4772, %v4771
    %v4817 = vpack.c.b16 %v4774, %v4773
    %v4818 = vpack.c.b16 %v4776, %v4775
    %v4819 = vpack.c.b16 %v4778, %v4777
    %v4820 = vpack.c.b16 %v4780, %v4779
    %v4821 = vpack.c.b16 %v4782, %v4781
    %v4822 = vpack.c.b16 %v4784, %v4783
    %v4823 = vpack.c.b16 %v4786, %v4785
    %v4824 = vpack.c.b16 %v4788, %v4787
    %v4825 = vpack.c.b16 %v4790, %v4789
    %v4826 = vpack.c.b16 %v4792, %v4791
    %v4827 = vpack.c.b16 %v4794, %v4793
    %v4828 = vpack.c.b16 %v4796, %v4795
    %4861 = vmatpush.bf16.msra.mxu0 %v4804
    %4862 = vmatpush.bf16.msra.mxu0 %v4803
    %4863 = vmatpush.bf16.msra.mxu0 %v4802
    %4864 = vmatpush.bf16.msra.mxu0 %v4801
    %4865 = vmatpush.bf16.msra.mxu0 %v4800
    %4866 = vmatpush.bf16.msra.mxu0 %v4799
    %4867 = vmatpush.bf16.msra.mxu0 %v4798
    %4868 = vmatpush.bf16.msra.mxu0 %v4797
    %4869 = vmatmul.bf16.gmra.mxu0 %v4583
    %v4870 = vpop.f32.mrf.mxu0
    %v4871 = vadd.f32 %v4667, %v4870
    %v4872 = vpop.f32.mrf.mxu0
    %v4873 = vadd.f32 %v4667, %v4872
    %4874 = vmatmul.bf16.gmra.mxu0 %v4587
    %v4875 = vpop.f32.mrf.mxu0
    %v4876 = vadd.f32 %v4667, %v4875
    %v4877 = vpop.f32.mrf.mxu0
    %v4878 = vadd.f32 %v4667, %v4877
    %4879 = vmatmul.bf16.gmra.mxu0 %v4591
    %v4880 = vpop.f32.mrf.mxu0
    %v4881 = vadd.f32 %v4667, %v4880
    %v4882 = vpop.f32.mrf.mxu0
    %v4883 = vadd.f32 %v4667, %v4882
    %4884 = vmatmul.bf16.gmra.mxu0 %v4595
    %v4885 = vpop.f32.mrf.mxu0
    %v4886 = vadd.f32 %v4667, %v4885
    %v4887 = vpop.f32.mrf.mxu0
    %v4888 = vadd.f32 %v4667, %v4887
    %4889 = vdwg.mxu0
    %4890 = vmatpush.bf16.msra.mxu0 %v4812
    %4891 = vmatpush.bf16.msra.mxu0 %v4811
    %4892 = vmatpush.bf16.msra.mxu0 %v4810
    %4893 = vmatpush.bf16.msra.mxu0 %v4809
    %4894 = vmatpush.bf16.msra.mxu0 %v4808
    %4895 = vmatpush.bf16.msra.mxu0 %v4807
    %4896 = vmatpush.bf16.msra.mxu0 %v4806
    %4897 = vmatpush.bf16.msra.mxu0 %v4805
    %4898 = vmatmul.bf16.gmra.mxu0 %v4584
    %v4899 = vpop.f32.mrf.mxu0
    %v4900 = vadd.f32 %v4871, %v4899
    %v4901 = vpop.f32.mrf.mxu0
    %v4902 = vadd.f32 %v4873, %v4901
    %4903 = vmatmul.bf16.gmra.mxu0 %v4588
    %v4904 = vpop.f32.mrf.mxu0
    %v4905 = vadd.f32 %v4876, %v4904
    %v4906 = vpop.f32.mrf.mxu0
    %v4907 = vadd.f32 %v4878, %v4906
    %4908 = vmatmul.bf16.gmra.mxu0 %v4592
    %v4909 = vpop.f32.mrf.mxu0
    %v4910 = vadd.f32 %v4881, %v4909
    %v4911 = vpop.f32.mrf.mxu0
    %v4912 = vadd.f32 %v4883, %v4911
    %4913 = vmatmul.bf16.gmra.mxu0 %v4596
    %v4914 = vpop.f32.mrf.mxu0
    %v4915 = vadd.f32 %v4886, %v4914
    %v4916 = vpop.f32.mrf.mxu0
    %v4917 = vadd.f32 %v4888, %v4916
    %4918 = vdwg.mxu0
    %4919 = vmatpush.bf16.msra.mxu0 %v4820
    %4920 = vmatpush.bf16.msra.mxu0 %v4819
    %4921 = vmatpush.bf16.msra.mxu0 %v4818
    %4922 = vmatpush.bf16.msra.mxu0 %v4817
    %4923 = vmatpush.bf16.msra.mxu0 %v4816
    %4924 = vmatpush.bf16.msra.mxu0 %v4815
    %4925 = vmatpush.bf16.msra.mxu0 %v4814
    %4926 = vmatpush.bf16.msra.mxu0 %v4813
    %4927 = vmatmul.bf16.gmra.mxu0 %v4585
    %v4928 = vpop.f32.mrf.mxu0
    %v4929 = vadd.f32 %v4900, %v4928
    %v4930 = vpop.f32.mrf.mxu0
    %v4931 = vadd.f32 %v4902, %v4930
    %4932 = vmatmul.bf16.gmra.mxu0 %v4589
    %v4933 = vpop.f32.mrf.mxu0
    %v4934 = vadd.f32 %v4905, %v4933
    %v4935 = vpop.f32.mrf.mxu0
    %v4936 = vadd.f32 %v4907, %v4935
    %4937 = vmatmul.bf16.gmra.mxu0 %v4593
    %v4938 = vpop.f32.mrf.mxu0
    %v4939 = vadd.f32 %v4910, %v4938
    %v4940 = vpop.f32.mrf.mxu0
    %v4941 = vadd.f32 %v4912, %v4940
    %4942 = vmatmul.bf16.gmra.mxu0 %v4597
    %v4943 = vpop.f32.mrf.mxu0
    %v4944 = vadd.f32 %v4915, %v4943
    %v4945 = vpop.f32.mrf.mxu0
    %v4946 = vadd.f32 %v4917, %v4945
    %4947 = vdwg.mxu0
    %4948 = vmatpush.bf16.msra.mxu0 %v4828
    %4949 = vmatpush.bf16.msra.mxu0 %v4827
    %4950 = vmatpush.bf16.msra.mxu0 %v4826
    %4951 = vmatpush.bf16.msra.mxu0 %v4825
    %4952 = vmatpush.bf16.msra.mxu0 %v4824
    %4953 = vmatpush.bf16.msra.mxu0 %v4823
    %4954 = vmatpush.bf16.msra.mxu0 %v4822
    %4955 = vmatpush.bf16.msra.mxu0 %v4821
    %4956 = vmatmul.bf16.gmra.mxu0 %v4586
    %v4957 = vpop.f32.mrf.mxu0
    %v4958 = vadd.f32 %v4929, %v4957
    %v4959 = vpop.f32.mrf.mxu0
    %v4960 = vadd.f32 %v4931, %v4959
    %4961 = vmatmul.bf16.gmra.mxu0 %v4590
    %v4962 = vpop.f32.mrf.mxu0
    %v4963 = vadd.f32 %v4934, %v4962
    %v4964 = vpop.f32.mrf.mxu0
    %v4965 = vadd.f32 %v4936, %v4964
    %4966 = vmatmul.bf16.gmra.mxu0 %v4594
    %v4967 = vpop.f32.mrf.mxu0
    %v4968 = vadd.f32 %v4939, %v4967
    %v4969 = vpop.f32.mrf.mxu0
    %v4970 = vadd.f32 %v4941, %v4969
    %4971 = vmatmul.bf16.gmra.mxu0 %v4598
    %v4972 = vpop.f32.mrf.mxu0
    %v4973 = vadd.f32 %v4944, %v4972
    %v4974 = vpop.f32.mrf.mxu0
    %v4975 = vadd.f32 %v4946, %v4974
    %4976 = vdwg.mxu0
    %v4977 = vadd.f32 %v4958, %v3963
    %v4978 = vadd.f32 %v4960, %v3964
    %v4979 = vadd.f32 %v4963, %v3965
    %v4980 = vadd.f32 %v4965, %v3966
    %v4981 = vadd.f32 %v4968, %v3967
    %v4982 = vadd.f32 %v4970, %v3968
    %v4983 = vadd.f32 %v4973, %v3969
    %v4984 = vadd.f32 %v4975, %v3970
    %s4985 = scalar_lea.vmem %s17, 1
    %v4986 = vld [vmem:[%s4985] sm:$0x1]
    %s4987 = scalar_lea.vmem %s18, 1
    %v4988 = vld [vmem:[%s4987] sm:$0x1]
    %4989 = vadd.xlane.f32.xlu0 %v4977
    %v4990 = vpop.xlane.xlu0 %4989
    %4991 = vadd.xlane.f32.xlu0 %v4978
    %v4992 = vpop.xlane.xlu0 %4991
    %4993 = vadd.xlane.f32.xlu0 %v4979
    %v4994 = vpop.xlane.xlu0 %4993
    %4995 = vadd.xlane.f32.xlu0 %v4980
    %v4996 = vpop.xlane.xlu0 %4995
    %4997 = vadd.xlane.f32.xlu0 %v4981
    %v4998 = vpop.xlane.xlu0 %4997
    %4999 = vadd.xlane.f32.xlu0 %v4982
    %v5000 = vpop.xlane.xlu0 %4999
    %5001 = vadd.xlane.f32.xlu0 %v4983
    %v5002 = vpop.xlane.xlu0 %5001
    %5003 = vadd.xlane.f32.xlu0 %v4984
    %v5004 = vpop.xlane.xlu0 %5003
    %v5005 = vmul.f32 %v4990, %v314
    %v5006 = vmul.f32 %v4992, %v314
    %v5007 = vmul.f32 %v4994, %v314
    %v5008 = vmul.f32 %v4996, %v314
    %v5009 = vmul.f32 %v4998, %v314
    %v5010 = vmul.f32 %v5000, %v314
    %v5011 = vmul.f32 %v5002, %v314
    %v5012 = vmul.f32 %v5004, %v314
    %v5013 = vsub.f32 %v4977, %v5005
    %v5014 = vsub.f32 %v4978, %v5006
    %v5015 = vsub.f32 %v4979, %v5007
    %v5016 = vsub.f32 %v4980, %v5008
    %v5017 = vsub.f32 %v4981, %v5009
    %v5018 = vsub.f32 %v4982, %v5010
    %v5019 = vsub.f32 %v4983, %v5011
    %v5020 = vsub.f32 %v4984, %v5012
    %v5021 = vmul.f32 %v5013, %v5013
    %v5022 = vmul.f32 %v5014, %v5014
    %v5023 = vmul.f32 %v5015, %v5015
    %v5024 = vmul.f32 %v5016, %v5016
    %v5025 = vmul.f32 %v5017, %v5017
    %v5026 = vmul.f32 %v5018, %v5018
    %v5027 = vmul.f32 %v5019, %v5019
    %v5028 = vmul.f32 %v5020, %v5020
    %5029 = vadd.xlane.f32.xlu0 %v5021
    %v5030 = vpop.xlane.xlu0 %5029
    %5031 = vadd.xlane.f32.xlu0 %v5022
    %v5032 = vpop.xlane.xlu0 %5031
    %5033 = vadd.xlane.f32.xlu0 %v5023
    %v5034 = vpop.xlane.xlu0 %5033
    %5035 = vadd.xlane.f32.xlu0 %v5024
    %v5036 = vpop.xlane.xlu0 %5035
    %5037 = vadd.xlane.f32.xlu0 %v5025
    %v5038 = vpop.xlane.xlu0 %5037
    %5039 = vadd.xlane.f32.xlu0 %v5026
    %v5040 = vpop.xlane.xlu0 %5039
    %5041 = vadd.xlane.f32.xlu0 %v5027
    %v5042 = vpop.xlane.xlu0 %5041
    %5043 = vadd.xlane.f32.xlu0 %v5028
    %v5044 = vpop.xlane.xlu0 %5043
    %v5045 = vmul.f32 %v5030, %v314
    %v5046 = vmul.f32 %v5032, %v314
    %v5047 = vmul.f32 %v5034, %v314
    %v5048 = vmul.f32 %v5036, %v314
    %v5049 = vmul.f32 %v5038, %v314
    %v5050 = vmul.f32 %v5040, %v314
    %v5051 = vmul.f32 %v5042, %v314
    %v5052 = vmul.f32 %v5044, %v314
    %v5053 = vadd.f32 %v5045, 1e-12
    %v5054 = vadd.f32 %v5046, 1e-12
    %v5055 = vadd.f32 %v5047, 1e-12
    %v5056 = vadd.f32 %v5048, 1e-12
    %v5057 = vadd.f32 %v5049, 1e-12
    %v5058 = vadd.f32 %v5050, 1e-12
    %v5059 = vadd.f32 %v5051, 1e-12
    %v5060 = vadd.f32 %v5052, 1e-12
    %v5061 = vrsqrt.pop %v5053
    %v5062 = vmul.f32 %v5061, %v5053
    %v5063 = vmul.f32 %v5062, %v5061
    %v5064 = vmul.f32 0.5, %v5063
    %v5065 = vsub.f32 1.5, %v5064
    %v5066 = vmul.f32 %v5061, %v5065
    %vm5067 = vweird.f32 %v5053
    %vm5068 = vweird.f32 %v5061
    %vm5069 = vmor %vm5067, %vm5068
    %v5070 = vsel %vm5069, %v5061, %v5066
    %v5071 = vrsqrt.pop %v5054
    %v5072 = vmul.f32 %v5071, %v5054
    %v5073 = vmul.f32 %v5072, %v5071
    %v5074 = vmul.f32 0.5, %v5073
    %v5075 = vsub.f32 1.5, %v5074
    %v5076 = vmul.f32 %v5071, %v5075
    %vm5077 = vweird.f32 %v5054
    %vm5078 = vweird.f32 %v5071
    %vm5079 = vmor %vm5077, %vm5078
    %v5080 = vsel %vm5079, %v5071, %v5076
    %v5081 = vrsqrt.pop %v5055
    %v5082 = vmul.f32 %v5081, %v5055
    %v5083 = vmul.f32 %v5082, %v5081
    %v5084 = vmul.f32 0.5, %v5083
    %v5085 = vsub.f32 1.5, %v5084
    %v5086 = vmul.f32 %v5081, %v5085
    %vm5087 = vweird.f32 %v5055
    %vm5088 = vweird.f32 %v5081
    %vm5089 = vmor %vm5087, %vm5088
    %v5090 = vsel %vm5089, %v5081, %v5086
    %v5091 = vrsqrt.pop %v5056
    %v5092 = vmul.f32 %v5091, %v5056
    %v5093 = vmul.f32 %v5092, %v5091
    %v5094 = vmul.f32 0.5, %v5093
    %v5095 = vsub.f32 1.5, %v5094
    %v5096 = vmul.f32 %v5091, %v5095
    %vm5097 = vweird.f32 %v5056
    %vm5098 = vweird.f32 %v5091
    %vm5099 = vmor %vm5097, %vm5098
    %v5100 = vsel %vm5099, %v5091, %v5096
    %v5101 = vrsqrt.pop %v5057
    %v5102 = vmul.f32 %v5101, %v5057
    %v5103 = vmul.f32 %v5102, %v5101
    %v5104 = vmul.f32 0.5, %v5103
    %v5105 = vsub.f32 1.5, %v5104
    %v5106 = vmul.f32 %v5101, %v5105
    %vm5107 = vweird.f32 %v5057
    %vm5108 = vweird.f32 %v5101
    %vm5109 = vmor %vm5107, %vm5108
    %v5110 = vsel %vm5109, %v5101, %v5106
    %v5111 = vrsqrt.pop %v5058
    %v5112 = vmul.f32 %v5111, %v5058
    %v5113 = vmul.f32 %v5112, %v5111
    %v5114 = vmul.f32 0.5, %v5113
    %v5115 = vsub.f32 1.5, %v5114
    %v5116 = vmul.f32 %v5111, %v5115
    %vm5117 = vweird.f32 %v5058
    %vm5118 = vweird.f32 %v5111
    %vm5119 = vmor %vm5117, %vm5118
    %v5120 = vsel %vm5119, %v5111, %v5116
    %v5121 = vrsqrt.pop %v5059
    %v5122 = vmul.f32 %v5121, %v5059
    %v5123 = vmul.f32 %v5122, %v5121
    %v5124 = vmul.f32 0.5, %v5123
    %v5125 = vsub.f32 1.5, %v5124
    %v5126 = vmul.f32 %v5121, %v5125
    %vm5127 = vweird.f32 %v5059
    %vm5128 = vweird.f32 %v5121
    %vm5129 = vmor %vm5127, %vm5128
    %v5130 = vsel %vm5129, %v5121, %v5126
    %v5131 = vrsqrt.pop %v5060
    %v5132 = vmul.f32 %v5131, %v5060
    %v5133 = vmul.f32 %v5132, %v5131
    %v5134 = vmul.f32 0.5, %v5133
    %v5135 = vsub.f32 1.5, %v5134
    %v5136 = vmul.f32 %v5131, %v5135
    %vm5137 = vweird.f32 %v5060
    %vm5138 = vweird.f32 %v5131
    %vm5139 = vmor %vm5137, %vm5138
    %v5140 = vsel %vm5139, %v5131, %v5136
    %v5141 = vmul.f32 %v5013, %v5070
    %v5142 = vmul.f32 %v5014, %v5080
    %v5143 = vmul.f32 %v5015, %v5090
    %v5144 = vmul.f32 %v5016, %v5100
    %v5145 = vmul.f32 %v5017, %v5110
    %v5146 = vmul.f32 %v5018, %v5120
    %v5147 = vmul.f32 %v5019, %v5130
    %v5148 = vmul.f32 %v5020, %v5140
    %v5150 = vperm.slane %v4986, 0
    %v5152 = vmul.f32 %v5141, %v5150
    %v5153 = vmul.f32 %v5142, %v5150
    %v5154 = vmul.f32 %v5143, %v5150
    %v5155 = vmul.f32 %v5144, %v5150
    %v5156 = vmul.f32 %v5145, %v5150
    %v5157 = vmul.f32 %v5146, %v5150
    %v5158 = vmul.f32 %v5147, %v5150
    %v5159 = vmul.f32 %v5148, %v5150
    %v5161 = vperm.slane %v4988, 0
    %v5163 = vadd.f32 %v5152, %v5161
    %v5164 = vadd.f32 %v5153, %v5161
    %v5165 = vadd.f32 %v5154, %v5161
    %v5166 = vadd.f32 %v5155, %v5161
    %v5167 = vadd.f32 %v5156, %v5161
    %v5168 = vadd.f32 %v5157, %v5161
    %v5169 = vadd.f32 %v5158, %v5161
    %v5170 = vadd.f32 %v5159, %v5161
    %v5171 = vpack.c.bf16 %v5164, %v5163
    %v5172 = vpack.c.bf16 %v5166, %v5165
    %v5173 = vpack.c.bf16 %v5168, %v5167
    %v5174 = vpack.c.bf16 %v5170, %v5169
    %v5175 = vld [vmem:[%s19] sm:$0xf]
    %v5176 = vld [vmem:[%s19 + $0x4] sm:$0xf]
    %v5177 = vld [vmem:[%s19 + $0x8] sm:$0xf]
    %v5178 = vld [vmem:[%s19 + $0xc] sm:$0xf]
    %v5179 = vld [vmem:[%s19 + $0x10] sm:$0xf]
    %v5180 = vld [vmem:[%s19 + $0x14] sm:$0xf]
    %v5181 = vld [vmem:[%s19 + $0x18] sm:$0xf]
    %v5182 = vld [vmem:[%s19 + $0x1c] sm:$0xf]
    %v5183 = vld [vmem:[%s19 + $0x20] sm:$0xf]
    %v5184 = vld [vmem:[%s19 + $0x24] sm:$0xf]
    %v5185 = vld [vmem:[%s19 + $0x28] sm:$0xf]
    %v5186 = vld [vmem:[%s19 + $0x2c] sm:$0xf]
    %v5187 = vld [vmem:[%s19 + $0x30] sm:$0xf]
    %v5188 = vld [vmem:[%s19 + $0x34] sm:$0xf]
    %v5189 = vld [vmem:[%s19 + $0x38] sm:$0xf]
    %v5190 = vld [vmem:[%s19 + $0x3c] sm:$0xf]
    %v5191 = vld [vmem:[%s20] sm:$0x1]
    %v5193 = vperm.slane %v5191, 0
    %v5211 = vunpack.c.l.b16 %v5175
    %v5212 = vunpack.c.l.b16 %v5176
    %v5213 = vunpack.c.l.b16 %v5177
    %v5214 = vunpack.c.l.b16 %v5178
    %v5215 = vunpack.c.l.b16 %v5179
    %v5216 = vunpack.c.l.b16 %v5180
    %v5217 = vunpack.c.l.b16 %v5181
    %v5218 = vunpack.c.l.b16 %v5182
    %v5219 = vunpack.c.l.b16 %v5183
    %v5220 = vunpack.c.l.b16 %v5184
    %v5221 = vunpack.c.l.b16 %v5185
    %v5222 = vunpack.c.l.b16 %v5186
    %v5223 = vunpack.c.l.b16 %v5187
    %v5224 = vunpack.c.l.b16 %v5188
    %v5225 = vunpack.c.l.b16 %v5189
    %v5226 = vunpack.c.l.b16 %v5190
    %v5227 = vpack.c.b16 %v5212, %v5211
    %v5228 = vpack.c.b16 %v5214, %v5213
    %v5229 = vpack.c.b16 %v5216, %v5215
    %v5230 = vpack.c.b16 %v5218, %v5217
    %v5231 = vpack.c.b16 %v5220, %v5219
    %v5232 = vpack.c.b16 %v5222, %v5221
    %v5233 = vpack.c.b16 %v5224, %v5223
    %v5234 = vpack.c.b16 %v5226, %v5225
    %5243 = vmatpush.bf16.msra.mxu0 %v5234
    %5244 = vmatpush.bf16.msra.mxu0 %v5233
    %5245 = vmatpush.bf16.msra.mxu0 %v5232
    %5246 = vmatpush.bf16.msra.mxu0 %v5231
    %5247 = vmatpush.bf16.msra.mxu0 %v5230
    %5248 = vmatpush.bf16.msra.mxu0 %v5229
    %5249 = vmatpush.bf16.msra.mxu0 %v5228
    %5250 = vmatpush.bf16.msra.mxu0 %v5227
    %5251 = vmatmul.bf16.gmra.mxu0 %v5171
    %v5252 = vpop.f32.mrf.mxu0
    %v5253 = vadd.f32 %v5193, %v5252
    %v5254 = vpop.f32.mrf.mxu0
    %v5255 = vadd.f32 %v5193, %v5254
    %5256 = vmatmul.bf16.gmra.mxu0 %v5172
    %v5257 = vpop.f32.mrf.mxu0
    %v5258 = vadd.f32 %v5193, %v5257
    %v5259 = vpop.f32.mrf.mxu0
    %v5260 = vadd.f32 %v5193, %v5259
    %5261 = vmatmul.bf16.gmra.mxu0 %v5173
    %v5262 = vpop.f32.mrf.mxu0
    %v5263 = vadd.f32 %v5193, %v5262
    %v5264 = vpop.f32.mrf.mxu0
    %v5265 = vadd.f32 %v5193, %v5264
    %5266 = vmatmul.bf16.gmra.mxu0 %v5174
    %v5267 = vpop.f32.mrf.mxu0
    %v5268 = vadd.f32 %v5193, %v5267
    %v5269 = vpop.f32.mrf.mxu0
    %v5270 = vadd.f32 %v5193, %v5269
    %5271 = vdwg.mxu0
    %5272 = vmax.xlane.f32.xlu0 %v5253
    %v5273 = vpop.xlane.xlu0 %5272
    %5274 = vmax.xlane.f32.xlu0 %v5255
    %v5275 = vpop.xlane.xlu0 %5274
    %5276 = vmax.xlane.f32.xlu0 %v5258
    %v5277 = vpop.xlane.xlu0 %5276
    %5278 = vmax.xlane.f32.xlu0 %v5260
    %v5279 = vpop.xlane.xlu0 %5278
    %5280 = vmax.xlane.f32.xlu0 %v5263
    %v5281 = vpop.xlane.xlu0 %5280
    %5282 = vmax.xlane.f32.xlu0 %v5265
    %v5283 = vpop.xlane.xlu0 %5282
    %5284 = vmax.xlane.f32.xlu0 %v5268
    %v5285 = vpop.xlane.xlu0 %5284
    %5286 = vmax.xlane.f32.xlu0 %v5270
    %v5287 = vpop.xlane.xlu0 %5286
    %v5288 = vsub.f32 %v5253, %v5273
    %v5289 = vsub.f32 %v5255, %v5275
    %v5290 = vsub.f32 %v5258, %v5277
    %v5291 = vsub.f32 %v5260, %v5279
    %v5292 = vsub.f32 %v5263, %v5281
    %v5293 = vsub.f32 %v5265, %v5283
    %v5294 = vsub.f32 %v5268, %v5285
    %v5295 = vsub.f32 %v5270, %v5287
    %v5296 = vmul.f32 %v5288, 1.442695
    %v5297 = vpow.pop %v5296
    %v5298 = vmul.f32 %v5289, 1.442695
    %v5299 = vpow.pop %v5298
    %v5300 = vmul.f32 %v5290, 1.442695
    %v5301 = vpow.pop %v5300
    %v5302 = vmul.f32 %v5291, 1.442695
    %v5303 = vpow.pop %v5302
    %v5304 = vmul.f32 %v5292, 1.442695
    %v5305 = vpow.pop %v5304
    %v5306 = vmul.f32 %v5293, 1.442695
    %v5307 = vpow.pop %v5306
    %v5308 = vmul.f32 %v5294, 1.442695
    %v5309 = vpow.pop %v5308
    %v5310 = vmul.f32 %v5295, 1.442695
    %v5311 = vpow.pop %v5310
    %5312 = vadd.xlane.f32.xlu0 %v5297
    %v5313 = vpop.xlane.xlu0 %5312
    %5314 = vadd.xlane.f32.xlu0 %v5299
    %v5315 = vpop.xlane.xlu0 %5314
    %5316 = vadd.xlane.f32.xlu0 %v5301
    %v5317 = vpop.xlane.xlu0 %5316
    %5318 = vadd.xlane.f32.xlu0 %v5303
    %v5319 = vpop.xlane.xlu0 %5318
    %5320 = vadd.xlane.f32.xlu0 %v5305
    %v5321 = vpop.xlane.xlu0 %5320
    %5322 = vadd.xlane.f32.xlu0 %v5307
    %v5323 = vpop.xlane.xlu0 %5322
    %5324 = vadd.xlane.f32.xlu0 %v5309
    %v5325 = vpop.xlane.xlu0 %5324
    %5326 = vadd.xlane.f32.xlu0 %v5311
    %v5327 = vpop.xlane.xlu0 %5326
    %v5328 = vlog2.pop %v5313
    %v5329 = vmul.f32 %v5328, 0.6931472
    %v5330 = vlog2.pop %v5315
    %v5331 = vmul.f32 %v5330, 0.6931472
    %v5332 = vlog2.pop %v5317
    %v5333 = vmul.f32 %v5332, 0.6931472
    %v5334 = vlog2.pop %v5319
    %v5335 = vmul.f32 %v5334, 0.6931472
    %v5336 = vlog2.pop %v5321
    %v5337 = vmul.f32 %v5336, 0.6931472
    %v5338 = vlog2.pop %v5323
    %v5339 = vmul.f32 %v5338, 0.6931472
    %v5340 = vlog2.pop %v5325
    %v5341 = vmul.f32 %v5340, 0.6931472
    %v5342 = vlog2.pop %v5327
    %v5343 = vmul.f32 %v5342, 0.6931472
    %v5344 = vsub.f32 %v5288, %v5329
    %v5345 = vsub.f32 %v5289, %v5331
    %v5346 = vsub.f32 %v5290, %v5333
    %v5347 = vsub.f32 %v5291, %v5335
    %v5348 = vsub.f32 %v5292, %v5337
    %v5349 = vsub.f32 %v5293, %v5339
    %v5350 = vsub.f32 %v5294, %v5341
    %v5351 = vsub.f32 %v5295, %v5343
    %5352 = vst [vmem:[%s21] sm:$0xff] %v5344
    %5353 = vst [vmem:[%s21 + $0x8] sm:$0xff] %v5345
    %5354 = vst [vmem:[%s21 + $0x10] sm:$0xff] %v5346
    %5355 = vst [vmem:[%s21 + $0x18] sm:$0xff] %v5347
    %5356 = vst [vmem:[%s21 + $0x20] sm:$0xff] %v5348
    %5357 = vst [vmem:[%s21 + $0x28] sm:$0xff] %v5349
    %5358 = vst [vmem:[%s21 + $0x30] sm:$0xff] %v5350
    %5359 = vst [vmem:[%s21 + $0x38] sm:$0xff] %v5351
    // Predicated region
    $region98: #{bert_punctuator_forward.1} parent=1 // pred_check
      _
    $region99: #{bert_punctuator_forward.1} parent=1 // pred_check_branch
      %5361 = sbr.rel (0) target = $region101
    $region100: #{bert_punctuator_forward.1} parent=1 // pred_region
      _
    $region101: #{bert_punctuator_forward.1} parent=1 // pred_fallthru
      _
    // Predicated region
    $region102: #{bert_punctuator_forward.1} parent=1 // pred_check
      _
    $region103: #{bert_punctuator_forward.1} parent=1 // pred_check_branch
      %5363 = sbr.rel (0) target = $region105
    $region104: #{bert_punctuator_forward.1} parent=1 // pred_region
      _
    $region105: #{bert_punctuator_forward.1} parent=1 // pred_fallthru
      _
    %5364 = vsyncpa [#allocation4], 1
    %5365 = vsyncpa [#allocation6], 1

</llo_original>
